<compile_context>
chip_gen: v7x
topology: tpu7x:2x2x1
jax: 0.10.0
libtpu: 0.0.40
codegen_flags: <defaults>
</compile_context>

<pallas_src>
import functools
from collections import OrderedDict

import jax
import jax.numpy as jnp
from jax import lax
from jax.experimental import pallas as pl
from jax.experimental.pallas import tpu as pltpu

_LANE = 128                  # channel dims are zero-padded to the 128-lane vreg width
_ACT_DTYPE = jnp.bfloat16    # activation / weight dtype fed to the MXU (f32 accumulation)


def _round_up(x, m):
    return ((x + m - 1) // m) * m


# ----------------------------------------------------------------------------
# In-kernel 3x3 conv (pad=1, stride=1) + bias (+ optional fused ReLU) on one image
# ----------------------------------------------------------------------------
def _conv3x3_bias(act, w_ref, b_ref, *, relu):
    """act: (H, W, CIN) value (bf16). w_ref: (3*CIN, 3*COUT) bf16. b_ref: (1, COUT) f32.

    The three kh taps are fused into the K dimension (im2col over rows only, built with
    untiled-axis and lane-aligned concats => no misaligned bf16 copies), and the three kw
    column groups are fused into the N dimension of a SINGLE MXU matmul.  The kw groups
    are then recombined with two zero-filled +-1 column shifts on the unpacked f32 output.
    """
    H, W, C = act.shape
    cout3 = w_ref.shape[1]
    cout = cout3 // 3

    # Zero-halo row padding: concatenation along the untiled major H axis is cheap.
    zrow = jnp.zeros((1, W, C), act.dtype)
    xr = jnp.concatenate([zrow, act, zrow], axis=0)                       # (H+2, W, C)

    # im2col over kh taps only: lane-aligned channel concat of 3 row-shifted views.
    patch = jnp.concatenate([xr[0:H], xr[1:H + 1], xr[2:H + 2]], axis=-1)  # (H, W, 3C)
    patch = patch.reshape(H * W, 3 * C)

    # Single MXU matmul for this layer; the MXU accumulates over K = 3*CIN internally.
    z = jnp.dot(patch, w_ref[...], preferred_element_type=jnp.float32)    # (H*W, 3*COUT)
    z = z.reshape(H, W, cout3)
    z0 = z[:, :, 0 * cout:1 * cout]     # taps reading column w-1
    z1 = z[:, :, 1 * cout:2 * cout]     # taps reading column w
    z2 = z[:, :, 2 * cout:3 * cout]     # taps reading column w+1

    # Recombine the kw groups with zero-filled column shifts (f32, unpacked => cheap).
    zcol = jnp.zeros((H, 1, cout), jnp.float32)
    s0 = jnp.concatenate([zcol, z0[:, :W - 1, :]], axis=1)   # out[:, w] += z0[:, w-1]
    s2 = jnp.concatenate([z2[:, 1:, :], zcol], axis=1)       # out[:, w] += z2[:, w+1]

    y = z1 + s0 + s2 + b_ref[...].astype(jnp.float32)        # (H, W, COUT) f32
    if relu:                                                  # fused epilogue
        y = jnp.maximum(y, 0.0)
    return y


def _fused_conv_stack_kernel(*refs, num_layers, emit, relus, act_dtype):
    """refs = [x_ref, (w_ref, b_ref) * num_layers, out_ref * len(emit)].

    Runs the conv layers sequentially for one batch element; un-collected intermediate
    activations stay in VMEM/vregs (never written to HBM)."""
    x_ref = refs[0]
    w_refs = refs[1:1 + 2 * num_layers:2]
    b_refs = refs[2:2 + 2 * num_layers:2]
    out_refs = refs[1 + 2 * num_layers:]

    act = x_ref[0]                                            # (H, W, C0), bf16
    out_i = 0
    for l in range(num_layers):                               # statically unrolled
        y = _conv3x3_bias(act, w_refs[l], b_refs[l], relu=relus[l])
        if l in emit:
            out_refs[out_i][0] = y.astype(out_refs[out_i].dtype)
            out_i += 1
        if l + 1 < num_layers:
            act = y.astype(act_dtype)                         # bf16 for the next layer


# ----------------------------------------------------------------------------
# Wrapper: run a list of ConvLayers as ONE pallas_call, emitting selected outputs
# ----------------------------------------------------------------------------
def _vmem_budget_bytes(x, layers, emit):
    """VMEM limit computed from actual block / live-value sizes (not a hard 32 MiB)."""
    N, H, W, C0 = x.shape
    act_b = x.dtype.itemsize
    total = 2 * H * W * C0 * act_b                                   # input block, 2 bufs
    for l in layers:
        total += 2 * (l.w_mat.size * l.w_mat.dtype.itemsize + l.b.size * 4)
    for k in emit:
        total += 2 * H * W * layers[k].cout_p * 4                    # output blocks, 2 bufs
    live = max((H + 2) * W * l.cin_p * act_b                         # row-padded act
               + H * W * 3 * l.cin_p * act_b                         # im2col patch (bf16)
               + 5 * H * W * l.cout_p * 4                            # matmul result + epilogue
               for l in layers)
    total += 2 * live                                                # headroom for temporaries
    return int(min(max(total + (4 << 20), 16 << 20), 64 << 20))


def fused_conv_stack(layers, emit, x):
    """Run `layers` (ConvLayer list) sequentially inside one pallas_call on a lane-padded
    NHWC activation `x`; return the float32 outputs of the layer indices in `emit`."""
    N, H, W, C0 = x.shape
    L = len(layers)
    emit = tuple(sorted(emit))
    assert emit, "fused segment must emit at least one output"
    assert C0 == layers[0].cin_p
    for a, b in zip(layers[:-1], layers[1:]):
        assert a.cout_p == b.cin_p

    args = [x]
    in_specs = [pl.BlockSpec((1, H, W, C0), lambda n: (n, 0, 0, 0))]
    for lyr in layers:
        args.extend([lyr.w_mat, lyr.b])
        # Constant index maps: each weight / bias block is DMA'd once and revisited.
        in_specs.append(pl.BlockSpec(lyr.w_mat.shape, lambda n: (0, 0)))
        in_specs.append(pl.BlockSpec(lyr.b.shape, lambda n: (0, 0)))

    out_shape = tuple(jax.ShapeDtypeStruct((N, H, W, layers[k].cout_p), jnp.float32)
                      for k in emit)
    out_specs = tuple(pl.BlockSpec((1, H, W, layers[k].cout_p), lambda n: (n, 0, 0, 0))
                      for k in emit)

    kernel = functools.partial(_fused_conv_stack_kernel, num_layers=L, emit=emit,
                               relus=tuple(l.relu for l in layers), act_dtype=x.dtype)

    flops = sum(2 * N * H * W * 9 * l.cin_p * l.cout_p for l in layers)
    bytes_accessed = (x.size * x.dtype.itemsize
                      + sum(l.w_mat.size * l.w_mat.dtype.itemsize + l.b.size * 4
                            for l in layers)
                      + sum(N * H * W * layers[k].cout_p * 4 for k in emit))

    outs = pl.pallas_call(
        kernel,
        out_shape=out_shape,
        grid=(N,),
        in_specs=in_specs,
        out_specs=out_specs,
        compiler_params=pltpu.CompilerParams(
            dimension_semantics=("parallel",),           # batch across TCs (v7x megacore)
            vmem_limit_bytes=_vmem_budget_bytes(x, layers, emit)),
        cost_estimate=pl.CostEstimate(flops=flops, transcendentals=0,
                                      bytes_accessed=bytes_accessed),
    )(*args)
    if not isinstance(outs, (tuple, list)):
        outs = (outs,)
    return list(outs)


# ----------------------------------------------------------------------------
# Boundary layout helpers (used once per forward at the module boundary)
# ----------------------------------------------------------------------------
def nchw_to_lane_padded_nhwc(x_nchw, dtype=_ACT_DTYPE):
    N, C, H, W = x_nchw.shape
    cp = _round_up(C, _LANE)
    x = jnp.transpose(x_nchw, (0, 2, 3, 1)).astype(dtype)
    return jnp.pad(x, ((0, 0), (0, 0), (0, 0), (0, cp - C)))


def lane_padded_nhwc_to_nchw(x_nhwc, c):
    return jnp.transpose(x_nhwc[..., :c], (0, 3, 1, 2))


# ----------------------------------------------------------------------------
# Backbone layer (PyTorch nn.Conv2d(3x3, pad=1) semantics; weights prepped once)
# ----------------------------------------------------------------------------
class ConvLayer:
    """3x3 conv, pad=1, stride=1, bias, optional fused ReLU.  Weights taken in PyTorch
    (Cout, Cin, 3, 3) layout; reshaped once at construction to the (3*Cin_p, 3*Cout_p)
    bf16 matrix consumed by the fused kernel (rows blocked by kh, cols blocked by kw)."""

    def __init__(self, w_oihw, b, relu=False):
        cout, cin, kh, kw = w_oihw.shape
        assert (kh, kw) == (3, 3)
        self.in_channels, self.out_channels = cin, cout
        self.cin_p, self.cout_p = _round_up(cin, _LANE), _round_up(cout, _LANE)
        w = jnp.transpose(w_oihw, (2, 3, 1, 0))                      # (3, 3, Cin, Cout)
        w = jnp.pad(w, ((0, 0), (0, 0), (0, self.cin_p - cin), (0, self.cout_p - cout)))
        w = jnp.transpose(w, (0, 2, 1, 3))                           # (3, Cin_p, 3, Cout_p)
        self.w_mat = w.reshape(3 * self.cin_p, 3 * self.cout_p).astype(_ACT_DTYPE)
        self.b = jnp.pad(b, (0, self.cout_p - cout)).astype(jnp.float32).reshape(
            1, self.cout_p)
        self.relu = relu

    def __call__(self, x_padded_nhwc):
        # Standalone (un-fused) path; the getter prefers fusing runs of ConvLayers.
        return fused_conv_stack([self], [0], x_padded_nhwc)[0]


# ----------------------------------------------------------------------------
# IntermediateLayerGetter — exact forward semantics of the PyTorch module
# ----------------------------------------------------------------------------
class IntermediateLayerGetter:
    def __init__(self, named_children, return_layers):
        # named_children: list of (name, callable), analogous to model.named_children()
        if not set(return_layers).issubset({name for name, _ in named_children}):
            raise ValueError('Some keys in return_layers are not present in model')
        orig_return_layers = dict(return_layers)
        return_layers = dict(return_layers)
        layers = OrderedDict()
        for name, module in named_children:
            layers[name] = module
            if name in return_layers:
                del return_layers[name]
            if not return_layers:
                break
        self.return_layers = orig_return_layers
        self.layers = layers

    def __call__(self, x):
        # Same sequential semantics as the PyTorch forward, but maximal runs of
        # consecutive ConvLayers are executed as ONE fused pallas_call whose extra
        # out_specs are exactly the collected intermediates (identical values / order).
        out = OrderedDict()
        items = list(self.layers.items())
        i = 0
        while i < len(items):
            name, module = items[i]
            if isinstance(module, ConvLayer):
                j = i
                while j < len(items) and isinstance(items[j][1], ConvLayer):
                    j += 1
                seg_names = [n for n, _ in items[i:j]]
                seg_layers = [m for _, m in items[i:j]]
                collect = [k for k, n in enumerate(seg_names) if n in self.return_layers]
                need_final = j < len(items)          # final activation feeds the next child
                emit = sorted(set(collect + ([len(seg_layers) - 1] if need_final else [])))
                results = fused_conv_stack(seg_layers, emit, x)
                emitted = dict(zip(emit, results))
                for k in collect:
                    out[self.return_layers[seg_names[k]]] = emitted[k]
                if need_final:
                    x = emitted[len(seg_layers) - 1].astype(_ACT_DTYPE)
                i = j
            else:
                x = module(x)
                if name in self.return_layers:
                    out[self.return_layers[name]] = x
                i += 1
        return out


# ----------------------------------------------------------------------------
# Pure-JAX reference (bf16-matched: same bf16 inputs, f32 accumulation) for verification
# ----------------------------------------------------------------------------
def _ref_conv3x3_bf16(x_nchw, w_oihw, b, relu=False):
    y = lax.conv_general_dilated(
        x_nchw.astype(jnp.bfloat16), w_oihw.astype(jnp.bfloat16),
        window_strides=(1, 1), padding=((1, 1), (1, 1)),
        dimension_numbers=('NCHW', 'OIHW', 'NCHW'),
        preferred_element_type=jnp.float32)
    y = y + b[None, :, None, None]
    if relu:
        y = jnp.maximum(y, 0.0)
    return y


if __name__ == "__main__":
    key = jax.random.PRNGKey(0)
    N, C, H, W = 2, 4, 16, 16
    C1, C2 = 8, 8

    k = jax.random.split(key, 7)
    x = jax.random.normal(k[0], (N, C, H, W), jnp.float32)

    w_stem = 0.1 * jax.random.normal(k[1], (C1, C, 3, 3), jnp.float32)
    b_stem = 0.1 * jax.random.normal(k[2], (C1,), jnp.float32)
    w_l1 = 0.1 * jax.random.normal(k[3], (C2, C1, 3, 3), jnp.float32)
    b_l1 = 0.1 * jax.random.normal(k[4], (C2,), jnp.float32)
    w_l2 = 0.1 * jax.random.normal(k[5], (C2, C2, 3, 3), jnp.float32)
    b_l2 = 0.1 * jax.random.normal(k[6], (C2,), jnp.float32)

    # Synthetic backbone: ReLU fused into the stem conv epilogue.
    named_children = [
        ("stem", ConvLayer(w_stem, b_stem, relu=True)),
        ("layer1", ConvLayer(w_l1, b_l1)),
        ("layer2", ConvLayer(w_l2, b_l2)),
    ]
    return_layers = {"layer1": "low_level", "layer2": "out"}
    getter = IntermediateLayerGetter(named_children, return_layers)
    out_channels = {"low_level": C2, "out": C2}

    @jax.jit
    def forward(x_nchw):
        # One NCHW->lane-padded-NHWC (bf16) conversion at the boundary; the whole
        # backbone then runs inside a single fused pallas_call.
        xp = nchw_to_lane_padded_nhwc(x_nchw)
        feats = getter(xp)
        return OrderedDict(
            (name, lane_padded_nhwc_to_nchw(v, out_channels[name]))
            for name, v in feats.items())

    outputs = forward(x)
    outputs = jax.tree_util.tree_map(jax.block_until_ready, outputs)

    # Reference: same sequential conv stack with bf16-matched precision (bf16 inputs,
    # f32 accumulation, intermediates re-rounded to bf16 by the next layer's cast).
    r0 = _ref_conv3x3_bf16(x, w_stem, b_stem, relu=True)
    r1 = _ref_conv3x3_bf16(r0, w_l1, b_l1)
    r2 = _ref_conv3x3_bf16(r1, w_l2, b_l2)

    assert list(outputs.keys()) == ["low_level", "out"]
    assert outputs["low_level"].shape == (N, C2, H, W)
    assert outputs["out"].shape == (N, C2, H, W)
    # Tolerance loosened vs. a pure-f32 reference because the matmuls run in bf16
    # (f32 accumulation); against the bf16-matched reference 2e-2 has ample margin.
    assert jnp.allclose(outputs["low_level"], r1, atol=2e-2, rtol=2e-2)
    assert jnp.allclose(outputs["out"], r2, atol=2e-2, rtol=2e-2)

    print("KERNEL_OK")
</pallas_src>

<mosaic_0001>
module attributes {stable_mosaic.version = 11 : i64} {
  func.func @_fused_conv_stack_kernel(%arg0: i32, %arg1: memref<1x16x16x128xbf16, #tpu.memory_space<vmem>>, %arg2: memref<384x384xbf16, #tpu.memory_space<vmem>>, %arg3: memref<1x128xf32, #tpu.memory_space<vmem>>, %arg4: memref<384x384xbf16, #tpu.memory_space<vmem>>, %arg5: memref<1x128xf32, #tpu.memory_space<vmem>>, %arg6: memref<384x384xbf16, #tpu.memory_space<vmem>>, %arg7: memref<1x128xf32, #tpu.memory_space<vmem>>, %arg8: memref<1x16x16x128xf32, #tpu.memory_space<vmem>>, %arg9: memref<1x16x16x128xf32, #tpu.memory_space<vmem>>) attributes {dimension_semantics = [#tpu.dimension_semantics<parallel>], iteration_bounds = array<i64: 2>, scalar_prefetch = 0 : i64, scratch_operands = 0 : i64, tpu.core_type = #tpu.core_type<tc>, window_params = [{transform_indices = @transform_0, window_bounds = array<i64: 1, 16, 16, 128>}, {pipeline_mode = #tpu.pipeline_mode<synchronous>, transform_indices = @transform_1, window_bounds = array<i64: 384, 384>}, {pipeline_mode = #tpu.pipeline_mode<synchronous>, transform_indices = @transform_2, window_bounds = array<i64: 1, 128>}, {pipeline_mode = #tpu.pipeline_mode<synchronous>, transform_indices = @transform_3, window_bounds = array<i64: 384, 384>}, {pipeline_mode = #tpu.pipeline_mode<synchronous>, transform_indices = @transform_4, window_bounds = array<i64: 1, 128>}, {pipeline_mode = #tpu.pipeline_mode<synchronous>, transform_indices = @transform_5, window_bounds = array<i64: 384, 384>}, {pipeline_mode = #tpu.pipeline_mode<synchronous>, transform_indices = @transform_6, window_bounds = array<i64: 1, 128>}, {transform_indices = @transform_7, window_bounds = array<i64: 1, 16, 16, 128>}, {transform_indices = @transform_8, window_bounds = array<i64: 1, 16, 16, 128>}]} {
    %c0 = arith.constant 0 : index
    %c0_0 = arith.constant 0 : index
    %c0_1 = arith.constant 0 : index
    %c0_2 = arith.constant 0 : index
    %0 = vector.load %arg1[%c0, %c0_0, %c0_1, %c0_2] : memref<1x16x16x128xbf16, #tpu.memory_space<vmem>>, vector<1x16x16x128xbf16>
    %1 = vector.shape_cast %0 : vector<1x16x16x128xbf16> to vector<16x16x128xbf16>
    %cst = arith.constant 0.000000e+00 : bf16
    %2 = vector.broadcast %cst : bf16 to vector<1x16x128xbf16>
    %3 = tpu.concatenate %2, %1, %2 in 0 : vector<1x16x128xbf16>, vector<16x16x128xbf16>, vector<1x16x128xbf16> -> vector<18x16x128xbf16>
    %4 = vector.extract_strided_slice %3 {offsets = [0, 0, 0], sizes = [16, 16, 128], strides = [1, 1, 1]} : vector<18x16x128xbf16> to vector<16x16x128xbf16>
    %5 = vector.extract_strided_slice %3 {offsets = [1, 0, 0], sizes = [16, 16, 128], strides = [1, 1, 1]} : vector<18x16x128xbf16> to vector<16x16x128xbf16>
    %6 = vector.extract_strided_slice %3 {offsets = [2, 0, 0], sizes = [16, 16, 128], strides = [1, 1, 1]} : vector<18x16x128xbf16> to vector<16x16x128xbf16>
    %7 = tpu.concatenate %4, %5, %6 in 2 : vector<16x16x128xbf16>, vector<16x16x128xbf16>, vector<16x16x128xbf16> -> vector<16x16x384xbf16>
    %8 = vector.shape_cast %7 : vector<16x16x384xbf16> to vector<256x384xbf16>
    %c0_3 = arith.constant 0 : index
    %c0_4 = arith.constant 0 : index
    %9 = vector.load %arg2[%c0_3, %c0_4] : memref<384x384xbf16, #tpu.memory_space<vmem>>, vector<384x384xbf16>
    %cst_5 = arith.constant dense<0.000000e+00> : vector<256x384xf32>
    %10 = tpu.matmul %8, %9, %cst_5 {dimension_numbers = #tpu.dot_dimension_numbers<[1], [0], [0], [1], [0, 0, 1, 1], [], []>} : vector<256x384xbf16>, vector<384x384xbf16>, vector<256x384xf32> -> vector<256x384xf32>
    %11 = vector.shape_cast %10 : vector<256x384xf32> to vector<16x16x384xf32>
    %12 = vector.extract_strided_slice %11 {offsets = [0, 0, 0], sizes = [16, 16, 128], strides = [1, 1, 1]} : vector<16x16x384xf32> to vector<16x16x128xf32>
    %13 = vector.extract_strided_slice %11 {offsets = [0, 0, 128], sizes = [16, 16, 128], strides = [1, 1, 1]} : vector<16x16x384xf32> to vector<16x16x128xf32>
    %14 = vector.extract_strided_slice %11 {offsets = [0, 0, 256], sizes = [16, 16, 128], strides = [1, 1, 1]} : vector<16x16x384xf32> to vector<16x16x128xf32>
    %cst_6 = arith.constant 0.000000e+00 : f32
    %15 = vector.broadcast %cst_6 : f32 to vector<16x1x128xf32>
    %16 = vector.extract_strided_slice %12 {offsets = [0, 0, 0], sizes = [16, 15, 128], strides = [1, 1, 1]} : vector<16x16x128xf32> to vector<16x15x128xf32>
    %17 = tpu.concatenate %15, %16 in 1 : vector<16x1x128xf32>, vector<16x15x128xf32> -> vector<16x16x128xf32>
    %18 = vector.extract_strided_slice %14 {offsets = [0, 1, 0], sizes = [16, 15, 128], strides = [1, 1, 1]} : vector<16x16x128xf32> to vector<16x15x128xf32>
    %19 = tpu.concatenate %18, %15 in 1 : vector<16x15x128xf32>, vector<16x1x128xf32> -> vector<16x16x128xf32>
    %20 = arith.addf %13, %17 : vector<16x16x128xf32>
    %21 = arith.addf %20, %19 : vector<16x16x128xf32>
    %c0_7 = arith.constant 0 : index
    %c0_8 = arith.constant 0 : index
    %22 = vector.load %arg3[%c0_7, %c0_8] : memref<1x128xf32, #tpu.memory_space<vmem>>, vector<1x128xf32>
    %23 = vector.shape_cast %22 : vector<1x128xf32> to vector<1x1x128xf32>
    %24 = vector.broadcast %23 : vector<1x1x128xf32> to vector<16x16x128xf32>
    %25 = arith.addf %21, %24 : vector<16x16x128xf32>
    %cst_9 = arith.constant 0.000000e+00 : f32
    %26 = vector.broadcast %cst_9 : f32 to vector<16x16x128xf32>
    %27 = arith.maximumf %25, %26 : vector<16x16x128xf32>
    %28 = arith.truncf %27 : vector<16x16x128xf32> to vector<16x16x128xbf16>
    %cst_10 = arith.constant 0.000000e+00 : bf16
    %29 = vector.broadcast %cst_10 : bf16 to vector<1x16x128xbf16>
    %30 = tpu.concatenate %29, %28, %29 in 0 : vector<1x16x128xbf16>, vector<16x16x128xbf16>, vector<1x16x128xbf16> -> vector<18x16x128xbf16>
    %31 = vector.extract_strided_slice %30 {offsets = [0, 0, 0], sizes = [16, 16, 128], strides = [1, 1, 1]} : vector<18x16x128xbf16> to vector<16x16x128xbf16>
    %32 = vector.extract_strided_slice %30 {offsets = [1, 0, 0], sizes = [16, 16, 128], strides = [1, 1, 1]} : vector<18x16x128xbf16> to vector<16x16x128xbf16>
    %33 = vector.extract_strided_slice %30 {offsets = [2, 0, 0], sizes = [16, 16, 128], strides = [1, 1, 1]} : vector<18x16x128xbf16> to vector<16x16x128xbf16>
    %34 = tpu.concatenate %31, %32, %33 in 2 : vector<16x16x128xbf16>, vector<16x16x128xbf16>, vector<16x16x128xbf16> -> vector<16x16x384xbf16>
    %35 = vector.shape_cast %34 : vector<16x16x384xbf16> to vector<256x384xbf16>
    %c0_11 = arith.constant 0 : index
    %c0_12 = arith.constant 0 : index
    %36 = vector.load %arg4[%c0_11, %c0_12] : memref<384x384xbf16, #tpu.memory_space<vmem>>, vector<384x384xbf16>
    %cst_13 = arith.constant dense<0.000000e+00> : vector<256x384xf32>
    %37 = tpu.matmul %35, %36, %cst_13 {dimension_numbers = #tpu.dot_dimension_numbers<[1], [0], [0], [1], [0, 0, 1, 1], [], []>} : vector<256x384xbf16>, vector<384x384xbf16>, vector<256x384xf32> -> vector<256x384xf32>
    %38 = vector.shape_cast %37 : vector<256x384xf32> to vector<16x16x384xf32>
    %39 = vector.extract_strided_slice %38 {offsets = [0, 0, 0], sizes = [16, 16, 128], strides = [1, 1, 1]} : vector<16x16x384xf32> to vector<16x16x128xf32>
    %40 = vector.extract_strided_slice %38 {offsets = [0, 0, 128], sizes = [16, 16, 128], strides = [1, 1, 1]} : vector<16x16x384xf32> to vector<16x16x128xf32>
    %41 = vector.extract_strided_slice %38 {offsets = [0, 0, 256], sizes = [16, 16, 128], strides = [1, 1, 1]} : vector<16x16x384xf32> to vector<16x16x128xf32>
    %cst_14 = arith.constant 0.000000e+00 : f32
    %42 = vector.broadcast %cst_14 : f32 to vector<16x1x128xf32>
    %43 = vector.extract_strided_slice %39 {offsets = [0, 0, 0], sizes = [16, 15, 128], strides = [1, 1, 1]} : vector<16x16x128xf32> to vector<16x15x128xf32>
    %44 = tpu.concatenate %42, %43 in 1 : vector<16x1x128xf32>, vector<16x15x128xf32> -> vector<16x16x128xf32>
    %45 = vector.extract_strided_slice %41 {offsets = [0, 1, 0], sizes = [16, 15, 128], strides = [1, 1, 1]} : vector<16x16x128xf32> to vector<16x15x128xf32>
    %46 = tpu.concatenate %45, %42 in 1 : vector<16x15x128xf32>, vector<16x1x128xf32> -> vector<16x16x128xf32>
    %47 = arith.addf %40, %44 : vector<16x16x128xf32>
    %48 = arith.addf %47, %46 : vector<16x16x128xf32>
    %c0_15 = arith.constant 0 : index
    %c0_16 = arith.constant 0 : index
    %49 = vector.load %arg5[%c0_15, %c0_16] : memref<1x128xf32, #tpu.memory_space<vmem>>, vector<1x128xf32>
    %50 = vector.shape_cast %49 : vector<1x128xf32> to vector<1x1x128xf32>
    %51 = vector.broadcast %50 : vector<1x1x128xf32> to vector<16x16x128xf32>
    %52 = arith.addf %48, %51 : vector<16x16x128xf32>
    %c0_17 = arith.constant 0 : index
    %c0_18 = arith.constant 0 : index
    %c0_19 = arith.constant 0 : index
    %c0_20 = arith.constant 0 : index
    %53 = vector.load %arg8[%c0_17, %c0_18, %c0_19, %c0_20] : memref<1x16x16x128xf32, #tpu.memory_space<vmem>>, vector<1x16x16x128xf32>
    %54 = vector.shape_cast %53 : vector<1x16x16x128xf32> to vector<16x16x128xf32>
    %55 = vector.shape_cast %52 : vector<16x16x128xf32> to vector<1x16x16x128xf32>
    tpu.vector_store %arg8[%c0_17, %c0_18, %c0_19, %c0_20], %55 {strides = array<i32>} : memref<1x16x16x128xf32, #tpu.memory_space<vmem>>, vector<1x16x16x128xf32>,
    %56 = arith.truncf %52 : vector<16x16x128xf32> to vector<16x16x128xbf16>
    %cst_21 = arith.constant 0.000000e+00 : bf16
    %57 = vector.broadcast %cst_21 : bf16 to vector<1x16x128xbf16>
    %58 = tpu.concatenate %57, %56, %57 in 0 : vector<1x16x128xbf16>, vector<16x16x128xbf16>, vector<1x16x128xbf16> -> vector<18x16x128xbf16>
    %59 = vector.extract_strided_slice %58 {offsets = [0, 0, 0], sizes = [16, 16, 128], strides = [1, 1, 1]} : vector<18x16x128xbf16> to vector<16x16x128xbf16>
    %60 = vector.extract_strided_slice %58 {offsets = [1, 0, 0], sizes = [16, 16, 128], strides = [1, 1, 1]} : vector<18x16x128xbf16> to vector<16x16x128xbf16>
    %61 = vector.extract_strided_slice %58 {offsets = [2, 0, 0], sizes = [16, 16, 128], strides = [1, 1, 1]} : vector<18x16x128xbf16> to vector<16x16x128xbf16>
    %62 = tpu.concatenate %59, %60, %61 in 2 : vector<16x16x128xbf16>, vector<16x16x128xbf16>, vector<16x16x128xbf16> -> vector<16x16x384xbf16>
    %63 = vector.shape_cast %62 : vector<16x16x384xbf16> to vector<256x384xbf16>
    %c0_22 = arith.constant 0 : index
    %c0_23 = arith.constant 0 : index
    %64 = vector.load %arg6[%c0_22, %c0_23] : memref<384x384xbf16, #tpu.memory_space<vmem>>, vector<384x384xbf16>
    %cst_24 = arith.constant dense<0.000000e+00> : vector<256x384xf32>
    %65 = tpu.matmul %63, %64, %cst_24 {dimension_numbers = #tpu.dot_dimension_numbers<[1], [0], [0], [1], [0, 0, 1, 1], [], []>} : vector<256x384xbf16>, vector<384x384xbf16>, vector<256x384xf32> -> vector<256x384xf32>
    %66 = vector.shape_cast %65 : vector<256x384xf32> to vector<16x16x384xf32>
    %67 = vector.extract_strided_slice %66 {offsets = [0, 0, 0], sizes = [16, 16, 128], strides = [1, 1, 1]} : vector<16x16x384xf32> to vector<16x16x128xf32>
    %68 = vector.extract_strided_slice %66 {offsets = [0, 0, 128], sizes = [16, 16, 128], strides = [1, 1, 1]} : vector<16x16x384xf32> to vector<16x16x128xf32>
    %69 = vector.extract_strided_slice %66 {offsets = [0, 0, 256], sizes = [16, 16, 128], strides = [1, 1, 1]} : vector<16x16x384xf32> to vector<16x16x128xf32>
    %cst_25 = arith.constant 0.000000e+00 : f32
    %70 = vector.broadcast %cst_25 : f32 to vector<16x1x128xf32>
    %71 = vector.extract_strided_slice %67 {offsets = [0, 0, 0], sizes = [16, 15, 128], strides = [1, 1, 1]} : vector<16x16x128xf32> to vector<16x15x128xf32>
    %72 = tpu.concatenate %70, %71 in 1 : vector<16x1x128xf32>, vector<16x15x128xf32> -> vector<16x16x128xf32>
    %73 = vector.extract_strided_slice %69 {offsets = [0, 1, 0], sizes = [16, 15, 128], strides = [1, 1, 1]} : vector<16x16x128xf32> to vector<16x15x128xf32>
    %74 = tpu.concatenate %73, %70 in 1 : vector<16x15x128xf32>, vector<16x1x128xf32> -> vector<16x16x128xf32>
    %75 = arith.addf %68, %72 : vector<16x16x128xf32>
    %76 = arith.addf %75, %74 : vector<16x16x128xf32>
    %c0_26 = arith.constant 0 : index
    %c0_27 = arith.constant 0 : index
    %77 = vector.load %arg7[%c0_26, %c0_27] : memref<1x128xf32, #tpu.memory_space<vmem>>, vector<1x128xf32>
    %78 = vector.shape_cast %77 : vector<1x128xf32> to vector<1x1x128xf32>
    %79 = vector.broadcast %78 : vector<1x1x128xf32> to vector<16x16x128xf32>
    %80 = arith.addf %76, %79 : vector<16x16x128xf32>
    %c0_28 = arith.constant 0 : index
    %c0_29 = arith.constant 0 : index
    %c0_30 = arith.constant 0 : index
    %c0_31 = arith.constant 0 : index
    %81 = vector.load %arg9[%c0_28, %c0_29, %c0_30, %c0_31] : memref<1x16x16x128xf32, #tpu.memory_space<vmem>>, vector<1x16x16x128xf32>
    %82 = vector.shape_cast %81 : vector<1x16x16x128xf32> to vector<16x16x128xf32>
    %83 = vector.shape_cast %80 : vector<16x16x128xf32> to vector<1x16x16x128xf32>
    tpu.vector_store %arg9[%c0_28, %c0_29, %c0_30, %c0_31], %83 {strides = array<i32>} : memref<1x16x16x128xf32, #tpu.memory_space<vmem>>, vector<1x16x16x128xf32>,
    return
  }
  func.func @transform_0(%arg0: i32) -> (i32, i32, i32, i32) {
    %c0_i32 = arith.constant 0 : i32
    %c0_i32_0 = arith.constant 0 : i32
    %c0_i32_1 = arith.constant 0 : i32
    %c0_i32_2 = arith.constant 0 : i32
    return %arg0, %c0_i32, %c0_i32_0, %c0_i32_1 : i32, i32, i32, i32
  }
  func.func @transform_1(%arg0: i32) -> (i32, i32) {
    %c0_i32 = arith.constant 0 : i32
    %c0_i32_0 = arith.constant 0 : i32
    %c0_i32_1 = arith.constant 0 : i32
    return %c0_i32, %c0_i32_0 : i32, i32
  }
  func.func @transform_2(%arg0: i32) -> (i32, i32) {
    %c0_i32 = arith.constant 0 : i32
    %c0_i32_0 = arith.constant 0 : i32
    %c0_i32_1 = arith.constant 0 : i32
    return %c0_i32, %c0_i32_0 : i32, i32
  }
  func.func @transform_3(%arg0: i32) -> (i32, i32) {
    %c0_i32 = arith.constant 0 : i32
    %c0_i32_0 = arith.constant 0 : i32
    %c0_i32_1 = arith.constant 0 : i32
    return %c0_i32, %c0_i32_0 : i32, i32
  }
  func.func @transform_4(%arg0: i32) -> (i32, i32) {
    %c0_i32 = arith.constant 0 : i32
    %c0_i32_0 = arith.constant 0 : i32
    %c0_i32_1 = arith.constant 0 : i32
    return %c0_i32, %c0_i32_0 : i32, i32
  }
  func.func @transform_5(%arg0: i32) -> (i32, i32) {
    %c0_i32 = arith.constant 0 : i32
    %c0_i32_0 = arith.constant 0 : i32
    %c0_i32_1 = arith.constant 0 : i32
    return %c0_i32, %c0_i32_0 : i32, i32
  }
  func.func @transform_6(%arg0: i32) -> (i32, i32) {
    %c0_i32 = arith.constant 0 : i32
    %c0_i32_0 = arith.constant 0 : i32
    %c0_i32_1 = arith.constant 0 : i32
    return %c0_i32, %c0_i32_0 : i32, i32
  }
  func.func @transform_7(%arg0: i32) -> (i32, i32, i32, i32) {
    %c0_i32 = arith.constant 0 : i32
    %c0_i32_0 = arith.constant 0 : i32
    %c0_i32_1 = arith.constant 0 : i32
    %c0_i32_2 = arith.constant 0 : i32
    return %arg0, %c0_i32, %c0_i32_0, %c0_i32_1 : i32, i32, i32, i32
  }
  func.func @transform_8(%arg0: i32) -> (i32, i32, i32, i32) {
    %c0_i32 = arith.constant 0 : i32
    %c0_i32_0 = arith.constant 0 : i32
    %c0_i32_1 = arith.constant 0 : i32
    %c0_i32_2 = arith.constant 0 : i32
    return %arg0, %c0_i32, %c0_i32_0, %c0_i32_1 : i32, i32, i32, i32
  }
}

</mosaic_0001>

<llo_original>
// kernel: forward.1
$region0: #{forward.1}
  #allocation0 [shape = 'u32[]', space=smem, size = 0x4, offset = 0x4, fixed_abs, tag = 'smem constant byte address 0x4 - core index']
  #allocation1 [shape = 'u32[144,128]{1,0:T(1,128)}', space=vmem, size = 0x12000, scoped, tag = 'internal scratch']
  %s0 = inlined_call_operand.vmem [shape: bf16[2,16,16,128], index: 0, kind: input, shape index: {}]
  %s1 = inlined_call_operand.vmem [shape: bf16[384,384], index: 1, kind: input, shape index: {}]
  %s2 = inlined_call_operand.vmem [shape: f32[1,128], index: 2, kind: input, shape index: {}]
  %s3 = inlined_call_operand.vmem [shape: bf16[384,384], index: 3, kind: input, shape index: {}]
  %s4 = inlined_call_operand.vmem [shape: f32[1,128], index: 4, kind: input, shape index: {}]
  %s5 = inlined_call_operand.vmem [shape: bf16[384,384], index: 5, kind: input, shape index: {}]
  %s6 = inlined_call_operand.vmem [shape: f32[1,128], index: 6, kind: input, shape index: {}]
  %s7 = inlined_call_operand.vmem [shape: f32[2,16,16,128], index: 7, kind: output, shape index: {0}]
  %s8 = inlined_call_operand.vmem [shape: f32[2,16,16,128], index: 8, kind: output, shape index: {1}]
  %9 = xla_tuple %s7, %s8
  %s10 = sld [smem:[#allocation0]]
  $region69: #{forward.1} parent=0
    _
  %s12 = ssub.s32 1, %s10
  %s13 = scalar_select 0, %s12, %s10
  loop: start=0, step=1, limit=4
  $region2: #{forward.1} parent=0 // loop_pre_header
    _
  $region3: #{forward.1} parent=0 // loop_header
    %s15 = sphi 0, %s19
    %p16 = scmp.ge.s32.totalorder %s15, 4
    %s25 = sphi 0, %s27
    %s28 = sphi 0, %s25
    %s29 = sphi 0, %s28
    %s45 = sphi 0, %s29
    %s49 = sphi 0, %s49
    %s51 = sphi 0, %s49
    %s52 = sphi 0, %s51
    %s66 = sphi 0, %s52
    %s70 = sphi 0, %s70
    %s72 = sphi 0, %s70
    %s73 = sphi 0, %s72
    %s87 = sphi 0, %s73
    %s91 = sphi 0, %s91
    %s93 = sphi 0, %s91
    %s94 = sphi 0, %s93
    %s108 = sphi 0, %s94
    %s112 = sphi 0, %s112
    %s114 = sphi 0, %s112
    %s115 = sphi 0, %s114
    %s129 = sphi 0, %s115
    %s133 = sphi 0, %s133
    %s135 = sphi 0, %s133
    %s136 = sphi 0, %s135
    %s150 = sphi 0, %s136
    %s154 = sphi 0, %s154
    %s156 = sphi 0, %s154
    %s157 = sphi 0, %s156
    %s171 = sphi 0, %s157
    %s177 = sphi 0, %s179
    %s180 = sphi 0, %s177
    %s181 = sphi 0, %s180
    %s197 = sphi 0, %s181
    %s203 = sphi 0, %s205
    %s206 = sphi 0, %s203
    %s207 = sphi 0, %s206
    %s223 = sphi 0, %s207
  $region4: #{forward.1} parent=0 // loop_header_branch
    %18 = sbr.rel (%p16) target = $region8
  $region5: #{forward.1} parent=0 // loop_body
    %s20 = ssub.s32 %s15, 1
    %s21 = ssub.s32 %s15, 2
    %s22 = sadd.s32 %s15, 1
    %s23 = ssub.s32 %s15, %s22
    %p24 = scmp.eq.s32.totalorder %s23, 0
    %s26 = sadd.s32 %s25, 1
    %s27 = scalar_select %p24, %s25, %s26
    %p30 = pneg %p24
    %p31 = scmp.eq.s32.totalorder %s15, 1
    %p32 = por %p30, %p31
    %p33 = scmp.ne.s32.totalorder %s25, %s28
    %p34 = scmp.eq.s32.totalorder %s15, 0
    %p35 = por %p33, %p34
    %p36 = scmp.ne.s32.totalorder %s25, %s28
    %p37 = scmp.eq.s32.totalorder %s20, 1
    %p38 = por %p36, %p37
    %p39 = scmp.ne.s32.totalorder %s28, %s29
    %p40 = scmp.eq.s32.totalorder %s20, 0
    %p41 = por %p39, %p40
    %p42 = scmp.ne.s32.totalorder %s28, %s29
    %p43 = scmp.eq.s32.totalorder %s21, 1
    %p44 = por %p42, %p43
    %p46 = scmp.ne.s32.totalorder %s29, %s45
    %p47 = scmp.eq.s32.totalorder %s21, 0
    %p48 = por %p46, %p47
    %s50 = sadd.s32 %s49, 1
    %p53 = scmp.eq.s32.totalorder %s15, 1
    %p54 = scmp.ne.s32.totalorder %s49, %s51
    %p55 = scmp.eq.s32.totalorder %s15, 0
    %p56 = por %p54, %p55
    %p57 = scmp.ne.s32.totalorder %s49, %s51
    %p58 = scmp.eq.s32.totalorder %s20, 1
    %p59 = por %p57, %p58
    %p60 = scmp.ne.s32.totalorder %s51, %s52
    %p61 = scmp.eq.s32.totalorder %s20, 0
    %p62 = por %p60, %p61
    %p63 = scmp.ne.s32.totalorder %s51, %s52
    %p64 = scmp.eq.s32.totalorder %s21, 1
    %p65 = por %p63, %p64
    %p67 = scmp.ne.s32.totalorder %s52, %s66
    %p68 = scmp.eq.s32.totalorder %s21, 0
    %p69 = por %p67, %p68
    %s71 = sadd.s32 %s70, 1
    %p74 = scmp.eq.s32.totalorder %s15, 1
    %p75 = scmp.ne.s32.totalorder %s70, %s72
    %p76 = scmp.eq.s32.totalorder %s15, 0
    %p77 = por %p75, %p76
    %p78 = scmp.ne.s32.totalorder %s70, %s72
    %p79 = scmp.eq.s32.totalorder %s20, 1
    %p80 = por %p78, %p79
    %p81 = scmp.ne.s32.totalorder %s72, %s73
    %p82 = scmp.eq.s32.totalorder %s20, 0
    %p83 = por %p81, %p82
    %p84 = scmp.ne.s32.totalorder %s72, %s73
    %p85 = scmp.eq.s32.totalorder %s21, 1
    %p86 = por %p84, %p85
    %p88 = scmp.ne.s32.totalorder %s73, %s87
    %p89 = scmp.eq.s32.totalorder %s21, 0
    %p90 = por %p88, %p89
    %s92 = sadd.s32 %s91, 1
    %p95 = scmp.eq.s32.totalorder %s15, 1
    %p96 = scmp.ne.s32.totalorder %s91, %s93
    %p97 = scmp.eq.s32.totalorder %s15, 0
    %p98 = por %p96, %p97
    %p99 = scmp.ne.s32.totalorder %s91, %s93
    %p100 = scmp.eq.s32.totalorder %s20, 1
    %p101 = por %p99, %p100
    %p102 = scmp.ne.s32.totalorder %s93, %s94
    %p103 = scmp.eq.s32.totalorder %s20, 0
    %p104 = por %p102, %p103
    %p105 = scmp.ne.s32.totalorder %s93, %s94
    %p106 = scmp.eq.s32.totalorder %s21, 1
    %p107 = por %p105, %p106
    %p109 = scmp.ne.s32.totalorder %s94, %s108
    %p110 = scmp.eq.s32.totalorder %s21, 0
    %p111 = por %p109, %p110
    %s113 = sadd.s32 %s112, 1
    %p116 = scmp.eq.s32.totalorder %s15, 1
    %p117 = scmp.ne.s32.totalorder %s112, %s114
    %p118 = scmp.eq.s32.totalorder %s15, 0
    %p119 = por %p117, %p118
    %p120 = scmp.ne.s32.totalorder %s112, %s114
    %p121 = scmp.eq.s32.totalorder %s20, 1
    %p122 = por %p120, %p121
    %p123 = scmp.ne.s32.totalorder %s114, %s115
    %p124 = scmp.eq.s32.totalorder %s20, 0
    %p125 = por %p123, %p124
    %p126 = scmp.ne.s32.totalorder %s114, %s115
    %p127 = scmp.eq.s32.totalorder %s21, 1
    %p128 = por %p126, %p127
    %p130 = scmp.ne.s32.totalorder %s115, %s129
    %p131 = scmp.eq.s32.totalorder %s21, 0
    %p132 = por %p130, %p131
    %s134 = sadd.s32 %s133, 1
    %p137 = scmp.eq.s32.totalorder %s15, 1
    %p138 = scmp.ne.s32.totalorder %s133, %s135
    %p139 = scmp.eq.s32.totalorder %s15, 0
    %p140 = por %p138, %p139
    %p141 = scmp.ne.s32.totalorder %s133, %s135
    %p142 = scmp.eq.s32.totalorder %s20, 1
    %p143 = por %p141, %p142
    %p144 = scmp.ne.s32.totalorder %s135, %s136
    %p145 = scmp.eq.s32.totalorder %s20, 0
    %p146 = por %p144, %p145
    %p147 = scmp.ne.s32.totalorder %s135, %s136
    %p148 = scmp.eq.s32.totalorder %s21, 1
    %p149 = por %p147, %p148
    %p151 = scmp.ne.s32.totalorder %s136, %s150
    %p152 = scmp.eq.s32.totalorder %s21, 0
    %p153 = por %p151, %p152
    %s155 = sadd.s32 %s154, 1
    %p158 = scmp.eq.s32.totalorder %s15, 1
    %p159 = scmp.ne.s32.totalorder %s154, %s156
    %p160 = scmp.eq.s32.totalorder %s15, 0
    %p161 = por %p159, %p160
    %p162 = scmp.ne.s32.totalorder %s154, %s156
    %p163 = scmp.eq.s32.totalorder %s20, 1
    %p164 = por %p162, %p163
    %p165 = scmp.ne.s32.totalorder %s156, %s157
    %p166 = scmp.eq.s32.totalorder %s20, 0
    %p167 = por %p165, %p166
    %p168 = scmp.ne.s32.totalorder %s156, %s157
    %p169 = scmp.eq.s32.totalorder %s21, 1
    %p170 = por %p168, %p169
    %p172 = scmp.ne.s32.totalorder %s157, %s171
    %p173 = scmp.eq.s32.totalorder %s21, 0
    %p174 = por %p172, %p173
    %s175 = ssub.s32 %s15, %s22
    %p176 = scmp.eq.s32.totalorder %s175, 0
    %s178 = sadd.s32 %s177, 1
    %s179 = scalar_select %p176, %s177, %s178
    %p182 = pneg %p176
    %p183 = scmp.eq.s32.totalorder %s15, 1
    %p184 = por %p182, %p183
    %p185 = scmp.ne.s32.totalorder %s177, %s180
    %p186 = scmp.eq.s32.totalorder %s15, 0
    %p187 = por %p185, %p186
    %p188 = scmp.ne.s32.totalorder %s177, %s180
    %p189 = scmp.eq.s32.totalorder %s20, 1
    %p190 = por %p188, %p189
    %p191 = scmp.ne.s32.totalorder %s180, %s181
    %p192 = scmp.eq.s32.totalorder %s20, 0
    %p193 = por %p191, %p192
    %p194 = scmp.ne.s32.totalorder %s180, %s181
    %p195 = scmp.eq.s32.totalorder %s21, 1
    %p196 = por %p194, %p195
    %p198 = scmp.ne.s32.totalorder %s181, %s197
    %p199 = scmp.eq.s32.totalorder %s21, 0
    %p200 = por %p198, %p199
    %s201 = ssub.s32 %s15, %s22
    %p202 = scmp.eq.s32.totalorder %s201, 0
    %s204 = sadd.s32 %s203, 1
    %s205 = scalar_select %p202, %s203, %s204
    %p208 = pneg %p202
    %p209 = scmp.eq.s32.totalorder %s15, 1
    %p210 = por %p208, %p209
    %p211 = scmp.ne.s32.totalorder %s203, %s206
    %p212 = scmp.eq.s32.totalorder %s15, 0
    %p213 = por %p211, %p212
    %p214 = scmp.ne.s32.totalorder %s203, %s206
    %p215 = scmp.eq.s32.totalorder %s20, 1
    %p216 = por %p214, %p215
    %p217 = scmp.ne.s32.totalorder %s206, %s207
    %p218 = scmp.eq.s32.totalorder %s20, 0
    %p219 = por %p217, %p218
    %p220 = scmp.ne.s32.totalorder %s206, %s207
    %p221 = scmp.eq.s32.totalorder %s21, 1
    %p222 = por %p220, %p221
    %p224 = scmp.ne.s32.totalorder %s207, %s223
    %p225 = scmp.eq.s32.totalorder %s21, 0
    %p226 = por %p224, %p225
    %p227 = scmp.le.s32.totalorder 1, %s15
    %p228 = scmp.lt.s32.totalorder %s15, 3
    %p229 = pnand %p227, %p228
    %p230 = pneg %p229
    // Predicated region
    $region9: #{forward.1} parent=5 // pred_check
      _
    $region10: #{forward.1} parent=5 // pred_check_branch
      %232 = sbr.rel (%p229) target = $region12
    $region11: #{forward.1} parent=5 // pred_region
      %s233 = ssub.s32 %s15, 1
      // Predicated region
      $region13: #{forward.1} parent=11 // pred_check
        %p234 = pneg %p62
      $region14: #{forward.1} parent=11 // pred_check_branch
        %236 = sbr.rel (%p234) target = $region16
      $region15: #{forward.1} parent=11 // pred_region
        _
      $region16: #{forward.1} parent=11 // pred_fallthru
        _
      // Predicated region
      $region17: #{forward.1} parent=11 // pred_check
        %p237 = pneg %p83
      $region18: #{forward.1} parent=11 // pred_check_branch
        %239 = sbr.rel (%p237) target = $region20
      $region19: #{forward.1} parent=11 // pred_region
        _
      $region20: #{forward.1} parent=11 // pred_fallthru
        _
      // Predicated region
      $region21: #{forward.1} parent=11 // pred_check
        %p240 = pneg %p104
      $region22: #{forward.1} parent=11 // pred_check_branch
        %242 = sbr.rel (%p240) target = $region24
      $region23: #{forward.1} parent=11 // pred_region
        _
      $region24: #{forward.1} parent=11 // pred_fallthru
        _
      // Predicated region
      $region25: #{forward.1} parent=11 // pred_check
        %p243 = pneg %p125
      $region26: #{forward.1} parent=11 // pred_check_branch
        %245 = sbr.rel (%p243) target = $region28
      $region27: #{forward.1} parent=11 // pred_region
        _
      $region28: #{forward.1} parent=11 // pred_fallthru
        _
      // Predicated region
      $region29: #{forward.1} parent=11 // pred_check
        %p246 = pneg %p146
      $region30: #{forward.1} parent=11 // pred_check_branch
        %248 = sbr.rel (%p246) target = $region32
      $region31: #{forward.1} parent=11 // pred_region
        _
      $region32: #{forward.1} parent=11 // pred_fallthru
        _
      // Predicated region
      $region33: #{forward.1} parent=11 // pred_check
        %p249 = pneg %p167
      $region34: #{forward.1} parent=11 // pred_check_branch
        %251 = sbr.rel (%p249) target = $region36
      $region35: #{forward.1} parent=11 // pred_region
        _
      $region36: #{forward.1} parent=11 // pred_fallthru
        _
    $region12: #{forward.1} parent=5 // pred_fallthru
      _
    %p252 = scmp.lt.s32.totalorder %s15, 2
    // Predicated region
    $region37: #{forward.1} parent=5 // pred_check
      %p253 = pneg %p252
    $region38: #{forward.1} parent=5 // pred_check_branch
      %255 = sbr.rel (%p253) target = $region40
    $region39: #{forward.1} parent=5 // pred_region
      // Predicated region
      $region41: #{forward.1} parent=39 // pred_check
        %p256 = pneg %p35
      $region42: #{forward.1} parent=39 // pred_check_branch
        %258 = sbr.rel (%p256) target = $region44
      $region43: #{forward.1} parent=39 // pred_region
        %p259 = scmp.lt.s32.totalorder %s15, 1
        %s260 = scalar_select %p259, %s15, 1
        %s261 = smul.addr %s260, 32
        %s262 = smul.addr %s261, 4
        %s263 = scalar_lea.vmem %s0, %s262
      $region44: #{forward.1} parent=39 // pred_fallthru
        _
    $region40: #{forward.1} parent=5 // pred_fallthru
      _
    %p264 = scmp.le.s32.totalorder 1, %s15
    %p265 = scmp.lt.s32.totalorder %s15, 3
    %p266 = pnand %p264, %p265
    %p267 = pneg %p266
    // Predicated region
    $region45: #{forward.1} parent=5 // pred_check
      _
    $region46: #{forward.1} parent=5 // pred_check_branch
      %269 = sbr.rel (%p266) target = $region48
    $region47: #{forward.1} parent=5 // pred_region
      %s270 = ssub.s32 %s15, 1
      %p271 = scmp.lt.s32.totalorder %s20, 1
      %s272 = scalar_select %p271, %s20, 1
      %s273 = smul.addr %s272, 32
      %s274 = smul.addr %s273, 4
      %s275 = scalar_lea.vmem %s0, %s274
      %p276 = pneg %p41
      %p277 = pneg %p38
      %p278 = pneg %p62
      %p279 = pneg %p59
      %p280 = pneg %p83
      %p281 = pneg %p80
      %p282 = pneg %p104
      %p283 = pneg %p101
      %p284 = pneg %p125
      %p285 = pneg %p122
      %p286 = pneg %p146
      %p287 = pneg %p143
      %p288 = pneg %p167
      %p289 = pneg %p164
      %p290 = pneg %p193
      %p291 = pneg %p190
      %p292 = scmp.lt.s32.totalorder %s20, 1
      %s293 = scalar_select %p292, %s20, 1
      %s294 = smul.addr %s293, 32
      %s295 = smul.addr %s294, 8
      %s296 = scalar_lea.vmem %s7, %s295
      %p297 = pneg %p219
      %p298 = pneg %p216
      %p299 = scmp.lt.s32.totalorder %s20, 1
      %s300 = scalar_select %p299, %s20, 1
      %s301 = smul.addr %s300, 32
      %s302 = smul.addr %s301, 8
      %s303 = scalar_lea.vmem %s8, %s302
      %p304 = scmp.lt.s32.totalorder %s20, 1
      %s305 = scalar_select %p304, %s20, 1
      %s306 = smul.addr %s305, 32
      %s307 = smul.addr %s306, 4
      %s308 = scalar_lea.vmem %s0, %s307
      %p309 = scmp.lt.s32.totalorder %s20, 1
      %s310 = scalar_select %p309, %s20, 1
      %s311 = smul.addr %s310, 32
      %s312 = smul.addr %s311, 8
      %s313 = scalar_lea.vmem %s7, %s312
      %p314 = scmp.lt.s32.totalorder %s20, 1
      %s315 = scalar_select %p314, %s20, 1
      %s316 = smul.addr %s315, 32
      %s317 = smul.addr %s316, 8
      %s318 = scalar_lea.vmem %s8, %s317
      %v320 = vld [vmem:[%s308] sm:$0xf]
      %v321 = vld [vmem:[%s308 + $0x4] sm:$0xf]
      %v322 = vld [vmem:[%s308 + $0x8] sm:$0xf]
      %v323 = vld [vmem:[%s308 + $0xc] sm:$0xf]
      %v324 = vld [vmem:[%s308 + $0x10] sm:$0xf]
      %v325 = vld [vmem:[%s308 + $0x14] sm:$0xf]
      %v326 = vld [vmem:[%s308 + $0x18] sm:$0xf]
      %v327 = vld [vmem:[%s308 + $0x1c] sm:$0xf]
      %v328 = vld [vmem:[%s308 + $0x20] sm:$0xf]
      %v329 = vld [vmem:[%s308 + $0x24] sm:$0xf]
      %v330 = vld [vmem:[%s308 + $0x28] sm:$0xf]
      %v331 = vld [vmem:[%s308 + $0x2c] sm:$0xf]
      %v332 = vld [vmem:[%s308 + $0x30] sm:$0xf]
      %v333 = vld [vmem:[%s308 + $0x34] sm:$0xf]
      %v334 = vld [vmem:[%s308 + $0x38] sm:$0xf]
      %v335 = vld [vmem:[%s308 + $0x3c] sm:$0xf]
      %v336 = vld [vmem:[%s308 + $0x40] sm:$0xf]
      %v337 = vld [vmem:[%s308 + $0x44] sm:$0xf]
      %v338 = vld [vmem:[%s308 + $0x48] sm:$0xf]
      %v339 = vld [vmem:[%s308 + $0x4c] sm:$0xf]
      %v340 = vld [vmem:[%s308 + $0x50] sm:$0xf]
      %v341 = vld [vmem:[%s308 + $0x54] sm:$0xf]
      %v342 = vld [vmem:[%s308 + $0x58] sm:$0xf]
      %v343 = vld [vmem:[%s308 + $0x5c] sm:$0xf]
      %v344 = vld [vmem:[%s308 + $0x60] sm:$0xf]
      %v345 = vld [vmem:[%s308 + $0x64] sm:$0xf]
      %v346 = vld [vmem:[%s308 + $0x68] sm:$0xf]
      %v347 = vld [vmem:[%s308 + $0x6c] sm:$0xf]
      %v348 = vld [vmem:[%s308 + $0x70] sm:$0xf]
      %v349 = vld [vmem:[%s308 + $0x74] sm:$0xf]
      %v350 = vld [vmem:[%s308 + $0x78] sm:$0xf]
      %v351 = vld [vmem:[%s308 + $0x7c] sm:$0xf]
      %v384 = vunpack.c.l.b16 %v320
      %v385 = vunpack.c.l.b16 %v321
      %v386 = vunpack.c.l.b16 %v322
      %v387 = vunpack.c.l.b16 %v323
      %v388 = vunpack.c.l.b16 %v324
      %v389 = vunpack.c.l.b16 %v325
      %v390 = vunpack.c.l.b16 %v326
      %v391 = vunpack.c.l.b16 %v327
      %v392 = vunpack.c.l.b16 %v328
      %v393 = vunpack.c.l.b16 %v329
      %v394 = vunpack.c.l.b16 %v330
      %v395 = vunpack.c.l.b16 %v331
      %v396 = vunpack.c.l.b16 %v332
      %v397 = vunpack.c.l.b16 %v333
      %v398 = vunpack.c.l.b16 %v334
      %v399 = vunpack.c.l.b16 %v335
      %v400 = vunpack.c.l.b16 %v336
      %v401 = vunpack.c.l.b16 %v337
      %v402 = vunpack.c.l.b16 %v338
      %v403 = vunpack.c.l.b16 %v339
      %v404 = vunpack.c.l.b16 %v340
      %v405 = vunpack.c.l.b16 %v341
      %v406 = vunpack.c.l.b16 %v342
      %v407 = vunpack.c.l.b16 %v343
      %v408 = vunpack.c.l.b16 %v344
      %v409 = vunpack.c.l.b16 %v345
      %v410 = vunpack.c.l.b16 %v346
      %v411 = vunpack.c.l.b16 %v347
      %v412 = vunpack.c.l.b16 %v348
      %v413 = vunpack.c.l.b16 %v349
      %v414 = vunpack.c.l.b16 %v350
      %v415 = vunpack.c.l.b16 %v351
      %v416 = vpack.c.b16 %v385, %v384
      %v417 = vpack.c.b16 %v387, %v386
      %v418 = vpack.c.b16 %v389, %v388
      %v419 = vpack.c.b16 %v391, %v390
      %v420 = vpack.c.b16 %v393, %v392
      %v421 = vpack.c.b16 %v395, %v394
      %v422 = vpack.c.b16 %v397, %v396
      %v423 = vpack.c.b16 %v399, %v398
      %v424 = vpack.c.b16 %v401, %v400
      %v425 = vpack.c.b16 %v403, %v402
      %v426 = vpack.c.b16 %v405, %v404
      %v427 = vpack.c.b16 %v407, %v406
      %v428 = vpack.c.b16 %v409, %v408
      %v429 = vpack.c.b16 %v411, %v410
      %v430 = vpack.c.b16 %v413, %v412
      %v431 = vpack.c.b16 %v415, %v414
      %v448 = vld [vmem:[%s1] sm:$0xff]
      %v449 = vld [vmem:[%s1 + $0x8] sm:$0xf]
      %v450 = vld [vmem:[%s1 + $0xc] sm:$0xff]
      %v451 = vld [vmem:[%s1 + $0x14] sm:$0xf]
      %v452 = vld [vmem:[%s1 + $0x18] sm:$0xff]
      %v453 = vld [vmem:[%s1 + $0x20] sm:$0xf]
      %v454 = vld [vmem:[%s1 + $0x24] sm:$0xff]
      %v455 = vld [vmem:[%s1 + $0x2c] sm:$0xf]
      %v456 = vld [vmem:[%s1 + $0x30] sm:$0xff]
      %v457 = vld [vmem:[%s1 + $0x38] sm:$0xf]
      %v458 = vld [vmem:[%s1 + $0x3c] sm:$0xff]
      %v459 = vld [vmem:[%s1 + $0x44] sm:$0xf]
      %v460 = vld [vmem:[%s1 + $0x48] sm:$0xff]
      %v461 = vld [vmem:[%s1 + $0x50] sm:$0xf]
      %v462 = vld [vmem:[%s1 + $0x54] sm:$0xff]
      %v463 = vld [vmem:[%s1 + $0x5c] sm:$0xf]
      %v464 = vld [vmem:[%s1 + $0x60] sm:$0xff]
      %v465 = vld [vmem:[%s1 + $0x68] sm:$0xf]
      %v466 = vld [vmem:[%s1 + $0x6c] sm:$0xff]
      %v467 = vld [vmem:[%s1 + $0x74] sm:$0xf]
      %v468 = vld [vmem:[%s1 + $0x78] sm:$0xff]
      %v469 = vld [vmem:[%s1 + $0x80] sm:$0xf]
      %v470 = vld [vmem:[%s1 + $0x84] sm:$0xff]
      %v471 = vld [vmem:[%s1 + $0x8c] sm:$0xf]
      %v472 = vld [vmem:[%s1 + $0x90] sm:$0xff]
      %v473 = vld [vmem:[%s1 + $0x98] sm:$0xf]
      %v474 = vld [vmem:[%s1 + $0x9c] sm:$0xff]
      %v475 = vld [vmem:[%s1 + $0xa4] sm:$0xf]
      %v476 = vld [vmem:[%s1 + $0xa8] sm:$0xff]
      %v477 = vld [vmem:[%s1 + $0xb0] sm:$0xf]
      %v478 = vld [vmem:[%s1 + $0xb4] sm:$0xff]
      %v479 = vld [vmem:[%s1 + $0xbc] sm:$0xf]
      %v480 = vld [vmem:[%s1 + $0xc0] sm:$0xff]
      %v481 = vld [vmem:[%s1 + $0xc8] sm:$0xf]
      %v482 = vld [vmem:[%s1 + $0xcc] sm:$0xff]
      %v483 = vld [vmem:[%s1 + $0xd4] sm:$0xf]
      %v484 = vld [vmem:[%s1 + $0xd8] sm:$0xff]
      %v485 = vld [vmem:[%s1 + $0xe0] sm:$0xf]
      %v486 = vld [vmem:[%s1 + $0xe4] sm:$0xff]
      %v487 = vld [vmem:[%s1 + $0xec] sm:$0xf]
      %v488 = vld [vmem:[%s1 + $0xf0] sm:$0xff]
      %v489 = vld [vmem:[%s1 + $0xf8] sm:$0xf]
      %v490 = vld [vmem:[%s1 + $0xfc] sm:$0xff]
      %v491 = vld [vmem:[%s1 + $0x104] sm:$0xf]
      %v492 = vld [vmem:[%s1 + $0x108] sm:$0xff]
      %v493 = vld [vmem:[%s1 + $0x110] sm:$0xf]
      %v494 = vld [vmem:[%s1 + $0x114] sm:$0xff]
      %v495 = vld [vmem:[%s1 + $0x11c] sm:$0xf]
      %v496 = vld [vmem:[%s1 + $0x120] sm:$0xff]
      %v497 = vld [vmem:[%s1 + $0x128] sm:$0xf]
      %v498 = vld [vmem:[%s1 + $0x12c] sm:$0xff]
      %v499 = vld [vmem:[%s1 + $0x134] sm:$0xf]
      %v500 = vld [vmem:[%s1 + $0x138] sm:$0xff]
      %v501 = vld [vmem:[%s1 + $0x140] sm:$0xf]
      %v502 = vld [vmem:[%s1 + $0x144] sm:$0xff]
      %v503 = vld [vmem:[%s1 + $0x14c] sm:$0xf]
      %v504 = vld [vmem:[%s1 + $0x150] sm:$0xff]
      %v505 = vld [vmem:[%s1 + $0x158] sm:$0xf]
      %v506 = vld [vmem:[%s1 + $0x15c] sm:$0xff]
      %v507 = vld [vmem:[%s1 + $0x164] sm:$0xf]
      %v508 = vld [vmem:[%s1 + $0x168] sm:$0xff]
      %v509 = vld [vmem:[%s1 + $0x170] sm:$0xf]
      %v510 = vld [vmem:[%s1 + $0x174] sm:$0xff]
      %v511 = vld [vmem:[%s1 + $0x17c] sm:$0xf]
      %v512 = vld [vmem:[%s1 + $0x180] sm:$0xff]
      %v513 = vld [vmem:[%s1 + $0x188] sm:$0xf]
      %v514 = vld [vmem:[%s1 + $0x18c] sm:$0xff]
      %v515 = vld [vmem:[%s1 + $0x194] sm:$0xf]
      %v516 = vld [vmem:[%s1 + $0x198] sm:$0xff]
      %v517 = vld [vmem:[%s1 + $0x1a0] sm:$0xf]
      %v518 = vld [vmem:[%s1 + $0x1a4] sm:$0xff]
      %v519 = vld [vmem:[%s1 + $0x1ac] sm:$0xf]
      %v520 = vld [vmem:[%s1 + $0x1b0] sm:$0xff]
      %v521 = vld [vmem:[%s1 + $0x1b8] sm:$0xf]
      %v522 = vld [vmem:[%s1 + $0x1bc] sm:$0xff]
      %v523 = vld [vmem:[%s1 + $0x1c4] sm:$0xf]
      %v524 = vld [vmem:[%s1 + $0x1c8] sm:$0xff]
      %v525 = vld [vmem:[%s1 + $0x1d0] sm:$0xf]
      %v526 = vld [vmem:[%s1 + $0x1d4] sm:$0xff]
      %v527 = vld [vmem:[%s1 + $0x1dc] sm:$0xf]
      %v528 = vld [vmem:[%s1 + $0x1e0] sm:$0xff]
      %v529 = vld [vmem:[%s1 + $0x1e8] sm:$0xf]
      %v530 = vld [vmem:[%s1 + $0x1ec] sm:$0xff]
      %v531 = vld [vmem:[%s1 + $0x1f4] sm:$0xf]
      %v532 = vld [vmem:[%s1 + $0x1f8] sm:$0xff]
      %v533 = vld [vmem:[%s1 + $0x200] sm:$0xf]
      %v534 = vld [vmem:[%s1 + $0x204] sm:$0xff]
      %v535 = vld [vmem:[%s1 + $0x20c] sm:$0xf]
      %v536 = vld [vmem:[%s1 + $0x210] sm:$0xff]
      %v537 = vld [vmem:[%s1 + $0x218] sm:$0xf]
      %v538 = vld [vmem:[%s1 + $0x21c] sm:$0xff]
      %v539 = vld [vmem:[%s1 + $0x224] sm:$0xf]
      %v540 = vld [vmem:[%s1 + $0x228] sm:$0xff]
      %v541 = vld [vmem:[%s1 + $0x230] sm:$0xf]
      %v542 = vld [vmem:[%s1 + $0x234] sm:$0xff]
      %v543 = vld [vmem:[%s1 + $0x23c] sm:$0xf]
      %v640 = vunpack.c.l.b16 %v448
      %v641 = vunpack.c.h.b16 %v448
      %v642 = vunpack.c.l.b16 %v449
      %v643 = vunpack.c.l.b16 %v450
      %v644 = vunpack.c.h.b16 %v450
      %v645 = vunpack.c.l.b16 %v451
      %v646 = vunpack.c.l.b16 %v452
      %v647 = vunpack.c.h.b16 %v452
      %v648 = vunpack.c.l.b16 %v453
      %v649 = vunpack.c.l.b16 %v454
      %v650 = vunpack.c.h.b16 %v454
      %v651 = vunpack.c.l.b16 %v455
      %v652 = vunpack.c.l.b16 %v456
      %v653 = vunpack.c.h.b16 %v456
      %v654 = vunpack.c.l.b16 %v457
      %v655 = vunpack.c.l.b16 %v458
      %v656 = vunpack.c.h.b16 %v458
      %v657 = vunpack.c.l.b16 %v459
      %v658 = vunpack.c.l.b16 %v460
      %v659 = vunpack.c.h.b16 %v460
      %v660 = vunpack.c.l.b16 %v461
      %v661 = vunpack.c.l.b16 %v462
      %v662 = vunpack.c.h.b16 %v462
      %v663 = vunpack.c.l.b16 %v463
      %v664 = vunpack.c.l.b16 %v464
      %v665 = vunpack.c.h.b16 %v464
      %v666 = vunpack.c.l.b16 %v465
      %v667 = vunpack.c.l.b16 %v466
      %v668 = vunpack.c.h.b16 %v466
      %v669 = vunpack.c.l.b16 %v467
      %v670 = vunpack.c.l.b16 %v468
      %v671 = vunpack.c.h.b16 %v468
      %v672 = vunpack.c.l.b16 %v469
      %v673 = vunpack.c.l.b16 %v470
      %v674 = vunpack.c.h.b16 %v470
      %v675 = vunpack.c.l.b16 %v471
      %v676 = vunpack.c.l.b16 %v472
      %v677 = vunpack.c.h.b16 %v472
      %v678 = vunpack.c.l.b16 %v473
      %v679 = vunpack.c.l.b16 %v474
      %v680 = vunpack.c.h.b16 %v474
      %v681 = vunpack.c.l.b16 %v475
      %v682 = vunpack.c.l.b16 %v476
      %v683 = vunpack.c.h.b16 %v476
      %v684 = vunpack.c.l.b16 %v477
      %v685 = vunpack.c.l.b16 %v478
      %v686 = vunpack.c.h.b16 %v478
      %v687 = vunpack.c.l.b16 %v479
      %v688 = vunpack.c.l.b16 %v480
      %v689 = vunpack.c.h.b16 %v480
      %v690 = vunpack.c.l.b16 %v481
      %v691 = vunpack.c.l.b16 %v482
      %v692 = vunpack.c.h.b16 %v482
      %v693 = vunpack.c.l.b16 %v483
      %v694 = vunpack.c.l.b16 %v484
      %v695 = vunpack.c.h.b16 %v484
      %v696 = vunpack.c.l.b16 %v485
      %v697 = vunpack.c.l.b16 %v486
      %v698 = vunpack.c.h.b16 %v486
      %v699 = vunpack.c.l.b16 %v487
      %v700 = vunpack.c.l.b16 %v488
      %v701 = vunpack.c.h.b16 %v488
      %v702 = vunpack.c.l.b16 %v489
      %v703 = vunpack.c.l.b16 %v490
      %v704 = vunpack.c.h.b16 %v490
      %v705 = vunpack.c.l.b16 %v491
      %v706 = vunpack.c.l.b16 %v492
      %v707 = vunpack.c.h.b16 %v492
      %v708 = vunpack.c.l.b16 %v493
      %v709 = vunpack.c.l.b16 %v494
      %v710 = vunpack.c.h.b16 %v494
      %v711 = vunpack.c.l.b16 %v495
      %v712 = vunpack.c.l.b16 %v496
      %v713 = vunpack.c.h.b16 %v496
      %v714 = vunpack.c.l.b16 %v497
      %v715 = vunpack.c.l.b16 %v498
      %v716 = vunpack.c.h.b16 %v498
      %v717 = vunpack.c.l.b16 %v499
      %v718 = vunpack.c.l.b16 %v500
      %v719 = vunpack.c.h.b16 %v500
      %v720 = vunpack.c.l.b16 %v501
      %v721 = vunpack.c.l.b16 %v502
      %v722 = vunpack.c.h.b16 %v502
      %v723 = vunpack.c.l.b16 %v503
      %v724 = vunpack.c.l.b16 %v504
      %v725 = vunpack.c.h.b16 %v504
      %v726 = vunpack.c.l.b16 %v505
      %v727 = vunpack.c.l.b16 %v506
      %v728 = vunpack.c.h.b16 %v506
      %v729 = vunpack.c.l.b16 %v507
      %v730 = vunpack.c.l.b16 %v508
      %v731 = vunpack.c.h.b16 %v508
      %v732 = vunpack.c.l.b16 %v509
      %v733 = vunpack.c.l.b16 %v510
      %v734 = vunpack.c.h.b16 %v510
      %v735 = vunpack.c.l.b16 %v511
      %v736 = vunpack.c.l.b16 %v512
      %v737 = vunpack.c.h.b16 %v512
      %v738 = vunpack.c.l.b16 %v513
      %v739 = vunpack.c.l.b16 %v514
      %v740 = vunpack.c.h.b16 %v514
      %v741 = vunpack.c.l.b16 %v515
      %v742 = vunpack.c.l.b16 %v516
      %v743 = vunpack.c.h.b16 %v516
      %v744 = vunpack.c.l.b16 %v517
      %v745 = vunpack.c.l.b16 %v518
      %v746 = vunpack.c.h.b16 %v518
      %v747 = vunpack.c.l.b16 %v519
      %v748 = vunpack.c.l.b16 %v520
      %v749 = vunpack.c.h.b16 %v520
      %v750 = vunpack.c.l.b16 %v521
      %v751 = vunpack.c.l.b16 %v522
      %v752 = vunpack.c.h.b16 %v522
      %v753 = vunpack.c.l.b16 %v523
      %v754 = vunpack.c.l.b16 %v524
      %v755 = vunpack.c.h.b16 %v524
      %v756 = vunpack.c.l.b16 %v525
      %v757 = vunpack.c.l.b16 %v526
      %v758 = vunpack.c.h.b16 %v526
      %v759 = vunpack.c.l.b16 %v527
      %v760 = vunpack.c.l.b16 %v528
      %v761 = vunpack.c.h.b16 %v528
      %v762 = vunpack.c.l.b16 %v529
      %v763 = vunpack.c.l.b16 %v530
      %v764 = vunpack.c.h.b16 %v530
      %v765 = vunpack.c.l.b16 %v531
      %v766 = vunpack.c.l.b16 %v532
      %v767 = vunpack.c.h.b16 %v532
      %v768 = vunpack.c.l.b16 %v533
      %v769 = vunpack.c.l.b16 %v534
      %v770 = vunpack.c.h.b16 %v534
      %v771 = vunpack.c.l.b16 %v535
      %v772 = vunpack.c.l.b16 %v536
      %v773 = vunpack.c.h.b16 %v536
      %v774 = vunpack.c.l.b16 %v537
      %v775 = vunpack.c.l.b16 %v538
      %v776 = vunpack.c.h.b16 %v538
      %v777 = vunpack.c.l.b16 %v539
      %v778 = vunpack.c.l.b16 %v540
      %v779 = vunpack.c.h.b16 %v540
      %v780 = vunpack.c.l.b16 %v541
      %v781 = vunpack.c.l.b16 %v542
      %v782 = vunpack.c.h.b16 %v542
      %v783 = vunpack.c.l.b16 %v543
      %v784 = vpack.c.b16 %v643, %v640
      %v785 = vpack.c.b16 %v644, %v641
      %v786 = vpack.c.b16 %v645, %v642
      %v787 = vpack.c.b16 %v649, %v646
      %v788 = vpack.c.b16 %v650, %v647
      %v789 = vpack.c.b16 %v651, %v648
      %v790 = vpack.c.b16 %v655, %v652
      %v791 = vpack.c.b16 %v656, %v653
      %v792 = vpack.c.b16 %v657, %v654
      %v793 = vpack.c.b16 %v661, %v658
      %v794 = vpack.c.b16 %v662, %v659
      %v795 = vpack.c.b16 %v663, %v660
      %v796 = vpack.c.b16 %v667, %v664
      %v797 = vpack.c.b16 %v668, %v665
      %v798 = vpack.c.b16 %v669, %v666
      %v799 = vpack.c.b16 %v673, %v670
      %v800 = vpack.c.b16 %v674, %v671
      %v801 = vpack.c.b16 %v675, %v672
      %v802 = vpack.c.b16 %v679, %v676
      %v803 = vpack.c.b16 %v680, %v677
      %v804 = vpack.c.b16 %v681, %v678
      %v805 = vpack.c.b16 %v685, %v682
      %v806 = vpack.c.b16 %v686, %v683
      %v807 = vpack.c.b16 %v687, %v684
      %v808 = vpack.c.b16 %v691, %v688
      %v809 = vpack.c.b16 %v692, %v689
      %v810 = vpack.c.b16 %v693, %v690
      %v811 = vpack.c.b16 %v697, %v694
      %v812 = vpack.c.b16 %v698, %v695
      %v813 = vpack.c.b16 %v699, %v696
      %v814 = vpack.c.b16 %v703, %v700
      %v815 = vpack.c.b16 %v704, %v701
      %v816 = vpack.c.b16 %v705, %v702
      %v817 = vpack.c.b16 %v709, %v706
      %v818 = vpack.c.b16 %v710, %v707
      %v819 = vpack.c.b16 %v711, %v708
      %v820 = vpack.c.b16 %v715, %v712
      %v821 = vpack.c.b16 %v716, %v713
      %v822 = vpack.c.b16 %v717, %v714
      %v823 = vpack.c.b16 %v721, %v718
      %v824 = vpack.c.b16 %v722, %v719
      %v825 = vpack.c.b16 %v723, %v720
      %v826 = vpack.c.b16 %v727, %v724
      %v827 = vpack.c.b16 %v728, %v725
      %v828 = vpack.c.b16 %v729, %v726
      %v829 = vpack.c.b16 %v733, %v730
      %v830 = vpack.c.b16 %v734, %v731
      %v831 = vpack.c.b16 %v735, %v732
      %v832 = vpack.c.b16 %v739, %v736
      %v833 = vpack.c.b16 %v740, %v737
      %v834 = vpack.c.b16 %v741, %v738
      %v835 = vpack.c.b16 %v745, %v742
      %v836 = vpack.c.b16 %v746, %v743
      %v837 = vpack.c.b16 %v747, %v744
      %v838 = vpack.c.b16 %v751, %v748
      %v839 = vpack.c.b16 %v752, %v749
      %v840 = vpack.c.b16 %v753, %v750
      %v841 = vpack.c.b16 %v757, %v754
      %v842 = vpack.c.b16 %v758, %v755
      %v843 = vpack.c.b16 %v759, %v756
      %v844 = vpack.c.b16 %v763, %v760
      %v845 = vpack.c.b16 %v764, %v761
      %v846 = vpack.c.b16 %v765, %v762
      %v847 = vpack.c.b16 %v769, %v766
      %v848 = vpack.c.b16 %v770, %v767
      %v849 = vpack.c.b16 %v771, %v768
      %v850 = vpack.c.b16 %v775, %v772
      %v851 = vpack.c.b16 %v776, %v773
      %v852 = vpack.c.b16 %v777, %v774
      %v853 = vpack.c.b16 %v781, %v778
      %v854 = vpack.c.b16 %v782, %v779
      %v855 = vpack.c.b16 %v783, %v780
      %928 = vmatprep.subr.bf16.mxu0 %v785
      %929 = vmatpush1.bf16.msra.mxu0 %v784
      %930 = vmatprep.subr.bf16.mxu0 %v788
      %931 = vmatpush1.bf16.msra.mxu0 %v787
      %932 = vmatprep.subr.bf16.mxu0 %v791
      %933 = vmatpush1.bf16.msra.mxu0 %v790
      %934 = vmatprep.subr.bf16.mxu0 %v794
      %935 = vmatpush1.bf16.msra.mxu0 %v793
      %936 = vmatprep.subr.bf16.mxu0 %v797
      %937 = vmatpush1.bf16.msra.mxu0 %v796
      %938 = vmatprep.subr.bf16.mxu0 %v800
      %939 = vmatpush1.bf16.msra.mxu0 %v799
      %940 = vmatprep.subr.bf16.mxu0 %v803
      %941 = vmatpush1.bf16.msra.mxu0 %v802
      %942 = vmatprep.subr.bf16.mxu0 %v806
      %943 = vmatpush1.bf16.msra.mxu0 %v805
      %944 = vmatprep.subr.bf16.mxu0 %v809
      %945 = vmatpush1.bf16.msra.mxu0 %v808
      %946 = vmatprep.subr.bf16.mxu0 %v812
      %947 = vmatpush1.bf16.msra.mxu0 %v811
      %948 = vmatprep.subr.bf16.mxu0 %v815
      %949 = vmatpush1.bf16.msra.mxu0 %v814
      %950 = vmatprep.subr.bf16.mxu0 %v818
      %951 = vmatpush1.bf16.msra.mxu0 %v817
      %952 = vmatprep.subr.bf16.mxu0 %v821
      %953 = vmatpush1.bf16.msra.mxu0 %v820
      %954 = vmatprep.subr.bf16.mxu0 %v824
      %955 = vmatpush1.bf16.msra.mxu0 %v823
      %956 = vmatprep.subr.bf16.mxu0 %v827
      %957 = vmatpush1.bf16.msra.mxu0 %v826
      %958 = vmatprep.subr.bf16.mxu0 %v830
      %959 = vmatpush1.bf16.msra.mxu0 %v829
      %960 = vmatprep.mubr.bf16.mxu0 %v416
      %961 = vmatmul.mubr.bf16.gmra.mrb[0].mxu0 0
      %v962 = vpop.f32.mrb[0].mxu0
      %v963 = vadd.f32 0.0, %v962
      %v964 = vpop.f32.mrb[0].mxu0
      %v965 = vadd.f32 0.0, %v964
      %v966 = vpop.f32.mrb[0].mxu0
      %v967 = vadd.f32 0.0, %v966
      %v968 = vpop.f32.mrb[0].mxu0
      %v969 = vadd.f32 0.0, %v968
      %970 = vmatprep.mubr.bf16.mxu0 %v417
      %971 = vmatmul.mubr.bf16.gmra.mrb[0].mxu0 %v416
      %v972 = vpop.f32.mrb[0].mxu0
      %v973 = vadd.f32 0.0, %v972
      %v974 = vpop.f32.mrb[0].mxu0
      %v975 = vadd.f32 0.0, %v974
      %v976 = vpop.f32.mrb[0].mxu0
      %v977 = vadd.f32 0.0, %v976
      %v978 = vpop.f32.mrb[0].mxu0
      %v979 = vadd.f32 0.0, %v978
      %980 = vmatprep.mubr.bf16.mxu0 %v418
      %981 = vmatmul.mubr.bf16.gmra.mrb[0].mxu0 %v417
      %v982 = vpop.f32.mrb[0].mxu0
      %v983 = vadd.f32 0.0, %v982
      %v984 = vpop.f32.mrb[0].mxu0
      %v985 = vadd.f32 0.0, %v984
      %v986 = vpop.f32.mrb[0].mxu0
      %v987 = vadd.f32 0.0, %v986
      %v988 = vpop.f32.mrb[0].mxu0
      %v989 = vadd.f32 0.0, %v988
      %990 = vmatprep.mubr.bf16.mxu0 %v419
      %991 = vmatmul.mubr.bf16.gmra.mrb[0].mxu0 %v418
      %v992 = vpop.f32.mrb[0].mxu0
      %v993 = vadd.f32 0.0, %v992
      %v994 = vpop.f32.mrb[0].mxu0
      %v995 = vadd.f32 0.0, %v994
      %v996 = vpop.f32.mrb[0].mxu0
      %v997 = vadd.f32 0.0, %v996
      %v998 = vpop.f32.mrb[0].mxu0
      %v999 = vadd.f32 0.0, %v998
      %1000 = vmatprep.mubr.bf16.mxu0 %v420
      %1001 = vmatmul.mubr.bf16.gmra.mrb[0].mxu0 %v419
      %v1002 = vpop.f32.mrb[0].mxu0
      %v1003 = vadd.f32 0.0, %v1002
      %v1004 = vpop.f32.mrb[0].mxu0
      %v1005 = vadd.f32 0.0, %v1004
      %v1006 = vpop.f32.mrb[0].mxu0
      %v1007 = vadd.f32 0.0, %v1006
      %v1008 = vpop.f32.mrb[0].mxu0
      %v1009 = vadd.f32 0.0, %v1008
      %1010 = vmatprep.mubr.bf16.mxu0 %v421
      %1011 = vmatmul.mubr.bf16.gmra.mrb[0].mxu0 %v420
      %v1012 = vpop.f32.mrb[0].mxu0
      %v1013 = vadd.f32 0.0, %v1012
      %v1014 = vpop.f32.mrb[0].mxu0
      %v1015 = vadd.f32 0.0, %v1014
      %v1016 = vpop.f32.mrb[0].mxu0
      %v1017 = vadd.f32 0.0, %v1016
      %v1018 = vpop.f32.mrb[0].mxu0
      %v1019 = vadd.f32 0.0, %v1018
      %1020 = vmatprep.mubr.bf16.mxu0 %v422
      %1021 = vmatmul.mubr.bf16.gmra.mrb[0].mxu0 %v421
      %v1022 = vpop.f32.mrb[0].mxu0
      %v1023 = vadd.f32 0.0, %v1022
      %v1024 = vpop.f32.mrb[0].mxu0
      %v1025 = vadd.f32 0.0, %v1024
      %v1026 = vpop.f32.mrb[0].mxu0
      %v1027 = vadd.f32 0.0, %v1026
      %v1028 = vpop.f32.mrb[0].mxu0
      %v1029 = vadd.f32 0.0, %v1028
      %1030 = vmatprep.mubr.bf16.mxu0 %v423
      %1031 = vmatmul.mubr.bf16.gmra.mrb[0].mxu0 %v422
      %v1032 = vpop.f32.mrb[0].mxu0
      %v1033 = vadd.f32 0.0, %v1032
      %v1034 = vpop.f32.mrb[0].mxu0
      %v1035 = vadd.f32 0.0, %v1034
      %v1036 = vpop.f32.mrb[0].mxu0
      %v1037 = vadd.f32 0.0, %v1036
      %v1038 = vpop.f32.mrb[0].mxu0
      %v1039 = vadd.f32 0.0, %v1038
      %1040 = vmatprep.mubr.bf16.mxu0 %v424
      %1041 = vmatmul.mubr.bf16.gmra.mrb[0].mxu0 %v423
      %v1042 = vpop.f32.mrb[0].mxu0
      %v1043 = vadd.f32 0.0, %v1042
      %v1044 = vpop.f32.mrb[0].mxu0
      %v1045 = vadd.f32 0.0, %v1044
      %v1046 = vpop.f32.mrb[0].mxu0
      %v1047 = vadd.f32 0.0, %v1046
      %v1048 = vpop.f32.mrb[0].mxu0
      %v1049 = vadd.f32 0.0, %v1048
      %1050 = vmatprep.mubr.bf16.mxu0 %v425
      %1051 = vmatmul.mubr.bf16.gmra.mrb[0].mxu0 %v424
      %v1052 = vpop.f32.mrb[0].mxu0
      %v1053 = vadd.f32 0.0, %v1052
      %v1054 = vpop.f32.mrb[0].mxu0
      %v1055 = vadd.f32 0.0, %v1054
      %v1056 = vpop.f32.mrb[0].mxu0
      %v1057 = vadd.f32 0.0, %v1056
      %v1058 = vpop.f32.mrb[0].mxu0
      %v1059 = vadd.f32 0.0, %v1058
      %1060 = vmatprep.mubr.bf16.mxu0 %v426
      %1061 = vmatmul.mubr.bf16.gmra.mrb[0].mxu0 %v425
      %v1062 = vpop.f32.mrb[0].mxu0
      %v1063 = vadd.f32 0.0, %v1062
      %v1064 = vpop.f32.mrb[0].mxu0
      %v1065 = vadd.f32 0.0, %v1064
      %v1066 = vpop.f32.mrb[0].mxu0
      %v1067 = vadd.f32 0.0, %v1066
      %v1068 = vpop.f32.mrb[0].mxu0
      %v1069 = vadd.f32 0.0, %v1068
      %1070 = vmatprep.mubr.bf16.mxu0 %v427
      %1071 = vmatmul.mubr.bf16.gmra.mrb[0].mxu0 %v426
      %v1072 = vpop.f32.mrb[0].mxu0
      %v1073 = vadd.f32 0.0, %v1072
      %v1074 = vpop.f32.mrb[0].mxu0
      %v1075 = vadd.f32 0.0, %v1074
      %v1076 = vpop.f32.mrb[0].mxu0
      %v1077 = vadd.f32 0.0, %v1076
      %v1078 = vpop.f32.mrb[0].mxu0
      %v1079 = vadd.f32 0.0, %v1078
      %1080 = vmatprep.mubr.bf16.mxu0 %v428
      %1081 = vmatmul.mubr.bf16.gmra.mrb[0].mxu0 %v427
      %v1082 = vpop.f32.mrb[0].mxu0
      %v1083 = vadd.f32 0.0, %v1082
      %v1084 = vpop.f32.mrb[0].mxu0
      %v1085 = vadd.f32 0.0, %v1084
      %v1086 = vpop.f32.mrb[0].mxu0
      %v1087 = vadd.f32 0.0, %v1086
      %v1088 = vpop.f32.mrb[0].mxu0
      %v1089 = vadd.f32 0.0, %v1088
      %1090 = vmatprep.mubr.bf16.mxu0 %v429
      %1091 = vmatmul.mubr.bf16.gmra.mrb[0].mxu0 %v428
      %v1092 = vpop.f32.mrb[0].mxu0
      %v1093 = vadd.f32 0.0, %v1092
      %v1094 = vpop.f32.mrb[0].mxu0
      %v1095 = vadd.f32 0.0, %v1094
      %v1096 = vpop.f32.mrb[0].mxu0
      %v1097 = vadd.f32 0.0, %v1096
      %v1098 = vpop.f32.mrb[0].mxu0
      %v1099 = vadd.f32 0.0, %v1098
      %1100 = vmatprep.mubr.bf16.mxu0 %v430
      %1101 = vmatmul.mubr.bf16.gmra.mrb[0].mxu0 %v429
      %v1102 = vpop.f32.mrb[0].mxu0
      %v1103 = vadd.f32 0.0, %v1102
      %v1104 = vpop.f32.mrb[0].mxu0
      %v1105 = vadd.f32 0.0, %v1104
      %v1106 = vpop.f32.mrb[0].mxu0
      %v1107 = vadd.f32 0.0, %v1106
      %v1108 = vpop.f32.mrb[0].mxu0
      %v1109 = vadd.f32 0.0, %v1108
      %1110 = vmatprep.mubr.bf16.mxu0 %v431
      %1111 = vmatmul.mubr.bf16.gmra.mrb[0].mxu0 %v430
      %v1112 = vpop.f32.mrb[0].mxu0
      %v1113 = vadd.f32 0.0, %v1112
      %v1114 = vpop.f32.mrb[0].mxu0
      %v1115 = vadd.f32 0.0, %v1114
      %v1116 = vpop.f32.mrb[0].mxu0
      %v1117 = vadd.f32 0.0, %v1116
      %v1118 = vpop.f32.mrb[0].mxu0
      %v1119 = vadd.f32 0.0, %v1118
      %1120 = vdwg.mxu0
      %1121 = vmatprep.subr.bf16.mxu0 %v833
      %1122 = vmatpush1.bf16.msra.mxu0 %v832
      %1123 = vmatprep.subr.bf16.mxu0 %v836
      %1124 = vmatpush1.bf16.msra.mxu0 %v835
      %1125 = vmatprep.subr.bf16.mxu0 %v839
      %1126 = vmatpush1.bf16.msra.mxu0 %v838
      %1127 = vmatprep.subr.bf16.mxu0 %v842
      %1128 = vmatpush1.bf16.msra.mxu0 %v841
      %1129 = vmatprep.subr.bf16.mxu0 %v845
      %1130 = vmatpush1.bf16.msra.mxu0 %v844
      %1131 = vmatprep.subr.bf16.mxu0 %v848
      %1132 = vmatpush1.bf16.msra.mxu0 %v847
      %1133 = vmatprep.subr.bf16.mxu0 %v851
      %1134 = vmatpush1.bf16.msra.mxu0 %v850
      %1135 = vmatprep.subr.bf16.mxu0 %v854
      %1136 = vmatpush1.bf16.msra.mxu0 %v853
      %1137 = vmatprep.subr.bf16.mxu0 0
      %1138 = vmatpush1.bf16.msra.mxu0 0
      %1139 = vmatprep.subr.bf16.mxu0 0
      %1140 = vmatpush1.bf16.msra.mxu0 0
      %1141 = vmatprep.subr.bf16.mxu0 0
      %1142 = vmatpush1.bf16.msra.mxu0 0
      %1143 = vmatprep.subr.bf16.mxu0 0
      %1144 = vmatpush1.bf16.msra.mxu0 0
      %1145 = vmatprep.subr.bf16.mxu0 0
      %1146 = vmatpush1.bf16.msra.mxu0 0
      %1147 = vmatprep.subr.bf16.mxu0 0
      %1148 = vmatpush1.bf16.msra.mxu0 0
      %1149 = vmatprep.subr.bf16.mxu0 0
      %1150 = vmatpush1.bf16.msra.mxu0 0
      %1151 = vmatprep.subr.bf16.mxu0 0
      %1152 = vmatpush1.bf16.msra.mxu0 0
      %1153 = vmatprep.mubr.bf16.mxu0 0
      %1154 = vmatmul.mubr.bf16.gmra.mrb[0].mxu0 %v417
      %v1155 = vpop.f32.mrb[0].mxu0
      %v1156 = vadd.f32 %v963, %v1155
      %v1157 = vpop.f32.mrb[0].mxu0
      %v1158 = vadd.f32 %v965, %v1157
      %v1159 = vpop.f32.mrb[0].mxu0
      %v1160 = vadd.f32 %v967, %v1159
      %v1161 = vpop.f32.mrb[0].mxu0
      %v1162 = vadd.f32 %v969, %v1161
      %1163 = vmatprep.mubr.bf16.mxu0 0
      %1164 = vmatmul.mubr.bf16.gmra.mrb[0].mxu0 %v418
      %v1165 = vpop.f32.mrb[0].mxu0
      %v1166 = vadd.f32 %v973, %v1165
      %v1167 = vpop.f32.mrb[0].mxu0
      %v1168 = vadd.f32 %v975, %v1167
      %v1169 = vpop.f32.mrb[0].mxu0
      %v1170 = vadd.f32 %v977, %v1169
      %v1171 = vpop.f32.mrb[0].mxu0
      %v1172 = vadd.f32 %v979, %v1171
      %1173 = vmatprep.mubr.bf16.mxu0 0
      %1174 = vmatmul.mubr.bf16.gmra.mrb[0].mxu0 %v419
      %v1175 = vpop.f32.mrb[0].mxu0
      %v1176 = vadd.f32 %v983, %v1175
      %v1177 = vpop.f32.mrb[0].mxu0
      %v1178 = vadd.f32 %v985, %v1177
      %v1179 = vpop.f32.mrb[0].mxu0
      %v1180 = vadd.f32 %v987, %v1179
      %v1181 = vpop.f32.mrb[0].mxu0
      %v1182 = vadd.f32 %v989, %v1181
      %1183 = vmatprep.mubr.bf16.mxu0 0
      %1184 = vmatmul.mubr.bf16.gmra.mrb[0].mxu0 %v420
      %v1185 = vpop.f32.mrb[0].mxu0
      %v1186 = vadd.f32 %v993, %v1185
      %v1187 = vpop.f32.mrb[0].mxu0
      %v1188 = vadd.f32 %v995, %v1187
      %v1189 = vpop.f32.mrb[0].mxu0
      %v1190 = vadd.f32 %v997, %v1189
      %v1191 = vpop.f32.mrb[0].mxu0
      %v1192 = vadd.f32 %v999, %v1191
      %1193 = vmatprep.mubr.bf16.mxu0 0
      %1194 = vmatmul.mubr.bf16.gmra.mrb[0].mxu0 %v421
      %v1195 = vpop.f32.mrb[0].mxu0
      %v1196 = vadd.f32 %v1003, %v1195
      %v1197 = vpop.f32.mrb[0].mxu0
      %v1198 = vadd.f32 %v1005, %v1197
      %v1199 = vpop.f32.mrb[0].mxu0
      %v1200 = vadd.f32 %v1007, %v1199
      %v1201 = vpop.f32.mrb[0].mxu0
      %v1202 = vadd.f32 %v1009, %v1201
      %1203 = vmatprep.mubr.bf16.mxu0 0
      %1204 = vmatmul.mubr.bf16.gmra.mrb[0].mxu0 %v422
      %v1205 = vpop.f32.mrb[0].mxu0
      %v1206 = vadd.f32 %v1013, %v1205
      %v1207 = vpop.f32.mrb[0].mxu0
      %v1208 = vadd.f32 %v1015, %v1207
      %v1209 = vpop.f32.mrb[0].mxu0
      %v1210 = vadd.f32 %v1017, %v1209
      %v1211 = vpop.f32.mrb[0].mxu0
      %v1212 = vadd.f32 %v1019, %v1211
      %1213 = vmatprep.mubr.bf16.mxu0 0
      %1214 = vmatmul.mubr.bf16.gmra.mrb[0].mxu0 %v423
      %v1215 = vpop.f32.mrb[0].mxu0
      %v1216 = vadd.f32 %v1023, %v1215
      %v1217 = vpop.f32.mrb[0].mxu0
      %v1218 = vadd.f32 %v1025, %v1217
      %v1219 = vpop.f32.mrb[0].mxu0
      %v1220 = vadd.f32 %v1027, %v1219
      %v1221 = vpop.f32.mrb[0].mxu0
      %v1222 = vadd.f32 %v1029, %v1221
      %1223 = vmatprep.mubr.bf16.mxu0 0
      %1224 = vmatmul.mubr.bf16.gmra.mrb[0].mxu0 %v424
      %v1225 = vpop.f32.mrb[0].mxu0
      %v1226 = vadd.f32 %v1033, %v1225
      %v1227 = vpop.f32.mrb[0].mxu0
      %v1228 = vadd.f32 %v1035, %v1227
      %v1229 = vpop.f32.mrb[0].mxu0
      %v1230 = vadd.f32 %v1037, %v1229
      %v1231 = vpop.f32.mrb[0].mxu0
      %v1232 = vadd.f32 %v1039, %v1231
      %1233 = vmatprep.mubr.bf16.mxu0 0
      %1234 = vmatmul.mubr.bf16.gmra.mrb[0].mxu0 %v425
      %v1235 = vpop.f32.mrb[0].mxu0
      %v1236 = vadd.f32 %v1043, %v1235
      %v1237 = vpop.f32.mrb[0].mxu0
      %v1238 = vadd.f32 %v1045, %v1237
      %v1239 = vpop.f32.mrb[0].mxu0
      %v1240 = vadd.f32 %v1047, %v1239
      %v1241 = vpop.f32.mrb[0].mxu0
      %v1242 = vadd.f32 %v1049, %v1241
      %1243 = vmatprep.mubr.bf16.mxu0 0
      %1244 = vmatmul.mubr.bf16.gmra.mrb[0].mxu0 %v426
      %v1245 = vpop.f32.mrb[0].mxu0
      %v1246 = vadd.f32 %v1053, %v1245
      %v1247 = vpop.f32.mrb[0].mxu0
      %v1248 = vadd.f32 %v1055, %v1247
      %v1249 = vpop.f32.mrb[0].mxu0
      %v1250 = vadd.f32 %v1057, %v1249
      %v1251 = vpop.f32.mrb[0].mxu0
      %v1252 = vadd.f32 %v1059, %v1251
      %1253 = vmatprep.mubr.bf16.mxu0 0
      %1254 = vmatmul.mubr.bf16.gmra.mrb[0].mxu0 %v427
      %v1255 = vpop.f32.mrb[0].mxu0
      %v1256 = vadd.f32 %v1063, %v1255
      %v1257 = vpop.f32.mrb[0].mxu0
      %v1258 = vadd.f32 %v1065, %v1257
      %v1259 = vpop.f32.mrb[0].mxu0
      %v1260 = vadd.f32 %v1067, %v1259
      %v1261 = vpop.f32.mrb[0].mxu0
      %v1262 = vadd.f32 %v1069, %v1261
      %1263 = vmatprep.mubr.bf16.mxu0 0
      %1264 = vmatmul.mubr.bf16.gmra.mrb[0].mxu0 %v428
      %v1265 = vpop.f32.mrb[0].mxu0
      %v1266 = vadd.f32 %v1073, %v1265
      %v1267 = vpop.f32.mrb[0].mxu0
      %v1268 = vadd.f32 %v1075, %v1267
      %v1269 = vpop.f32.mrb[0].mxu0
      %v1270 = vadd.f32 %v1077, %v1269
      %v1271 = vpop.f32.mrb[0].mxu0
      %v1272 = vadd.f32 %v1079, %v1271
      %1273 = vmatprep.mubr.bf16.mxu0 0
      %1274 = vmatmul.mubr.bf16.gmra.mrb[0].mxu0 %v429
      %v1275 = vpop.f32.mrb[0].mxu0
      %v1276 = vadd.f32 %v1083, %v1275
      %v1277 = vpop.f32.mrb[0].mxu0
      %v1278 = vadd.f32 %v1085, %v1277
      %v1279 = vpop.f32.mrb[0].mxu0
      %v1280 = vadd.f32 %v1087, %v1279
      %v1281 = vpop.f32.mrb[0].mxu0
      %v1282 = vadd.f32 %v1089, %v1281
      %1283 = vmatprep.mubr.bf16.mxu0 0
      %1284 = vmatmul.mubr.bf16.gmra.mrb[0].mxu0 %v430
      %v1285 = vpop.f32.mrb[0].mxu0
      %v1286 = vadd.f32 %v1093, %v1285
      %v1287 = vpop.f32.mrb[0].mxu0
      %v1288 = vadd.f32 %v1095, %v1287
      %v1289 = vpop.f32.mrb[0].mxu0
      %v1290 = vadd.f32 %v1097, %v1289
      %v1291 = vpop.f32.mrb[0].mxu0
      %v1292 = vadd.f32 %v1099, %v1291
      %1293 = vmatprep.mubr.bf16.mxu0 0
      %1294 = vmatmul.mubr.bf16.gmra.mrb[0].mxu0 %v431
      %v1295 = vpop.f32.mrb[0].mxu0
      %v1296 = vadd.f32 %v1103, %v1295
      %v1297 = vpop.f32.mrb[0].mxu0
      %v1298 = vadd.f32 %v1105, %v1297
      %v1299 = vpop.f32.mrb[0].mxu0
      %v1300 = vadd.f32 %v1107, %v1299
      %v1301 = vpop.f32.mrb[0].mxu0
      %v1302 = vadd.f32 %v1109, %v1301
      %1303 = vmatprep.mubr.bf16.mxu0 0
      %1304 = vmatmul.mubr.bf16.gmra.mrb[0].mxu0 0
      %v1305 = vpop.f32.mrb[0].mxu0
      %v1306 = vadd.f32 %v1113, %v1305
      %v1307 = vpop.f32.mrb[0].mxu0
      %v1308 = vadd.f32 %v1115, %v1307
      %v1309 = vpop.f32.mrb[0].mxu0
      %v1310 = vadd.f32 %v1117, %v1309
      %v1311 = vpop.f32.mrb[0].mxu0
      %v1312 = vadd.f32 %v1119, %v1311
      %1313 = vdwg.mxu0
      %1314 = vmatprep.subr.bf16.mxu0 0
      %1315 = vmatpush1.bf16.msra.mxu0 %v786
      %1316 = vmatprep.subr.bf16.mxu0 0
      %1317 = vmatpush1.bf16.msra.mxu0 %v789
      %1318 = vmatprep.subr.bf16.mxu0 0
      %1319 = vmatpush1.bf16.msra.mxu0 %v792
      %1320 = vmatprep.subr.bf16.mxu0 0
      %1321 = vmatpush1.bf16.msra.mxu0 %v795
      %1322 = vmatprep.subr.bf16.mxu0 0
      %1323 = vmatpush1.bf16.msra.mxu0 %v798
      %1324 = vmatprep.subr.bf16.mxu0 0
      %1325 = vmatpush1.bf16.msra.mxu0 %v801
      %1326 = vmatprep.subr.bf16.mxu0 0
      %1327 = vmatpush1.bf16.msra.mxu0 %v804
      %1328 = vmatprep.subr.bf16.mxu0 0
      %1329 = vmatpush1.bf16.msra.mxu0 %v807
      %1330 = vmatprep.subr.bf16.mxu0 0
      %1331 = vmatpush1.bf16.msra.mxu0 %v810
      %1332 = vmatprep.subr.bf16.mxu0 0
      %1333 = vmatpush1.bf16.msra.mxu0 %v813
      %1334 = vmatprep.subr.bf16.mxu0 0
      %1335 = vmatpush1.bf16.msra.mxu0 %v816
      %1336 = vmatprep.subr.bf16.mxu0 0
      %1337 = vmatpush1.bf16.msra.mxu0 %v819
      %1338 = vmatprep.subr.bf16.mxu0 0
      %1339 = vmatpush1.bf16.msra.mxu0 %v822
      %1340 = vmatprep.subr.bf16.mxu0 0
      %1341 = vmatpush1.bf16.msra.mxu0 %v825
      %1342 = vmatprep.subr.bf16.mxu0 0
      %1343 = vmatpush1.bf16.msra.mxu0 %v828
      %1344 = vmatprep.subr.bf16.mxu0 0
      %1345 = vmatpush1.bf16.msra.mxu0 %v831
      %1346 = vmatprep.mubr.bf16.mxu0 %v416
      %1347 = vmatmul.mubr.bf16.gmra.mrb[0].mxu0 0
      %v1348 = vpop.f32.mrb[0].mxu0
      %v1349 = vadd.f32 0.0, %v1348
      %v1350 = vpop.f32.mrb[0].mxu0
      %v1351 = vpop.f32.mrb[0].mxu0
      %v1352 = vadd.f32 0.0, %v1351
      %v1353 = vpop.f32.mrb[0].mxu0
      %1354 = vmatprep.mubr.bf16.mxu0 %v417
      %1355 = vmatmul.mubr.bf16.gmra.mrb[0].mxu0 %v416
      %v1356 = vpop.f32.mrb[0].mxu0
      %v1357 = vadd.f32 0.0, %v1356
      %v1358 = vpop.f32.mrb[0].mxu0
      %v1359 = vpop.f32.mrb[0].mxu0
      %v1360 = vadd.f32 0.0, %v1359
      %v1361 = vpop.f32.mrb[0].mxu0
      %1362 = vmatprep.mubr.bf16.mxu0 %v418
      %1363 = vmatmul.mubr.bf16.gmra.mrb[0].mxu0 %v417
      %v1364 = vpop.f32.mrb[0].mxu0
      %v1365 = vadd.f32 0.0, %v1364
      %v1366 = vpop.f32.mrb[0].mxu0
      %v1367 = vpop.f32.mrb[0].mxu0
      %v1368 = vadd.f32 0.0, %v1367
      %v1369 = vpop.f32.mrb[0].mxu0
      %1370 = vmatprep.mubr.bf16.mxu0 %v419
      %1371 = vmatmul.mubr.bf16.gmra.mrb[0].mxu0 %v418
      %v1372 = vpop.f32.mrb[0].mxu0
      %v1373 = vadd.f32 0.0, %v1372
      %v1374 = vpop.f32.mrb[0].mxu0
      %v1375 = vpop.f32.mrb[0].mxu0
      %v1376 = vadd.f32 0.0, %v1375
      %v1377 = vpop.f32.mrb[0].mxu0
      %1378 = vmatprep.mubr.bf16.mxu0 %v420
      %1379 = vmatmul.mubr.bf16.gmra.mrb[0].mxu0 %v419
      %v1380 = vpop.f32.mrb[0].mxu0
      %v1381 = vadd.f32 0.0, %v1380
      %v1382 = vpop.f32.mrb[0].mxu0
      %v1383 = vpop.f32.mrb[0].mxu0
      %v1384 = vadd.f32 0.0, %v1383
      %v1385 = vpop.f32.mrb[0].mxu0
      %1386 = vmatprep.mubr.bf16.mxu0 %v421
      %1387 = vmatmul.mubr.bf16.gmra.mrb[0].mxu0 %v420
      %v1388 = vpop.f32.mrb[0].mxu0
      %v1389 = vadd.f32 0.0, %v1388
      %v1390 = vpop.f32.mrb[0].mxu0
      %v1391 = vpop.f32.mrb[0].mxu0
      %v1392 = vadd.f32 0.0, %v1391
      %v1393 = vpop.f32.mrb[0].mxu0
      %1394 = vmatprep.mubr.bf16.mxu0 %v422
      %1395 = vmatmul.mubr.bf16.gmra.mrb[0].mxu0 %v421
      %v1396 = vpop.f32.mrb[0].mxu0
      %v1397 = vadd.f32 0.0, %v1396
      %v1398 = vpop.f32.mrb[0].mxu0
      %v1399 = vpop.f32.mrb[0].mxu0
      %v1400 = vadd.f32 0.0, %v1399
      %v1401 = vpop.f32.mrb[0].mxu0
      %1402 = vmatprep.mubr.bf16.mxu0 %v423
      %1403 = vmatmul.mubr.bf16.gmra.mrb[0].mxu0 %v422
      %v1404 = vpop.f32.mrb[0].mxu0
      %v1405 = vadd.f32 0.0, %v1404
      %v1406 = vpop.f32.mrb[0].mxu0
      %v1407 = vpop.f32.mrb[0].mxu0
      %v1408 = vadd.f32 0.0, %v1407
      %v1409 = vpop.f32.mrb[0].mxu0
      %1410 = vmatprep.mubr.bf16.mxu0 %v424
      %1411 = vmatmul.mubr.bf16.gmra.mrb[0].mxu0 %v423
      %v1412 = vpop.f32.mrb[0].mxu0
      %v1413 = vadd.f32 0.0, %v1412
      %v1414 = vpop.f32.mrb[0].mxu0
      %v1415 = vpop.f32.mrb[0].mxu0
      %v1416 = vadd.f32 0.0, %v1415
      %v1417 = vpop.f32.mrb[0].mxu0
      %1418 = vmatprep.mubr.bf16.mxu0 %v425
      %1419 = vmatmul.mubr.bf16.gmra.mrb[0].mxu0 %v424
      %v1420 = vpop.f32.mrb[0].mxu0
      %v1421 = vadd.f32 0.0, %v1420
      %v1422 = vpop.f32.mrb[0].mxu0
      %v1423 = vpop.f32.mrb[0].mxu0
      %v1424 = vadd.f32 0.0, %v1423
      %v1425 = vpop.f32.mrb[0].mxu0
      %1426 = vmatprep.mubr.bf16.mxu0 %v426
      %1427 = vmatmul.mubr.bf16.gmra.mrb[0].mxu0 %v425
      %v1428 = vpop.f32.mrb[0].mxu0
      %v1429 = vadd.f32 0.0, %v1428
      %v1430 = vpop.f32.mrb[0].mxu0
      %v1431 = vpop.f32.mrb[0].mxu0
      %v1432 = vadd.f32 0.0, %v1431
      %v1433 = vpop.f32.mrb[0].mxu0
      %1434 = vmatprep.mubr.bf16.mxu0 %v427
      %1435 = vmatmul.mubr.bf16.gmra.mrb[0].mxu0 %v426
      %v1436 = vpop.f32.mrb[0].mxu0
      %v1437 = vadd.f32 0.0, %v1436
      %v1438 = vpop.f32.mrb[0].mxu0
      %v1439 = vpop.f32.mrb[0].mxu0
      %v1440 = vadd.f32 0.0, %v1439
      %v1441 = vpop.f32.mrb[0].mxu0
      %1442 = vmatprep.mubr.bf16.mxu0 %v428
      %1443 = vmatmul.mubr.bf16.gmra.mrb[0].mxu0 %v427
      %v1444 = vpop.f32.mrb[0].mxu0
      %v1445 = vadd.f32 0.0, %v1444
      %v1446 = vpop.f32.mrb[0].mxu0
      %v1447 = vpop.f32.mrb[0].mxu0
      %v1448 = vadd.f32 0.0, %v1447
      %v1449 = vpop.f32.mrb[0].mxu0
      %1450 = vmatprep.mubr.bf16.mxu0 %v429
      %1451 = vmatmul.mubr.bf16.gmra.mrb[0].mxu0 %v428
      %v1452 = vpop.f32.mrb[0].mxu0
      %v1453 = vadd.f32 0.0, %v1452
      %v1454 = vpop.f32.mrb[0].mxu0
      %v1455 = vpop.f32.mrb[0].mxu0
      %v1456 = vadd.f32 0.0, %v1455
      %v1457 = vpop.f32.mrb[0].mxu0
      %1458 = vmatprep.mubr.bf16.mxu0 %v430
      %1459 = vmatmul.mubr.bf16.gmra.mrb[0].mxu0 %v429
      %v1460 = vpop.f32.mrb[0].mxu0
      %v1461 = vadd.f32 0.0, %v1460
      %v1462 = vpop.f32.mrb[0].mxu0
      %v1463 = vpop.f32.mrb[0].mxu0
      %v1464 = vadd.f32 0.0, %v1463
      %v1465 = vpop.f32.mrb[0].mxu0
      %1466 = vmatprep.mubr.bf16.mxu0 %v431
      %1467 = vmatmul.mubr.bf16.gmra.mrb[0].mxu0 %v430
      %v1468 = vpop.f32.mrb[0].mxu0
      %v1469 = vadd.f32 0.0, %v1468
      %v1470 = vpop.f32.mrb[0].mxu0
      %v1471 = vpop.f32.mrb[0].mxu0
      %v1472 = vadd.f32 0.0, %v1471
      %v1473 = vpop.f32.mrb[0].mxu0
      %1474 = vdwg.mxu0
      %1475 = vmatprep.subr.bf16.mxu0 0
      %1476 = vmatpush1.bf16.msra.mxu0 %v834
      %1477 = vmatprep.subr.bf16.mxu0 0
      %1478 = vmatpush1.bf16.msra.mxu0 %v837
      %1479 = vmatprep.subr.bf16.mxu0 0
      %1480 = vmatpush1.bf16.msra.mxu0 %v840
      %1481 = vmatprep.subr.bf16.mxu0 0
      %1482 = vmatpush1.bf16.msra.mxu0 %v843
      %1483 = vmatprep.subr.bf16.mxu0 0
      %1484 = vmatpush1.bf16.msra.mxu0 %v846
      %1485 = vmatprep.subr.bf16.mxu0 0
      %1486 = vmatpush1.bf16.msra.mxu0 %v849
      %1487 = vmatprep.subr.bf16.mxu0 0
      %1488 = vmatpush1.bf16.msra.mxu0 %v852
      %1489 = vmatprep.subr.bf16.mxu0 0
      %1490 = vmatpush1.bf16.msra.mxu0 %v855
      %1491 = vmatprep.subr.bf16.mxu0 0
      %1492 = vmatpush1.bf16.msra.mxu0 0
      %1493 = vmatprep.subr.bf16.mxu0 0
      %1494 = vmatpush1.bf16.msra.mxu0 0
      %1495 = vmatprep.subr.bf16.mxu0 0
      %1496 = vmatpush1.bf16.msra.mxu0 0
      %1497 = vmatprep.subr.bf16.mxu0 0
      %1498 = vmatpush1.bf16.msra.mxu0 0
      %1499 = vmatprep.subr.bf16.mxu0 0
      %1500 = vmatpush1.bf16.msra.mxu0 0
      %1501 = vmatprep.subr.bf16.mxu0 0
      %1502 = vmatpush1.bf16.msra.mxu0 0
      %1503 = vmatprep.subr.bf16.mxu0 0
      %1504 = vmatpush1.bf16.msra.mxu0 0
      %1505 = vmatprep.subr.bf16.mxu0 0
      %1506 = vmatpush1.bf16.msra.mxu0 0
      %1507 = vmatprep.mubr.bf16.mxu0 0
      %1508 = vmatmul.mubr.bf16.gmra.mrb[0].mxu0 %v417
      %v1509 = vpop.f32.mrb[0].mxu0
      %v1510 = vadd.f32 %v1349, %v1509
      %v1511 = vpop.f32.mrb[0].mxu0
      %v1512 = vpop.f32.mrb[0].mxu0
      %v1513 = vadd.f32 %v1352, %v1512
      %v1514 = vpop.f32.mrb[0].mxu0
      %1515 = vmatprep.mubr.bf16.mxu0 0
      %1516 = vmatmul.mubr.bf16.gmra.mrb[0].mxu0 %v418
      %v1517 = vpop.f32.mrb[0].mxu0
      %v1518 = vadd.f32 %v1357, %v1517
      %v1519 = vpop.f32.mrb[0].mxu0
      %v1520 = vpop.f32.mrb[0].mxu0
      %v1521 = vadd.f32 %v1360, %v1520
      %v1522 = vpop.f32.mrb[0].mxu0
      %1523 = vmatprep.mubr.bf16.mxu0 0
      %1524 = vmatmul.mubr.bf16.gmra.mrb[0].mxu0 %v419
      %v1525 = vpop.f32.mrb[0].mxu0
      %v1526 = vadd.f32 %v1365, %v1525
      %v1527 = vpop.f32.mrb[0].mxu0
      %v1528 = vpop.f32.mrb[0].mxu0
      %v1529 = vadd.f32 %v1368, %v1528
      %v1530 = vpop.f32.mrb[0].mxu0
      %1531 = vmatprep.mubr.bf16.mxu0 0
      %1532 = vmatmul.mubr.bf16.gmra.mrb[0].mxu0 %v420
      %v1533 = vpop.f32.mrb[0].mxu0
      %v1534 = vadd.f32 %v1373, %v1533
      %v1535 = vpop.f32.mrb[0].mxu0
      %v1536 = vpop.f32.mrb[0].mxu0
      %v1537 = vadd.f32 %v1376, %v1536
      %v1538 = vpop.f32.mrb[0].mxu0
      %1539 = vmatprep.mubr.bf16.mxu0 0
      %1540 = vmatmul.mubr.bf16.gmra.mrb[0].mxu0 %v421
      %v1541 = vpop.f32.mrb[0].mxu0
      %v1542 = vadd.f32 %v1381, %v1541
      %v1543 = vpop.f32.mrb[0].mxu0
      %v1544 = vpop.f32.mrb[0].mxu0
      %v1545 = vadd.f32 %v1384, %v1544
      %v1546 = vpop.f32.mrb[0].mxu0
      %1547 = vmatprep.mubr.bf16.mxu0 0
      %1548 = vmatmul.mubr.bf16.gmra.mrb[0].mxu0 %v422
      %v1549 = vpop.f32.mrb[0].mxu0
      %v1550 = vadd.f32 %v1389, %v1549
      %v1551 = vpop.f32.mrb[0].mxu0
      %v1552 = vpop.f32.mrb[0].mxu0
      %v1553 = vadd.f32 %v1392, %v1552
      %v1554 = vpop.f32.mrb[0].mxu0
      %1555 = vmatprep.mubr.bf16.mxu0 0
      %1556 = vmatmul.mubr.bf16.gmra.mrb[0].mxu0 %v423
      %v1557 = vpop.f32.mrb[0].mxu0
      %v1558 = vadd.f32 %v1397, %v1557
      %v1559 = vpop.f32.mrb[0].mxu0
      %v1560 = vpop.f32.mrb[0].mxu0
      %v1561 = vadd.f32 %v1400, %v1560
      %v1562 = vpop.f32.mrb[0].mxu0
      %1563 = vmatprep.mubr.bf16.mxu0 0
      %1564 = vmatmul.mubr.bf16.gmra.mrb[0].mxu0 %v424
      %v1565 = vpop.f32.mrb[0].mxu0
      %v1566 = vadd.f32 %v1405, %v1565
      %v1567 = vpop.f32.mrb[0].mxu0
      %v1568 = vpop.f32.mrb[0].mxu0
      %v1569 = vadd.f32 %v1408, %v1568
      %v1570 = vpop.f32.mrb[0].mxu0
      %1571 = vmatprep.mubr.bf16.mxu0 0
      %1572 = vmatmul.mubr.bf16.gmra.mrb[0].mxu0 %v425
      %v1573 = vpop.f32.mrb[0].mxu0
      %v1574 = vadd.f32 %v1413, %v1573
      %v1575 = vpop.f32.mrb[0].mxu0
      %v1576 = vpop.f32.mrb[0].mxu0
      %v1577 = vadd.f32 %v1416, %v1576
      %v1578 = vpop.f32.mrb[0].mxu0
      %1579 = vmatprep.mubr.bf16.mxu0 0
      %1580 = vmatmul.mubr.bf16.gmra.mrb[0].mxu0 %v426
      %v1581 = vpop.f32.mrb[0].mxu0
      %v1582 = vadd.f32 %v1421, %v1581
      %v1583 = vpop.f32.mrb[0].mxu0
      %v1584 = vpop.f32.mrb[0].mxu0
      %v1585 = vadd.f32 %v1424, %v1584
      %v1586 = vpop.f32.mrb[0].mxu0
      %1587 = vmatprep.mubr.bf16.mxu0 0
      %1588 = vmatmul.mubr.bf16.gmra.mrb[0].mxu0 %v427
      %v1589 = vpop.f32.mrb[0].mxu0
      %v1590 = vadd.f32 %v1429, %v1589
      %v1591 = vpop.f32.mrb[0].mxu0
      %v1592 = vpop.f32.mrb[0].mxu0
      %v1593 = vadd.f32 %v1432, %v1592
      %v1594 = vpop.f32.mrb[0].mxu0
      %1595 = vmatprep.mubr.bf16.mxu0 0
      %1596 = vmatmul.mubr.bf16.gmra.mrb[0].mxu0 %v428
      %v1597 = vpop.f32.mrb[0].mxu0
      %v1598 = vadd.f32 %v1437, %v1597
      %v1599 = vpop.f32.mrb[0].mxu0
      %v1600 = vpop.f32.mrb[0].mxu0
      %v1601 = vadd.f32 %v1440, %v1600
      %v1602 = vpop.f32.mrb[0].mxu0
      %1603 = vmatprep.mubr.bf16.mxu0 0
      %1604 = vmatmul.mubr.bf16.gmra.mrb[0].mxu0 %v429
      %v1605 = vpop.f32.mrb[0].mxu0
      %v1606 = vadd.f32 %v1445, %v1605
      %v1607 = vpop.f32.mrb[0].mxu0
      %v1608 = vpop.f32.mrb[0].mxu0
      %v1609 = vadd.f32 %v1448, %v1608
      %v1610 = vpop.f32.mrb[0].mxu0
      %1611 = vmatprep.mubr.bf16.mxu0 0
      %1612 = vmatmul.mubr.bf16.gmra.mrb[0].mxu0 %v430
      %v1613 = vpop.f32.mrb[0].mxu0
      %v1614 = vadd.f32 %v1453, %v1613
      %v1615 = vpop.f32.mrb[0].mxu0
      %v1616 = vpop.f32.mrb[0].mxu0
      %v1617 = vadd.f32 %v1456, %v1616
      %v1618 = vpop.f32.mrb[0].mxu0
      %1619 = vmatprep.mubr.bf16.mxu0 0
      %1620 = vmatmul.mubr.bf16.gmra.mrb[0].mxu0 %v431
      %v1621 = vpop.f32.mrb[0].mxu0
      %v1622 = vadd.f32 %v1461, %v1621
      %v1623 = vpop.f32.mrb[0].mxu0
      %v1624 = vpop.f32.mrb[0].mxu0
      %v1625 = vadd.f32 %v1464, %v1624
      %v1626 = vpop.f32.mrb[0].mxu0
      %1627 = vmatprep.mubr.bf16.mxu0 0
      %1628 = vmatmul.mubr.bf16.gmra.mrb[0].mxu0 0
      %v1629 = vpop.f32.mrb[0].mxu0
      %v1630 = vadd.f32 %v1469, %v1629
      %v1631 = vpop.f32.mrb[0].mxu0
      %v1632 = vpop.f32.mrb[0].mxu0
      %v1633 = vadd.f32 %v1472, %v1632
      %v1634 = vpop.f32.mrb[0].mxu0
      %1635 = vdwg.mxu0
      %vm1668 = vcmask 1040384
      %v1669 = vrot.slane %v1156, 7
      %v1670 = vrot.slane %v1160, 7
      %v1671 = vsel %vm1668, %v1669, %v1670
      %v1672 = vrot.slane %v1166, 7
      %v1673 = vrot.slane %v1170, 7
      %v1674 = vsel %vm1668, %v1672, %v1673
      %v1675 = vrot.slane %v1176, 7
      %v1676 = vrot.slane %v1180, 7
      %v1677 = vsel %vm1668, %v1675, %v1676
      %v1678 = vrot.slane %v1186, 7
      %v1679 = vrot.slane %v1190, 7
      %v1680 = vsel %vm1668, %v1678, %v1679
      %v1681 = vrot.slane %v1196, 7
      %v1682 = vrot.slane %v1200, 7
      %v1683 = vsel %vm1668, %v1681, %v1682
      %v1684 = vrot.slane %v1206, 7
      %v1685 = vrot.slane %v1210, 7
      %v1686 = vsel %vm1668, %v1684, %v1685
      %v1687 = vrot.slane %v1216, 7
      %v1688 = vrot.slane %v1220, 7
      %v1689 = vsel %vm1668, %v1687, %v1688
      %v1690 = vrot.slane %v1226, 7
      %v1691 = vrot.slane %v1230, 7
      %v1692 = vsel %vm1668, %v1690, %v1691
      %v1693 = vrot.slane %v1236, 7
      %v1694 = vrot.slane %v1240, 7
      %v1695 = vsel %vm1668, %v1693, %v1694
      %v1696 = vrot.slane %v1246, 7
      %v1697 = vrot.slane %v1250, 7
      %v1698 = vsel %vm1668, %v1696, %v1697
      %v1699 = vrot.slane %v1256, 7
      %v1700 = vrot.slane %v1260, 7
      %v1701 = vsel %vm1668, %v1699, %v1700
      %v1702 = vrot.slane %v1266, 7
      %v1703 = vrot.slane %v1270, 7
      %v1704 = vsel %vm1668, %v1702, %v1703
      %v1705 = vrot.slane %v1276, 7
      %v1706 = vrot.slane %v1280, 7
      %v1707 = vsel %vm1668, %v1705, %v1706
      %v1708 = vrot.slane %v1286, 7
      %v1709 = vrot.slane %v1290, 7
      %v1710 = vsel %vm1668, %v1708, %v1709
      %v1711 = vrot.slane %v1296, 7
      %v1712 = vrot.slane %v1300, 7
      %v1713 = vsel %vm1668, %v1711, %v1712
      %v1714 = vrot.slane %v1306, 7
      %v1715 = vrot.slane %v1310, 7
      %v1716 = vsel %vm1668, %v1714, %v1715
      %v1749 = vsel %vm1668, 0.0, %v1669
      %v1750 = vsel %vm1668, 0.0, %v1672
      %v1751 = vsel %vm1668, 0.0, %v1675
      %v1752 = vsel %vm1668, 0.0, %v1678
      %v1753 = vsel %vm1668, 0.0, %v1681
      %v1754 = vsel %vm1668, 0.0, %v1684
      %v1755 = vsel %vm1668, 0.0, %v1687
      %v1756 = vsel %vm1668, 0.0, %v1690
      %v1757 = vsel %vm1668, 0.0, %v1693
      %v1758 = vsel %vm1668, 0.0, %v1696
      %v1759 = vsel %vm1668, 0.0, %v1699
      %v1760 = vsel %vm1668, 0.0, %v1702
      %v1761 = vsel %vm1668, 0.0, %v1705
      %v1762 = vsel %vm1668, 0.0, %v1708
      %v1763 = vsel %vm1668, 0.0, %v1711
      %v1764 = vsel %vm1668, 0.0, %v1714
      %vm1797 = vcmask 1046528
      %v1798 = vrot.slane %v1510, 1
      %v1799 = vrot.slane %v1513, 1
      %v1800 = vsel %vm1797, %v1798, %v1799
      %v1801 = vrot.slane %v1518, 1
      %v1802 = vrot.slane %v1521, 1
      %v1803 = vsel %vm1797, %v1801, %v1802
      %v1804 = vrot.slane %v1526, 1
      %v1805 = vrot.slane %v1529, 1
      %v1806 = vsel %vm1797, %v1804, %v1805
      %v1807 = vrot.slane %v1534, 1
      %v1808 = vrot.slane %v1537, 1
      %v1809 = vsel %vm1797, %v1807, %v1808
      %v1810 = vrot.slane %v1542, 1
      %v1811 = vrot.slane %v1545, 1
      %v1812 = vsel %vm1797, %v1810, %v1811
      %v1813 = vrot.slane %v1550, 1
      %v1814 = vrot.slane %v1553, 1
      %v1815 = vsel %vm1797, %v1813, %v1814
      %v1816 = vrot.slane %v1558, 1
      %v1817 = vrot.slane %v1561, 1
      %v1818 = vsel %vm1797, %v1816, %v1817
      %v1819 = vrot.slane %v1566, 1
      %v1820 = vrot.slane %v1569, 1
      %v1821 = vsel %vm1797, %v1819, %v1820
      %v1822 = vrot.slane %v1574, 1
      %v1823 = vrot.slane %v1577, 1
      %v1824 = vsel %vm1797, %v1822, %v1823
      %v1825 = vrot.slane %v1582, 1
      %v1826 = vrot.slane %v1585, 1
      %v1827 = vsel %vm1797, %v1825, %v1826
      %v1828 = vrot.slane %v1590, 1
      %v1829 = vrot.slane %v1593, 1
      %v1830 = vsel %vm1797, %v1828, %v1829
      %v1831 = vrot.slane %v1598, 1
      %v1832 = vrot.slane %v1601, 1
      %v1833 = vsel %vm1797, %v1831, %v1832
      %v1834 = vrot.slane %v1606, 1
      %v1835 = vrot.slane %v1609, 1
      %v1836 = vsel %vm1797, %v1834, %v1835
      %v1837 = vrot.slane %v1614, 1
      %v1838 = vrot.slane %v1617, 1
      %v1839 = vsel %vm1797, %v1837, %v1838
      %v1840 = vrot.slane %v1622, 1
      %v1841 = vrot.slane %v1625, 1
      %v1842 = vsel %vm1797, %v1840, %v1841
      %v1843 = vrot.slane %v1630, 1
      %v1844 = vrot.slane %v1633, 1
      %v1845 = vsel %vm1797, %v1843, %v1844
      %v1878 = vsel %vm1797, %v1799, 0.0
      %v1879 = vsel %vm1797, %v1802, 0.0
      %v1880 = vsel %vm1797, %v1805, 0.0
      %v1881 = vsel %vm1797, %v1808, 0.0
      %v1882 = vsel %vm1797, %v1811, 0.0
      %v1883 = vsel %vm1797, %v1814, 0.0
      %v1884 = vsel %vm1797, %v1817, 0.0
      %v1885 = vsel %vm1797, %v1820, 0.0
      %v1886 = vsel %vm1797, %v1823, 0.0
      %v1887 = vsel %vm1797, %v1826, 0.0
      %v1888 = vsel %vm1797, %v1829, 0.0
      %v1889 = vsel %vm1797, %v1832, 0.0
      %v1890 = vsel %vm1797, %v1835, 0.0
      %v1891 = vsel %vm1797, %v1838, 0.0
      %v1892 = vsel %vm1797, %v1841, 0.0
      %v1893 = vsel %vm1797, %v1844, 0.0
      %v1894 = vadd.f32 %v1158, %v1749
      %v1895 = vadd.f32 %v1162, %v1671
      %v1896 = vadd.f32 %v1168, %v1750
      %v1897 = vadd.f32 %v1172, %v1674
      %v1898 = vadd.f32 %v1178, %v1751
      %v1899 = vadd.f32 %v1182, %v1677
      %v1900 = vadd.f32 %v1188, %v1752
      %v1901 = vadd.f32 %v1192, %v1680
      %v1902 = vadd.f32 %v1198, %v1753
      %v1903 = vadd.f32 %v1202, %v1683
      %v1904 = vadd.f32 %v1208, %v1754
      %v1905 = vadd.f32 %v1212, %v1686
      %v1906 = vadd.f32 %v1218, %v1755
      %v1907 = vadd.f32 %v1222, %v1689
      %v1908 = vadd.f32 %v1228, %v1756
      %v1909 = vadd.f32 %v1232, %v1692
      %v1910 = vadd.f32 %v1238, %v1757
      %v1911 = vadd.f32 %v1242, %v1695
      %v1912 = vadd.f32 %v1248, %v1758
      %v1913 = vadd.f32 %v1252, %v1698
      %v1914 = vadd.f32 %v1258, %v1759
      %v1915 = vadd.f32 %v1262, %v1701
      %v1916 = vadd.f32 %v1268, %v1760
      %v1917 = vadd.f32 %v1272, %v1704
      %v1918 = vadd.f32 %v1278, %v1761
      %v1919 = vadd.f32 %v1282, %v1707
      %v1920 = vadd.f32 %v1288, %v1762
      %v1921 = vadd.f32 %v1292, %v1710
      %v1922 = vadd.f32 %v1298, %v1763
      %v1923 = vadd.f32 %v1302, %v1713
      %v1924 = vadd.f32 %v1308, %v1764
      %v1925 = vadd.f32 %v1312, %v1716
      %v1926 = vadd.f32 %v1894, %v1800
      %v1927 = vadd.f32 %v1895, %v1878
      %v1928 = vadd.f32 %v1896, %v1803
      %v1929 = vadd.f32 %v1897, %v1879
      %v1930 = vadd.f32 %v1898, %v1806
      %v1931 = vadd.f32 %v1899, %v1880
      %v1932 = vadd.f32 %v1900, %v1809
      %v1933 = vadd.f32 %v1901, %v1881
      %v1934 = vadd.f32 %v1902, %v1812
      %v1935 = vadd.f32 %v1903, %v1882
      %v1936 = vadd.f32 %v1904, %v1815
      %v1937 = vadd.f32 %v1905, %v1883
      %v1938 = vadd.f32 %v1906, %v1818
      %v1939 = vadd.f32 %v1907, %v1884
      %v1940 = vadd.f32 %v1908, %v1821
      %v1941 = vadd.f32 %v1909, %v1885
      %v1942 = vadd.f32 %v1910, %v1824
      %v1943 = vadd.f32 %v1911, %v1886
      %v1944 = vadd.f32 %v1912, %v1827
      %v1945 = vadd.f32 %v1913, %v1887
      %v1946 = vadd.f32 %v1914, %v1830
      %v1947 = vadd.f32 %v1915, %v1888
      %v1948 = vadd.f32 %v1916, %v1833
      %v1949 = vadd.f32 %v1917, %v1889
      %v1950 = vadd.f32 %v1918, %v1836
      %v1951 = vadd.f32 %v1919, %v1890
      %v1952 = vadd.f32 %v1920, %v1839
      %v1953 = vadd.f32 %v1921, %v1891
      %v1954 = vadd.f32 %v1922, %v1842
      %v1955 = vadd.f32 %v1923, %v1892
      %v1956 = vadd.f32 %v1924, %v1845
      %v1957 = vadd.f32 %v1925, %v1893
      %v1958 = vld [vmem:[%s2] sm:$0x1]
      %v1960 = vlaneseq
      %v1961 = vshrl.u32 %v1960, 7
      %v1962 = vsub.s32 0, %v1961
      %v1963 = vrot.slane %v1958, %v1962
      %v1965 = vadd.f32 %v1926, %v1963
      %v1966 = vadd.f32 %v1927, %v1963
      %v1967 = vadd.f32 %v1928, %v1963
      %v1968 = vadd.f32 %v1929, %v1963
      %v1969 = vadd.f32 %v1930, %v1963
      %v1970 = vadd.f32 %v1931, %v1963
      %v1971 = vadd.f32 %v1932, %v1963
      %v1972 = vadd.f32 %v1933, %v1963
      %v1973 = vadd.f32 %v1934, %v1963
      %v1974 = vadd.f32 %v1935, %v1963
      %v1975 = vadd.f32 %v1936, %v1963
      %v1976 = vadd.f32 %v1937, %v1963
      %v1977 = vadd.f32 %v1938, %v1963
      %v1978 = vadd.f32 %v1939, %v1963
      %v1979 = vadd.f32 %v1940, %v1963
      %v1980 = vadd.f32 %v1941, %v1963
      %v1981 = vadd.f32 %v1942, %v1963
      %v1982 = vadd.f32 %v1943, %v1963
      %v1983 = vadd.f32 %v1944, %v1963
      %v1984 = vadd.f32 %v1945, %v1963
      %v1985 = vadd.f32 %v1946, %v1963
      %v1986 = vadd.f32 %v1947, %v1963
      %v1987 = vadd.f32 %v1948, %v1963
      %v1988 = vadd.f32 %v1949, %v1963
      %v1989 = vadd.f32 %v1950, %v1963
      %v1990 = vadd.f32 %v1951, %v1963
      %v1991 = vadd.f32 %v1952, %v1963
      %v1992 = vadd.f32 %v1953, %v1963
      %v1993 = vadd.f32 %v1954, %v1963
      %v1994 = vadd.f32 %v1955, %v1963
      %v1995 = vadd.f32 %v1956, %v1963
      %v1996 = vadd.f32 %v1957, %v1963
      %v1997 = vmax.f32 %v1965, 0.0
      %v1998 = vmax.f32 %v1966, 0.0
      %v1999 = vmax.f32 %v1967, 0.0
      %v2000 = vmax.f32 %v1968, 0.0
      %v2001 = vmax.f32 %v1969, 0.0
      %v2002 = vmax.f32 %v1970, 0.0
      %v2003 = vmax.f32 %v1971, 0.0
      %v2004 = vmax.f32 %v1972, 0.0
      %v2005 = vmax.f32 %v1973, 0.0
      %v2006 = vmax.f32 %v1974, 0.0
      %v2007 = vmax.f32 %v1975, 0.0
      %v2008 = vmax.f32 %v1976, 0.0
      %v2009 = vmax.f32 %v1977, 0.0
      %v2010 = vmax.f32 %v1978, 0.0
      %v2011 = vmax.f32 %v1979, 0.0
      %v2012 = vmax.f32 %v1980, 0.0
      %v2013 = vmax.f32 %v1981, 0.0
      %v2014 = vmax.f32 %v1982, 0.0
      %v2015 = vmax.f32 %v1983, 0.0
      %v2016 = vmax.f32 %v1984, 0.0
      %v2017 = vmax.f32 %v1985, 0.0
      %v2018 = vmax.f32 %v1986, 0.0
      %v2019 = vmax.f32 %v1987, 0.0
      %v2020 = vmax.f32 %v1988, 0.0
      %v2021 = vmax.f32 %v1989, 0.0
      %v2022 = vmax.f32 %v1990, 0.0
      %v2023 = vmax.f32 %v1991, 0.0
      %v2024 = vmax.f32 %v1992, 0.0
      %v2025 = vmax.f32 %v1993, 0.0
      %v2026 = vmax.f32 %v1994, 0.0
      %v2027 = vmax.f32 %v1995, 0.0
      %v2028 = vmax.f32 %v1996, 0.0
      %v2029 = vpack.c.bf16 %v1998, %v1997
      %v2030 = vpack.c.bf16 %v2000, %v1999
      %v2031 = vpack.c.bf16 %v2002, %v2001
      %v2032 = vpack.c.bf16 %v2004, %v2003
      %v2033 = vpack.c.bf16 %v2006, %v2005
      %v2034 = vpack.c.bf16 %v2008, %v2007
      %v2035 = vpack.c.bf16 %v2010, %v2009
      %v2036 = vpack.c.bf16 %v2012, %v2011
      %v2037 = vpack.c.bf16 %v2014, %v2013
      %v2038 = vpack.c.bf16 %v2016, %v2015
      %v2039 = vpack.c.bf16 %v2018, %v2017
      %v2040 = vpack.c.bf16 %v2020, %v2019
      %v2041 = vpack.c.bf16 %v2022, %v2021
      %v2042 = vpack.c.bf16 %v2024, %v2023
      %v2043 = vpack.c.bf16 %v2026, %v2025
      %v2044 = vpack.c.bf16 %v2028, %v2027
      %v2045 = vld [vmem:[%s3] sm:$0xff]
      %v2046 = vld [vmem:[%s3 + $0x8] sm:$0xf]
      %v2047 = vld [vmem:[%s3 + $0xc] sm:$0xff]
      %v2048 = vld [vmem:[%s3 + $0x14] sm:$0xf]
      %v2049 = vld [vmem:[%s3 + $0x18] sm:$0xff]
      %v2050 = vld [vmem:[%s3 + $0x20] sm:$0xf]
      %v2051 = vld [vmem:[%s3 + $0x24] sm:$0xff]
      %v2052 = vld [vmem:[%s3 + $0x2c] sm:$0xf]
      %v2053 = vld [vmem:[%s3 + $0x30] sm:$0xff]
      %v2054 = vld [vmem:[%s3 + $0x38] sm:$0xf]
      %v2055 = vld [vmem:[%s3 + $0x3c] sm:$0xff]
      %v2056 = vld [vmem:[%s3 + $0x44] sm:$0xf]
      %v2057 = vld [vmem:[%s3 + $0x48] sm:$0xff]
      %v2058 = vld [vmem:[%s3 + $0x50] sm:$0xf]
      %v2059 = vld [vmem:[%s3 + $0x54] sm:$0xff]
      %v2060 = vld [vmem:[%s3 + $0x5c] sm:$0xf]
      %v2061 = vld [vmem:[%s3 + $0x60] sm:$0xff]
      %v2062 = vld [vmem:[%s3 + $0x68] sm:$0xf]
      %v2063 = vld [vmem:[%s3 + $0x6c] sm:$0xff]
      %v2064 = vld [vmem:[%s3 + $0x74] sm:$0xf]
      %v2065 = vld [vmem:[%s3 + $0x78] sm:$0xff]
      %v2066 = vld [vmem:[%s3 + $0x80] sm:$0xf]
      %v2067 = vld [vmem:[%s3 + $0x84] sm:$0xff]
      %v2068 = vld [vmem:[%s3 + $0x8c] sm:$0xf]
      %v2069 = vld [vmem:[%s3 + $0x90] sm:$0xff]
      %v2070 = vld [vmem:[%s3 + $0x98] sm:$0xf]
      %v2071 = vld [vmem:[%s3 + $0x9c] sm:$0xff]
      %v2072 = vld [vmem:[%s3 + $0xa4] sm:$0xf]
      %v2073 = vld [vmem:[%s3 + $0xa8] sm:$0xff]
      %v2074 = vld [vmem:[%s3 + $0xb0] sm:$0xf]
      %v2075 = vld [vmem:[%s3 + $0xb4] sm:$0xff]
      %v2076 = vld [vmem:[%s3 + $0xbc] sm:$0xf]
      %v2077 = vld [vmem:[%s3 + $0xc0] sm:$0xff]
      %v2078 = vld [vmem:[%s3 + $0xc8] sm:$0xf]
      %v2079 = vld [vmem:[%s3 + $0xcc] sm:$0xff]
      %v2080 = vld [vmem:[%s3 + $0xd4] sm:$0xf]
      %v2081 = vld [vmem:[%s3 + $0xd8] sm:$0xff]
      %v2082 = vld [vmem:[%s3 + $0xe0] sm:$0xf]
      %v2083 = vld [vmem:[%s3 + $0xe4] sm:$0xff]
      %v2084 = vld [vmem:[%s3 + $0xec] sm:$0xf]
      %v2085 = vld [vmem:[%s3 + $0xf0] sm:$0xff]
      %v2086 = vld [vmem:[%s3 + $0xf8] sm:$0xf]
      %v2087 = vld [vmem:[%s3 + $0xfc] sm:$0xff]
      %v2088 = vld [vmem:[%s3 + $0x104] sm:$0xf]
      %v2089 = vld [vmem:[%s3 + $0x108] sm:$0xff]
      %v2090 = vld [vmem:[%s3 + $0x110] sm:$0xf]
      %v2091 = vld [vmem:[%s3 + $0x114] sm:$0xff]
      %v2092 = vld [vmem:[%s3 + $0x11c] sm:$0xf]
      %v2093 = vld [vmem:[%s3 + $0x120] sm:$0xff]
      %v2094 = vld [vmem:[%s3 + $0x128] sm:$0xf]
      %v2095 = vld [vmem:[%s3 + $0x12c] sm:$0xff]
      %v2096 = vld [vmem:[%s3 + $0x134] sm:$0xf]
      %v2097 = vld [vmem:[%s3 + $0x138] sm:$0xff]
      %v2098 = vld [vmem:[%s3 + $0x140] sm:$0xf]
      %v2099 = vld [vmem:[%s3 + $0x144] sm:$0xff]
      %v2100 = vld [vmem:[%s3 + $0x14c] sm:$0xf]
      %v2101 = vld [vmem:[%s3 + $0x150] sm:$0xff]
      %v2102 = vld [vmem:[%s3 + $0x158] sm:$0xf]
      %v2103 = vld [vmem:[%s3 + $0x15c] sm:$0xff]
      %v2104 = vld [vmem:[%s3 + $0x164] sm:$0xf]
      %v2105 = vld [vmem:[%s3 + $0x168] sm:$0xff]
      %v2106 = vld [vmem:[%s3 + $0x170] sm:$0xf]
      %v2107 = vld [vmem:[%s3 + $0x174] sm:$0xff]
      %v2108 = vld [vmem:[%s3 + $0x17c] sm:$0xf]
      %v2109 = vld [vmem:[%s3 + $0x180] sm:$0xff]
      %v2110 = vld [vmem:[%s3 + $0x188] sm:$0xf]
      %v2111 = vld [vmem:[%s3 + $0x18c] sm:$0xff]
      %v2112 = vld [vmem:[%s3 + $0x194] sm:$0xf]
      %v2113 = vld [vmem:[%s3 + $0x198] sm:$0xff]
      %v2114 = vld [vmem:[%s3 + $0x1a0] sm:$0xf]
      %v2115 = vld [vmem:[%s3 + $0x1a4] sm:$0xff]
      %v2116 = vld [vmem:[%s3 + $0x1ac] sm:$0xf]
      %v2117 = vld [vmem:[%s3 + $0x1b0] sm:$0xff]
      %v2118 = vld [vmem:[%s3 + $0x1b8] sm:$0xf]
      %v2119 = vld [vmem:[%s3 + $0x1bc] sm:$0xff]
      %v2120 = vld [vmem:[%s3 + $0x1c4] sm:$0xf]
      %v2121 = vld [vmem:[%s3 + $0x1c8] sm:$0xff]
      %v2122 = vld [vmem:[%s3 + $0x1d0] sm:$0xf]
      %v2123 = vld [vmem:[%s3 + $0x1d4] sm:$0xff]
      %v2124 = vld [vmem:[%s3 + $0x1dc] sm:$0xf]
      %v2125 = vld [vmem:[%s3 + $0x1e0] sm:$0xff]
      %v2126 = vld [vmem:[%s3 + $0x1e8] sm:$0xf]
      %v2127 = vld [vmem:[%s3 + $0x1ec] sm:$0xff]
      %v2128 = vld [vmem:[%s3 + $0x1f4] sm:$0xf]
      %v2129 = vld [vmem:[%s3 + $0x1f8] sm:$0xff]
      %v2130 = vld [vmem:[%s3 + $0x200] sm:$0xf]
      %v2131 = vld [vmem:[%s3 + $0x204] sm:$0xff]
      %v2132 = vld [vmem:[%s3 + $0x20c] sm:$0xf]
      %v2133 = vld [vmem:[%s3 + $0x210] sm:$0xff]
      %v2134 = vld [vmem:[%s3 + $0x218] sm:$0xf]
      %v2135 = vld [vmem:[%s3 + $0x21c] sm:$0xff]
      %v2136 = vld [vmem:[%s3 + $0x224] sm:$0xf]
      %v2137 = vld [vmem:[%s3 + $0x228] sm:$0xff]
      %v2138 = vld [vmem:[%s3 + $0x230] sm:$0xf]
      %v2139 = vld [vmem:[%s3 + $0x234] sm:$0xff]
      %v2140 = vld [vmem:[%s3 + $0x23c] sm:$0xf]
      %v2237 = vunpack.c.l.b16 %v2045
      %v2238 = vunpack.c.h.b16 %v2045
      %v2239 = vunpack.c.l.b16 %v2046
      %v2240 = vunpack.c.l.b16 %v2047
      %v2241 = vunpack.c.h.b16 %v2047
      %v2242 = vunpack.c.l.b16 %v2048
      %v2243 = vunpack.c.l.b16 %v2049
      %v2244 = vunpack.c.h.b16 %v2049
      %v2245 = vunpack.c.l.b16 %v2050
      %v2246 = vunpack.c.l.b16 %v2051
      %v2247 = vunpack.c.h.b16 %v2051
      %v2248 = vunpack.c.l.b16 %v2052
      %v2249 = vunpack.c.l.b16 %v2053
      %v2250 = vunpack.c.h.b16 %v2053
      %v2251 = vunpack.c.l.b16 %v2054
      %v2252 = vunpack.c.l.b16 %v2055
      %v2253 = vunpack.c.h.b16 %v2055
      %v2254 = vunpack.c.l.b16 %v2056
      %v2255 = vunpack.c.l.b16 %v2057
      %v2256 = vunpack.c.h.b16 %v2057
      %v2257 = vunpack.c.l.b16 %v2058
      %v2258 = vunpack.c.l.b16 %v2059
      %v2259 = vunpack.c.h.b16 %v2059
      %v2260 = vunpack.c.l.b16 %v2060
      %v2261 = vunpack.c.l.b16 %v2061
      %v2262 = vunpack.c.h.b16 %v2061
      %v2263 = vunpack.c.l.b16 %v2062
      %v2264 = vunpack.c.l.b16 %v2063
      %v2265 = vunpack.c.h.b16 %v2063
      %v2266 = vunpack.c.l.b16 %v2064
      %v2267 = vunpack.c.l.b16 %v2065
      %v2268 = vunpack.c.h.b16 %v2065
      %v2269 = vunpack.c.l.b16 %v2066
      %v2270 = vunpack.c.l.b16 %v2067
      %v2271 = vunpack.c.h.b16 %v2067
      %v2272 = vunpack.c.l.b16 %v2068
      %v2273 = vunpack.c.l.b16 %v2069
      %v2274 = vunpack.c.h.b16 %v2069
      %v2275 = vunpack.c.l.b16 %v2070
      %v2276 = vunpack.c.l.b16 %v2071
      %v2277 = vunpack.c.h.b16 %v2071
      %v2278 = vunpack.c.l.b16 %v2072
      %v2279 = vunpack.c.l.b16 %v2073
      %v2280 = vunpack.c.h.b16 %v2073
      %v2281 = vunpack.c.l.b16 %v2074
      %v2282 = vunpack.c.l.b16 %v2075
      %v2283 = vunpack.c.h.b16 %v2075
      %v2284 = vunpack.c.l.b16 %v2076
      %v2285 = vunpack.c.l.b16 %v2077
      %v2286 = vunpack.c.h.b16 %v2077
      %v2287 = vunpack.c.l.b16 %v2078
      %v2288 = vunpack.c.l.b16 %v2079
      %v2289 = vunpack.c.h.b16 %v2079
      %v2290 = vunpack.c.l.b16 %v2080
      %v2291 = vunpack.c.l.b16 %v2081
      %v2292 = vunpack.c.h.b16 %v2081
      %v2293 = vunpack.c.l.b16 %v2082
      %v2294 = vunpack.c.l.b16 %v2083
      %v2295 = vunpack.c.h.b16 %v2083
      %v2296 = vunpack.c.l.b16 %v2084
      %v2297 = vunpack.c.l.b16 %v2085
      %v2298 = vunpack.c.h.b16 %v2085
      %v2299 = vunpack.c.l.b16 %v2086
      %v2300 = vunpack.c.l.b16 %v2087
      %v2301 = vunpack.c.h.b16 %v2087
      %v2302 = vunpack.c.l.b16 %v2088
      %v2303 = vunpack.c.l.b16 %v2089
      %v2304 = vunpack.c.h.b16 %v2089
      %v2305 = vunpack.c.l.b16 %v2090
      %v2306 = vunpack.c.l.b16 %v2091
      %v2307 = vunpack.c.h.b16 %v2091
      %v2308 = vunpack.c.l.b16 %v2092
      %v2309 = vunpack.c.l.b16 %v2093
      %v2310 = vunpack.c.h.b16 %v2093
      %v2311 = vunpack.c.l.b16 %v2094
      %v2312 = vunpack.c.l.b16 %v2095
      %v2313 = vunpack.c.h.b16 %v2095
      %v2314 = vunpack.c.l.b16 %v2096
      %v2315 = vunpack.c.l.b16 %v2097
      %v2316 = vunpack.c.h.b16 %v2097
      %v2317 = vunpack.c.l.b16 %v2098
      %v2318 = vunpack.c.l.b16 %v2099
      %v2319 = vunpack.c.h.b16 %v2099
      %v2320 = vunpack.c.l.b16 %v2100
      %v2321 = vunpack.c.l.b16 %v2101
      %v2322 = vunpack.c.h.b16 %v2101
      %v2323 = vunpack.c.l.b16 %v2102
      %v2324 = vunpack.c.l.b16 %v2103
      %v2325 = vunpack.c.h.b16 %v2103
      %v2326 = vunpack.c.l.b16 %v2104
      %v2327 = vunpack.c.l.b16 %v2105
      %v2328 = vunpack.c.h.b16 %v2105
      %v2329 = vunpack.c.l.b16 %v2106
      %v2330 = vunpack.c.l.b16 %v2107
      %v2331 = vunpack.c.h.b16 %v2107
      %v2332 = vunpack.c.l.b16 %v2108
      %v2333 = vunpack.c.l.b16 %v2109
      %v2334 = vunpack.c.h.b16 %v2109
      %v2335 = vunpack.c.l.b16 %v2110
      %v2336 = vunpack.c.l.b16 %v2111
      %v2337 = vunpack.c.h.b16 %v2111
      %v2338 = vunpack.c.l.b16 %v2112
      %v2339 = vunpack.c.l.b16 %v2113
      %v2340 = vunpack.c.h.b16 %v2113
      %v2341 = vunpack.c.l.b16 %v2114
      %v2342 = vunpack.c.l.b16 %v2115
      %v2343 = vunpack.c.h.b16 %v2115
      %v2344 = vunpack.c.l.b16 %v2116
      %v2345 = vunpack.c.l.b16 %v2117
      %v2346 = vunpack.c.h.b16 %v2117
      %v2347 = vunpack.c.l.b16 %v2118
      %v2348 = vunpack.c.l.b16 %v2119
      %v2349 = vunpack.c.h.b16 %v2119
      %v2350 = vunpack.c.l.b16 %v2120
      %v2351 = vunpack.c.l.b16 %v2121
      %v2352 = vunpack.c.h.b16 %v2121
      %v2353 = vunpack.c.l.b16 %v2122
      %v2354 = vunpack.c.l.b16 %v2123
      %v2355 = vunpack.c.h.b16 %v2123
      %v2356 = vunpack.c.l.b16 %v2124
      %v2357 = vunpack.c.l.b16 %v2125
      %v2358 = vunpack.c.h.b16 %v2125
      %v2359 = vunpack.c.l.b16 %v2126
      %v2360 = vunpack.c.l.b16 %v2127
      %v2361 = vunpack.c.h.b16 %v2127
      %v2362 = vunpack.c.l.b16 %v2128
      %v2363 = vunpack.c.l.b16 %v2129
      %v2364 = vunpack.c.h.b16 %v2129
      %v2365 = vunpack.c.l.b16 %v2130
      %v2366 = vunpack.c.l.b16 %v2131
      %v2367 = vunpack.c.h.b16 %v2131
      %v2368 = vunpack.c.l.b16 %v2132
      %v2369 = vunpack.c.l.b16 %v2133
      %v2370 = vunpack.c.h.b16 %v2133
      %v2371 = vunpack.c.l.b16 %v2134
      %v2372 = vunpack.c.l.b16 %v2135
      %v2373 = vunpack.c.h.b16 %v2135
      %v2374 = vunpack.c.l.b16 %v2136
      %v2375 = vunpack.c.l.b16 %v2137
      %v2376 = vunpack.c.h.b16 %v2137
      %v2377 = vunpack.c.l.b16 %v2138
      %v2378 = vunpack.c.l.b16 %v2139
      %v2379 = vunpack.c.h.b16 %v2139
      %v2380 = vunpack.c.l.b16 %v2140
      %v2381 = vpack.c.b16 %v2240, %v2237
      %v2382 = vpack.c.b16 %v2241, %v2238
      %v2383 = vpack.c.b16 %v2242, %v2239
      %v2384 = vpack.c.b16 %v2246, %v2243
      %v2385 = vpack.c.b16 %v2247, %v2244
      %v2386 = vpack.c.b16 %v2248, %v2245
      %v2387 = vpack.c.b16 %v2252, %v2249
      %v2388 = vpack.c.b16 %v2253, %v2250
      %v2389 = vpack.c.b16 %v2254, %v2251
      %v2390 = vpack.c.b16 %v2258, %v2255
      %v2391 = vpack.c.b16 %v2259, %v2256
      %v2392 = vpack.c.b16 %v2260, %v2257
      %v2393 = vpack.c.b16 %v2264, %v2261
      %v2394 = vpack.c.b16 %v2265, %v2262
      %v2395 = vpack.c.b16 %v2266, %v2263
      %v2396 = vpack.c.b16 %v2270, %v2267
      %v2397 = vpack.c.b16 %v2271, %v2268
      %v2398 = vpack.c.b16 %v2272, %v2269
      %v2399 = vpack.c.b16 %v2276, %v2273
      %v2400 = vpack.c.b16 %v2277, %v2274
      %v2401 = vpack.c.b16 %v2278, %v2275
      %v2402 = vpack.c.b16 %v2282, %v2279
      %v2403 = vpack.c.b16 %v2283, %v2280
      %v2404 = vpack.c.b16 %v2284, %v2281
      %v2405 = vpack.c.b16 %v2288, %v2285
      %v2406 = vpack.c.b16 %v2289, %v2286
      %v2407 = vpack.c.b16 %v2290, %v2287
      %v2408 = vpack.c.b16 %v2294, %v2291
      %v2409 = vpack.c.b16 %v2295, %v2292
      %v2410 = vpack.c.b16 %v2296, %v2293
      %v2411 = vpack.c.b16 %v2300, %v2297
      %v2412 = vpack.c.b16 %v2301, %v2298
      %v2413 = vpack.c.b16 %v2302, %v2299
      %v2414 = vpack.c.b16 %v2306, %v2303
      %v2415 = vpack.c.b16 %v2307, %v2304
      %v2416 = vpack.c.b16 %v2308, %v2305
      %v2417 = vpack.c.b16 %v2312, %v2309
      %v2418 = vpack.c.b16 %v2313, %v2310
      %v2419 = vpack.c.b16 %v2314, %v2311
      %v2420 = vpack.c.b16 %v2318, %v2315
      %v2421 = vpack.c.b16 %v2319, %v2316
      %v2422 = vpack.c.b16 %v2320, %v2317
      %v2423 = vpack.c.b16 %v2324, %v2321
      %v2424 = vpack.c.b16 %v2325, %v2322
      %v2425 = vpack.c.b16 %v2326, %v2323
      %v2426 = vpack.c.b16 %v2330, %v2327
      %v2427 = vpack.c.b16 %v2331, %v2328
      %v2428 = vpack.c.b16 %v2332, %v2329
      %v2429 = vpack.c.b16 %v2336, %v2333
      %v2430 = vpack.c.b16 %v2337, %v2334
      %v2431 = vpack.c.b16 %v2338, %v2335
      %v2432 = vpack.c.b16 %v2342, %v2339
      %v2433 = vpack.c.b16 %v2343, %v2340
      %v2434 = vpack.c.b16 %v2344, %v2341
      %v2435 = vpack.c.b16 %v2348, %v2345
      %v2436 = vpack.c.b16 %v2349, %v2346
      %v2437 = vpack.c.b16 %v2350, %v2347
      %v2438 = vpack.c.b16 %v2354, %v2351
      %v2439 = vpack.c.b16 %v2355, %v2352
      %v2440 = vpack.c.b16 %v2356, %v2353
      %v2441 = vpack.c.b16 %v2360, %v2357
      %v2442 = vpack.c.b16 %v2361, %v2358
      %v2443 = vpack.c.b16 %v2362, %v2359
      %v2444 = vpack.c.b16 %v2366, %v2363
      %v2445 = vpack.c.b16 %v2367, %v2364
      %v2446 = vpack.c.b16 %v2368, %v2365
      %v2447 = vpack.c.b16 %v2372, %v2369
      %v2448 = vpack.c.b16 %v2373, %v2370
      %v2449 = vpack.c.b16 %v2374, %v2371
      %v2450 = vpack.c.b16 %v2378, %v2375
      %v2451 = vpack.c.b16 %v2379, %v2376
      %v2452 = vpack.c.b16 %v2380, %v2377
      %2525 = vmatprep.subr.bf16.mxu0 %v2382
      %2526 = vmatpush1.bf16.msra.mxu0 %v2381
      %2527 = vmatprep.subr.bf16.mxu0 %v2385
      %2528 = vmatpush1.bf16.msra.mxu0 %v2384
      %2529 = vmatprep.subr.bf16.mxu0 %v2388
      %2530 = vmatpush1.bf16.msra.mxu0 %v2387
      %2531 = vmatprep.subr.bf16.mxu0 %v2391
      %2532 = vmatpush1.bf16.msra.mxu0 %v2390
      %2533 = vmatprep.subr.bf16.mxu0 %v2394
      %2534 = vmatpush1.bf16.msra.mxu0 %v2393
      %2535 = vmatprep.subr.bf16.mxu0 %v2397
      %2536 = vmatpush1.bf16.msra.mxu0 %v2396
      %2537 = vmatprep.subr.bf16.mxu0 %v2400
      %2538 = vmatpush1.bf16.msra.mxu0 %v2399
      %2539 = vmatprep.subr.bf16.mxu0 %v2403
      %2540 = vmatpush1.bf16.msra.mxu0 %v2402
      %2541 = vmatprep.subr.bf16.mxu0 %v2406
      %2542 = vmatpush1.bf16.msra.mxu0 %v2405
      %2543 = vmatprep.subr.bf16.mxu0 %v2409
      %2544 = vmatpush1.bf16.msra.mxu0 %v2408
      %2545 = vmatprep.subr.bf16.mxu0 %v2412
      %2546 = vmatpush1.bf16.msra.mxu0 %v2411
      %2547 = vmatprep.subr.bf16.mxu0 %v2415
      %2548 = vmatpush1.bf16.msra.mxu0 %v2414
      %2549 = vmatprep.subr.bf16.mxu0 %v2418
      %2550 = vmatpush1.bf16.msra.mxu0 %v2417
      %2551 = vmatprep.subr.bf16.mxu0 %v2421
      %2552 = vmatpush1.bf16.msra.mxu0 %v2420
      %2553 = vmatprep.subr.bf16.mxu0 %v2424
      %2554 = vmatpush1.bf16.msra.mxu0 %v2423
      %2555 = vmatprep.subr.bf16.mxu0 %v2427
      %2556 = vmatpush1.bf16.msra.mxu0 %v2426
      %2557 = vmatprep.mubr.bf16.mxu0 %v2029
      %2558 = vmatmul.mubr.bf16.gmra.mrb[0].mxu0 0
      %v2559 = vpop.f32.mrb[0].mxu0
      %v2560 = vadd.f32 0.0, %v2559
      %v2561 = vpop.f32.mrb[0].mxu0
      %v2562 = vadd.f32 0.0, %v2561
      %v2563 = vpop.f32.mrb[0].mxu0
      %v2564 = vadd.f32 0.0, %v2563
      %v2565 = vpop.f32.mrb[0].mxu0
      %v2566 = vadd.f32 0.0, %v2565
      %2567 = vmatprep.mubr.bf16.mxu0 %v2030
      %2568 = vmatmul.mubr.bf16.gmra.mrb[0].mxu0 %v2029
      %v2569 = vpop.f32.mrb[0].mxu0
      %v2570 = vadd.f32 0.0, %v2569
      %v2571 = vpop.f32.mrb[0].mxu0
      %v2572 = vadd.f32 0.0, %v2571
      %v2573 = vpop.f32.mrb[0].mxu0
      %v2574 = vadd.f32 0.0, %v2573
      %v2575 = vpop.f32.mrb[0].mxu0
      %v2576 = vadd.f32 0.0, %v2575
      %2577 = vmatprep.mubr.bf16.mxu0 %v2031
      %2578 = vmatmul.mubr.bf16.gmra.mrb[0].mxu0 %v2030
      %v2579 = vpop.f32.mrb[0].mxu0
      %v2580 = vadd.f32 0.0, %v2579
      %v2581 = vpop.f32.mrb[0].mxu0
      %v2582 = vadd.f32 0.0, %v2581
      %v2583 = vpop.f32.mrb[0].mxu0
      %v2584 = vadd.f32 0.0, %v2583
      %v2585 = vpop.f32.mrb[0].mxu0
      %v2586 = vadd.f32 0.0, %v2585
      %2587 = vmatprep.mubr.bf16.mxu0 %v2032
      %2588 = vmatmul.mubr.bf16.gmra.mrb[0].mxu0 %v2031
      %v2589 = vpop.f32.mrb[0].mxu0
      %v2590 = vadd.f32 0.0, %v2589
      %v2591 = vpop.f32.mrb[0].mxu0
      %v2592 = vadd.f32 0.0, %v2591
      %v2593 = vpop.f32.mrb[0].mxu0
      %v2594 = vadd.f32 0.0, %v2593
      %v2595 = vpop.f32.mrb[0].mxu0
      %v2596 = vadd.f32 0.0, %v2595
      %2597 = vmatprep.mubr.bf16.mxu0 %v2033
      %2598 = vmatmul.mubr.bf16.gmra.mrb[0].mxu0 %v2032
      %v2599 = vpop.f32.mrb[0].mxu0
      %v2600 = vadd.f32 0.0, %v2599
      %v2601 = vpop.f32.mrb[0].mxu0
      %v2602 = vadd.f32 0.0, %v2601
      %v2603 = vpop.f32.mrb[0].mxu0
      %v2604 = vadd.f32 0.0, %v2603
      %v2605 = vpop.f32.mrb[0].mxu0
      %v2606 = vadd.f32 0.0, %v2605
      %2607 = vmatprep.mubr.bf16.mxu0 %v2034
      %2608 = vmatmul.mubr.bf16.gmra.mrb[0].mxu0 %v2033
      %v2609 = vpop.f32.mrb[0].mxu0
      %v2610 = vadd.f32 0.0, %v2609
      %v2611 = vpop.f32.mrb[0].mxu0
      %v2612 = vadd.f32 0.0, %v2611
      %v2613 = vpop.f32.mrb[0].mxu0
      %v2614 = vadd.f32 0.0, %v2613
      %v2615 = vpop.f32.mrb[0].mxu0
      %v2616 = vadd.f32 0.0, %v2615
      %2617 = vmatprep.mubr.bf16.mxu0 %v2035
      %2618 = vmatmul.mubr.bf16.gmra.mrb[0].mxu0 %v2034
      %v2619 = vpop.f32.mrb[0].mxu0
      %v2620 = vadd.f32 0.0, %v2619
      %v2621 = vpop.f32.mrb[0].mxu0
      %v2622 = vadd.f32 0.0, %v2621
      %v2623 = vpop.f32.mrb[0].mxu0
      %v2624 = vadd.f32 0.0, %v2623
      %v2625 = vpop.f32.mrb[0].mxu0
      %v2626 = vadd.f32 0.0, %v2625
      %2627 = vmatprep.mubr.bf16.mxu0 %v2036
      %2628 = vmatmul.mubr.bf16.gmra.mrb[0].mxu0 %v2035
      %v2629 = vpop.f32.mrb[0].mxu0
      %v2630 = vadd.f32 0.0, %v2629
      %v2631 = vpop.f32.mrb[0].mxu0
      %v2632 = vadd.f32 0.0, %v2631
      %v2633 = vpop.f32.mrb[0].mxu0
      %v2634 = vadd.f32 0.0, %v2633
      %v2635 = vpop.f32.mrb[0].mxu0
      %v2636 = vadd.f32 0.0, %v2635
      %2637 = vmatprep.mubr.bf16.mxu0 %v2037
      %2638 = vmatmul.mubr.bf16.gmra.mrb[0].mxu0 %v2036
      %v2639 = vpop.f32.mrb[0].mxu0
      %v2640 = vadd.f32 0.0, %v2639
      %v2641 = vpop.f32.mrb[0].mxu0
      %v2642 = vadd.f32 0.0, %v2641
      %v2643 = vpop.f32.mrb[0].mxu0
      %v2644 = vadd.f32 0.0, %v2643
      %v2645 = vpop.f32.mrb[0].mxu0
      %v2646 = vadd.f32 0.0, %v2645
      %2647 = vmatprep.mubr.bf16.mxu0 %v2038
      %2648 = vmatmul.mubr.bf16.gmra.mrb[0].mxu0 %v2037
      %v2649 = vpop.f32.mrb[0].mxu0
      %v2650 = vadd.f32 0.0, %v2649
      %v2651 = vpop.f32.mrb[0].mxu0
      %v2652 = vadd.f32 0.0, %v2651
      %v2653 = vpop.f32.mrb[0].mxu0
      %v2654 = vadd.f32 0.0, %v2653
      %v2655 = vpop.f32.mrb[0].mxu0
      %v2656 = vadd.f32 0.0, %v2655
      %2657 = vmatprep.mubr.bf16.mxu0 %v2039
      %2658 = vmatmul.mubr.bf16.gmra.mrb[0].mxu0 %v2038
      %v2659 = vpop.f32.mrb[0].mxu0
      %v2660 = vadd.f32 0.0, %v2659
      %v2661 = vpop.f32.mrb[0].mxu0
      %v2662 = vadd.f32 0.0, %v2661
      %v2663 = vpop.f32.mrb[0].mxu0
      %v2664 = vadd.f32 0.0, %v2663
      %v2665 = vpop.f32.mrb[0].mxu0
      %v2666 = vadd.f32 0.0, %v2665
      %2667 = vmatprep.mubr.bf16.mxu0 %v2040
      %2668 = vmatmul.mubr.bf16.gmra.mrb[0].mxu0 %v2039
      %v2669 = vpop.f32.mrb[0].mxu0
      %v2670 = vadd.f32 0.0, %v2669
      %v2671 = vpop.f32.mrb[0].mxu0
      %v2672 = vadd.f32 0.0, %v2671
      %v2673 = vpop.f32.mrb[0].mxu0
      %v2674 = vadd.f32 0.0, %v2673
      %v2675 = vpop.f32.mrb[0].mxu0
      %v2676 = vadd.f32 0.0, %v2675
      %2677 = vmatprep.mubr.bf16.mxu0 %v2041
      %2678 = vmatmul.mubr.bf16.gmra.mrb[0].mxu0 %v2040
      %v2679 = vpop.f32.mrb[0].mxu0
      %v2680 = vadd.f32 0.0, %v2679
      %v2681 = vpop.f32.mrb[0].mxu0
      %v2682 = vadd.f32 0.0, %v2681
      %v2683 = vpop.f32.mrb[0].mxu0
      %v2684 = vadd.f32 0.0, %v2683
      %v2685 = vpop.f32.mrb[0].mxu0
      %v2686 = vadd.f32 0.0, %v2685
      %2687 = vmatprep.mubr.bf16.mxu0 %v2042
      %2688 = vmatmul.mubr.bf16.gmra.mrb[0].mxu0 %v2041
      %v2689 = vpop.f32.mrb[0].mxu0
      %v2690 = vadd.f32 0.0, %v2689
      %v2691 = vpop.f32.mrb[0].mxu0
      %v2692 = vadd.f32 0.0, %v2691
      %v2693 = vpop.f32.mrb[0].mxu0
      %v2694 = vadd.f32 0.0, %v2693
      %v2695 = vpop.f32.mrb[0].mxu0
      %v2696 = vadd.f32 0.0, %v2695
      %2697 = vmatprep.mubr.bf16.mxu0 %v2043
      %2698 = vmatmul.mubr.bf16.gmra.mrb[0].mxu0 %v2042
      %v2699 = vpop.f32.mrb[0].mxu0
      %v2700 = vadd.f32 0.0, %v2699
      %v2701 = vpop.f32.mrb[0].mxu0
      %v2702 = vadd.f32 0.0, %v2701
      %v2703 = vpop.f32.mrb[0].mxu0
      %v2704 = vadd.f32 0.0, %v2703
      %v2705 = vpop.f32.mrb[0].mxu0
      %v2706 = vadd.f32 0.0, %v2705
      %2707 = vmatprep.mubr.bf16.mxu0 %v2044
      %2708 = vmatmul.mubr.bf16.gmra.mrb[0].mxu0 %v2043
      %v2709 = vpop.f32.mrb[0].mxu0
      %v2710 = vadd.f32 0.0, %v2709
      %v2711 = vpop.f32.mrb[0].mxu0
      %v2712 = vadd.f32 0.0, %v2711
      %v2713 = vpop.f32.mrb[0].mxu0
      %v2714 = vadd.f32 0.0, %v2713
      %v2715 = vpop.f32.mrb[0].mxu0
      %v2716 = vadd.f32 0.0, %v2715
      %2717 = vdwg.mxu0
      %2718 = vmatprep.subr.bf16.mxu0 %v2430
      %2719 = vmatpush1.bf16.msra.mxu0 %v2429
      %2720 = vmatprep.subr.bf16.mxu0 %v2433
      %2721 = vmatpush1.bf16.msra.mxu0 %v2432
      %2722 = vmatprep.subr.bf16.mxu0 %v2436
      %2723 = vmatpush1.bf16.msra.mxu0 %v2435
      %2724 = vmatprep.subr.bf16.mxu0 %v2439
      %2725 = vmatpush1.bf16.msra.mxu0 %v2438
      %2726 = vmatprep.subr.bf16.mxu0 %v2442
      %2727 = vmatpush1.bf16.msra.mxu0 %v2441
      %2728 = vmatprep.subr.bf16.mxu0 %v2445
      %2729 = vmatpush1.bf16.msra.mxu0 %v2444
      %2730 = vmatprep.subr.bf16.mxu0 %v2448
      %2731 = vmatpush1.bf16.msra.mxu0 %v2447
      %2732 = vmatprep.subr.bf16.mxu0 %v2451
      %2733 = vmatpush1.bf16.msra.mxu0 %v2450
      %2734 = vmatprep.subr.bf16.mxu0 0
      %2735 = vmatpush1.bf16.msra.mxu0 0
      %2736 = vmatprep.subr.bf16.mxu0 0
      %2737 = vmatpush1.bf16.msra.mxu0 0
      %2738 = vmatprep.subr.bf16.mxu0 0
      %2739 = vmatpush1.bf16.msra.mxu0 0
      %2740 = vmatprep.subr.bf16.mxu0 0
      %2741 = vmatpush1.bf16.msra.mxu0 0
      %2742 = vmatprep.subr.bf16.mxu0 0
      %2743 = vmatpush1.bf16.msra.mxu0 0
      %2744 = vmatprep.subr.bf16.mxu0 0
      %2745 = vmatpush1.bf16.msra.mxu0 0
      %2746 = vmatprep.subr.bf16.mxu0 0
      %2747 = vmatpush1.bf16.msra.mxu0 0
      %2748 = vmatprep.subr.bf16.mxu0 0
      %2749 = vmatpush1.bf16.msra.mxu0 0
      %2750 = vmatprep.mubr.bf16.mxu0 0
      %2751 = vmatmul.mubr.bf16.gmra.mrb[0].mxu0 %v2030
      %v2752 = vpop.f32.mrb[0].mxu0
      %v2753 = vadd.f32 %v2560, %v2752
      %v2754 = vpop.f32.mrb[0].mxu0
      %v2755 = vadd.f32 %v2562, %v2754
      %v2756 = vpop.f32.mrb[0].mxu0
      %v2757 = vadd.f32 %v2564, %v2756
      %v2758 = vpop.f32.mrb[0].mxu0
      %v2759 = vadd.f32 %v2566, %v2758
      %2760 = vmatprep.mubr.bf16.mxu0 0
      %2761 = vmatmul.mubr.bf16.gmra.mrb[0].mxu0 %v2031
      %v2762 = vpop.f32.mrb[0].mxu0
      %v2763 = vadd.f32 %v2570, %v2762
      %v2764 = vpop.f32.mrb[0].mxu0
      %v2765 = vadd.f32 %v2572, %v2764
      %v2766 = vpop.f32.mrb[0].mxu0
      %v2767 = vadd.f32 %v2574, %v2766
      %v2768 = vpop.f32.mrb[0].mxu0
      %v2769 = vadd.f32 %v2576, %v2768
      %2770 = vmatprep.mubr.bf16.mxu0 0
      %2771 = vmatmul.mubr.bf16.gmra.mrb[0].mxu0 %v2032
      %v2772 = vpop.f32.mrb[0].mxu0
      %v2773 = vadd.f32 %v2580, %v2772
      %v2774 = vpop.f32.mrb[0].mxu0
      %v2775 = vadd.f32 %v2582, %v2774
      %v2776 = vpop.f32.mrb[0].mxu0
      %v2777 = vadd.f32 %v2584, %v2776
      %v2778 = vpop.f32.mrb[0].mxu0
      %v2779 = vadd.f32 %v2586, %v2778
      %2780 = vmatprep.mubr.bf16.mxu0 0
      %2781 = vmatmul.mubr.bf16.gmra.mrb[0].mxu0 %v2033
      %v2782 = vpop.f32.mrb[0].mxu0
      %v2783 = vadd.f32 %v2590, %v2782
      %v2784 = vpop.f32.mrb[0].mxu0
      %v2785 = vadd.f32 %v2592, %v2784
      %v2786 = vpop.f32.mrb[0].mxu0
      %v2787 = vadd.f32 %v2594, %v2786
      %v2788 = vpop.f32.mrb[0].mxu0
      %v2789 = vadd.f32 %v2596, %v2788
      %2790 = vmatprep.mubr.bf16.mxu0 0
      %2791 = vmatmul.mubr.bf16.gmra.mrb[0].mxu0 %v2034
      %v2792 = vpop.f32.mrb[0].mxu0
      %v2793 = vadd.f32 %v2600, %v2792
      %v2794 = vpop.f32.mrb[0].mxu0
      %v2795 = vadd.f32 %v2602, %v2794
      %v2796 = vpop.f32.mrb[0].mxu0
      %v2797 = vadd.f32 %v2604, %v2796
      %v2798 = vpop.f32.mrb[0].mxu0
      %v2799 = vadd.f32 %v2606, %v2798
      %2800 = vmatprep.mubr.bf16.mxu0 0
      %2801 = vmatmul.mubr.bf16.gmra.mrb[0].mxu0 %v2035
      %v2802 = vpop.f32.mrb[0].mxu0
      %v2803 = vadd.f32 %v2610, %v2802
      %v2804 = vpop.f32.mrb[0].mxu0
      %v2805 = vadd.f32 %v2612, %v2804
      %v2806 = vpop.f32.mrb[0].mxu0
      %v2807 = vadd.f32 %v2614, %v2806
      %v2808 = vpop.f32.mrb[0].mxu0
      %v2809 = vadd.f32 %v2616, %v2808
      %2810 = vmatprep.mubr.bf16.mxu0 0
      %2811 = vmatmul.mubr.bf16.gmra.mrb[0].mxu0 %v2036
      %v2812 = vpop.f32.mrb[0].mxu0
      %v2813 = vadd.f32 %v2620, %v2812
      %v2814 = vpop.f32.mrb[0].mxu0
      %v2815 = vadd.f32 %v2622, %v2814
      %v2816 = vpop.f32.mrb[0].mxu0
      %v2817 = vadd.f32 %v2624, %v2816
      %v2818 = vpop.f32.mrb[0].mxu0
      %v2819 = vadd.f32 %v2626, %v2818
      %2820 = vmatprep.mubr.bf16.mxu0 0
      %2821 = vmatmul.mubr.bf16.gmra.mrb[0].mxu0 %v2037
      %v2822 = vpop.f32.mrb[0].mxu0
      %v2823 = vadd.f32 %v2630, %v2822
      %v2824 = vpop.f32.mrb[0].mxu0
      %v2825 = vadd.f32 %v2632, %v2824
      %v2826 = vpop.f32.mrb[0].mxu0
      %v2827 = vadd.f32 %v2634, %v2826
      %v2828 = vpop.f32.mrb[0].mxu0
      %v2829 = vadd.f32 %v2636, %v2828
      %2830 = vmatprep.mubr.bf16.mxu0 0
      %2831 = vmatmul.mubr.bf16.gmra.mrb[0].mxu0 %v2038
      %v2832 = vpop.f32.mrb[0].mxu0
      %v2833 = vadd.f32 %v2640, %v2832
      %v2834 = vpop.f32.mrb[0].mxu0
      %v2835 = vadd.f32 %v2642, %v2834
      %v2836 = vpop.f32.mrb[0].mxu0
      %v2837 = vadd.f32 %v2644, %v2836
      %v2838 = vpop.f32.mrb[0].mxu0
      %v2839 = vadd.f32 %v2646, %v2838
      %2840 = vmatprep.mubr.bf16.mxu0 0
      %2841 = vmatmul.mubr.bf16.gmra.mrb[0].mxu0 %v2039
      %v2842 = vpop.f32.mrb[0].mxu0
      %v2843 = vadd.f32 %v2650, %v2842
      %v2844 = vpop.f32.mrb[0].mxu0
      %v2845 = vadd.f32 %v2652, %v2844
      %v2846 = vpop.f32.mrb[0].mxu0
      %v2847 = vadd.f32 %v2654, %v2846
      %v2848 = vpop.f32.mrb[0].mxu0
      %v2849 = vadd.f32 %v2656, %v2848
      %2850 = vmatprep.mubr.bf16.mxu0 0
      %2851 = vmatmul.mubr.bf16.gmra.mrb[0].mxu0 %v2040
      %v2852 = vpop.f32.mrb[0].mxu0
      %v2853 = vadd.f32 %v2660, %v2852
      %v2854 = vpop.f32.mrb[0].mxu0
      %v2855 = vadd.f32 %v2662, %v2854
      %v2856 = vpop.f32.mrb[0].mxu0
      %v2857 = vadd.f32 %v2664, %v2856
      %v2858 = vpop.f32.mrb[0].mxu0
      %v2859 = vadd.f32 %v2666, %v2858
      %2860 = vmatprep.mubr.bf16.mxu0 0
      %2861 = vmatmul.mubr.bf16.gmra.mrb[0].mxu0 %v2041
      %v2862 = vpop.f32.mrb[0].mxu0
      %v2863 = vadd.f32 %v2670, %v2862
      %v2864 = vpop.f32.mrb[0].mxu0
      %v2865 = vadd.f32 %v2672, %v2864
      %v2866 = vpop.f32.mrb[0].mxu0
      %v2867 = vadd.f32 %v2674, %v2866
      %v2868 = vpop.f32.mrb[0].mxu0
      %v2869 = vadd.f32 %v2676, %v2868
      %2870 = vmatprep.mubr.bf16.mxu0 0
      %2871 = vmatmul.mubr.bf16.gmra.mrb[0].mxu0 %v2042
      %v2872 = vpop.f32.mrb[0].mxu0
      %v2873 = vadd.f32 %v2680, %v2872
      %v2874 = vpop.f32.mrb[0].mxu0
      %v2875 = vadd.f32 %v2682, %v2874
      %v2876 = vpop.f32.mrb[0].mxu0
      %v2877 = vadd.f32 %v2684, %v2876
      %v2878 = vpop.f32.mrb[0].mxu0
      %v2879 = vadd.f32 %v2686, %v2878
      %2880 = vmatprep.mubr.bf16.mxu0 0
      %2881 = vmatmul.mubr.bf16.gmra.mrb[0].mxu0 %v2043
      %v2882 = vpop.f32.mrb[0].mxu0
      %v2883 = vadd.f32 %v2690, %v2882
      %v2884 = vpop.f32.mrb[0].mxu0
      %v2885 = vadd.f32 %v2692, %v2884
      %v2886 = vpop.f32.mrb[0].mxu0
      %v2887 = vadd.f32 %v2694, %v2886
      %v2888 = vpop.f32.mrb[0].mxu0
      %v2889 = vadd.f32 %v2696, %v2888
      %2890 = vmatprep.mubr.bf16.mxu0 0
      %2891 = vmatmul.mubr.bf16.gmra.mrb[0].mxu0 %v2044
      %v2892 = vpop.f32.mrb[0].mxu0
      %v2893 = vadd.f32 %v2700, %v2892
      %v2894 = vpop.f32.mrb[0].mxu0
      %v2895 = vadd.f32 %v2702, %v2894
      %v2896 = vpop.f32.mrb[0].mxu0
      %v2897 = vadd.f32 %v2704, %v2896
      %v2898 = vpop.f32.mrb[0].mxu0
      %v2899 = vadd.f32 %v2706, %v2898
      %2900 = vmatprep.mubr.bf16.mxu0 0
      %2901 = vmatmul.mubr.bf16.gmra.mrb[0].mxu0 0
      %v2902 = vpop.f32.mrb[0].mxu0
      %v2903 = vadd.f32 %v2710, %v2902
      %v2904 = vpop.f32.mrb[0].mxu0
      %v2905 = vadd.f32 %v2712, %v2904
      %v2906 = vpop.f32.mrb[0].mxu0
      %v2907 = vadd.f32 %v2714, %v2906
      %v2908 = vpop.f32.mrb[0].mxu0
      %v2909 = vadd.f32 %v2716, %v2908
      %2910 = vdwg.mxu0
      %2911 = vmatprep.subr.bf16.mxu0 0
      %2912 = vmatpush1.bf16.msra.mxu0 %v2383
      %2913 = vmatprep.subr.bf16.mxu0 0
      %2914 = vmatpush1.bf16.msra.mxu0 %v2386
      %2915 = vmatprep.subr.bf16.mxu0 0
      %2916 = vmatpush1.bf16.msra.mxu0 %v2389
      %2917 = vmatprep.subr.bf16.mxu0 0
      %2918 = vmatpush1.bf16.msra.mxu0 %v2392
      %2919 = vmatprep.subr.bf16.mxu0 0
      %2920 = vmatpush1.bf16.msra.mxu0 %v2395
      %2921 = vmatprep.subr.bf16.mxu0 0
      %2922 = vmatpush1.bf16.msra.mxu0 %v2398
      %2923 = vmatprep.subr.bf16.mxu0 0
      %2924 = vmatpush1.bf16.msra.mxu0 %v2401
      %2925 = vmatprep.subr.bf16.mxu0 0
      %2926 = vmatpush1.bf16.msra.mxu0 %v2404
      %2927 = vmatprep.subr.bf16.mxu0 0
      %2928 = vmatpush1.bf16.msra.mxu0 %v2407
      %2929 = vmatprep.subr.bf16.mxu0 0
      %2930 = vmatpush1.bf16.msra.mxu0 %v2410
      %2931 = vmatprep.subr.bf16.mxu0 0
      %2932 = vmatpush1.bf16.msra.mxu0 %v2413
      %2933 = vmatprep.subr.bf16.mxu0 0
      %2934 = vmatpush1.bf16.msra.mxu0 %v2416
      %2935 = vmatprep.subr.bf16.mxu0 0
      %2936 = vmatpush1.bf16.msra.mxu0 %v2419
      %2937 = vmatprep.subr.bf16.mxu0 0
      %2938 = vmatpush1.bf16.msra.mxu0 %v2422
      %2939 = vmatprep.subr.bf16.mxu0 0
      %2940 = vmatpush1.bf16.msra.mxu0 %v2425
      %2941 = vmatprep.subr.bf16.mxu0 0
      %2942 = vmatpush1.bf16.msra.mxu0 %v2428
      %2943 = vmatprep.mubr.bf16.mxu0 %v2029
      %2944 = vmatmul.mubr.bf16.gmra.mrb[0].mxu0 0
      %v2945 = vpop.f32.mrb[0].mxu0
      %v2946 = vadd.f32 0.0, %v2945
      %v2947 = vpop.f32.mrb[0].mxu0
      %v2948 = vpop.f32.mrb[0].mxu0
      %v2949 = vadd.f32 0.0, %v2948
      %v2950 = vpop.f32.mrb[0].mxu0
      %2951 = vmatprep.mubr.bf16.mxu0 %v2030
      %2952 = vmatmul.mubr.bf16.gmra.mrb[0].mxu0 %v2029
      %v2953 = vpop.f32.mrb[0].mxu0
      %v2954 = vadd.f32 0.0, %v2953
      %v2955 = vpop.f32.mrb[0].mxu0
      %v2956 = vpop.f32.mrb[0].mxu0
      %v2957 = vadd.f32 0.0, %v2956
      %v2958 = vpop.f32.mrb[0].mxu0
      %2959 = vmatprep.mubr.bf16.mxu0 %v2031
      %2960 = vmatmul.mubr.bf16.gmra.mrb[0].mxu0 %v2030
      %v2961 = vpop.f32.mrb[0].mxu0
      %v2962 = vadd.f32 0.0, %v2961
      %v2963 = vpop.f32.mrb[0].mxu0
      %v2964 = vpop.f32.mrb[0].mxu0
      %v2965 = vadd.f32 0.0, %v2964
      %v2966 = vpop.f32.mrb[0].mxu0
      %2967 = vmatprep.mubr.bf16.mxu0 %v2032
      %2968 = vmatmul.mubr.bf16.gmra.mrb[0].mxu0 %v2031
      %v2969 = vpop.f32.mrb[0].mxu0
      %v2970 = vadd.f32 0.0, %v2969
      %v2971 = vpop.f32.mrb[0].mxu0
      %v2972 = vpop.f32.mrb[0].mxu0
      %v2973 = vadd.f32 0.0, %v2972
      %v2974 = vpop.f32.mrb[0].mxu0
      %2975 = vmatprep.mubr.bf16.mxu0 %v2033
      %2976 = vmatmul.mubr.bf16.gmra.mrb[0].mxu0 %v2032
      %v2977 = vpop.f32.mrb[0].mxu0
      %v2978 = vadd.f32 0.0, %v2977
      %v2979 = vpop.f32.mrb[0].mxu0
      %v2980 = vpop.f32.mrb[0].mxu0
      %v2981 = vadd.f32 0.0, %v2980
      %v2982 = vpop.f32.mrb[0].mxu0
      %2983 = vmatprep.mubr.bf16.mxu0 %v2034
      %2984 = vmatmul.mubr.bf16.gmra.mrb[0].mxu0 %v2033
      %v2985 = vpop.f32.mrb[0].mxu0
      %v2986 = vadd.f32 0.0, %v2985
      %v2987 = vpop.f32.mrb[0].mxu0
      %v2988 = vpop.f32.mrb[0].mxu0
      %v2989 = vadd.f32 0.0, %v2988
      %v2990 = vpop.f32.mrb[0].mxu0
      %2991 = vmatprep.mubr.bf16.mxu0 %v2035
      %2992 = vmatmul.mubr.bf16.gmra.mrb[0].mxu0 %v2034
      %v2993 = vpop.f32.mrb[0].mxu0
      %v2994 = vadd.f32 0.0, %v2993
      %v2995 = vpop.f32.mrb[0].mxu0
      %v2996 = vpop.f32.mrb[0].mxu0
      %v2997 = vadd.f32 0.0, %v2996
      %v2998 = vpop.f32.mrb[0].mxu0
      %2999 = vmatprep.mubr.bf16.mxu0 %v2036
      %3000 = vmatmul.mubr.bf16.gmra.mrb[0].mxu0 %v2035
      %v3001 = vpop.f32.mrb[0].mxu0
      %v3002 = vadd.f32 0.0, %v3001
      %v3003 = vpop.f32.mrb[0].mxu0
      %v3004 = vpop.f32.mrb[0].mxu0
      %v3005 = vadd.f32 0.0, %v3004
      %v3006 = vpop.f32.mrb[0].mxu0
      %3007 = vmatprep.mubr.bf16.mxu0 %v2037
      %3008 = vmatmul.mubr.bf16.gmra.mrb[0].mxu0 %v2036
      %v3009 = vpop.f32.mrb[0].mxu0
      %v3010 = vadd.f32 0.0, %v3009
      %v3011 = vpop.f32.mrb[0].mxu0
      %v3012 = vpop.f32.mrb[0].mxu0
      %v3013 = vadd.f32 0.0, %v3012
      %v3014 = vpop.f32.mrb[0].mxu0
      %3015 = vmatprep.mubr.bf16.mxu0 %v2038
      %3016 = vmatmul.mubr.bf16.gmra.mrb[0].mxu0 %v2037
      %v3017 = vpop.f32.mrb[0].mxu0
      %v3018 = vadd.f32 0.0, %v3017
      %v3019 = vpop.f32.mrb[0].mxu0
      %v3020 = vpop.f32.mrb[0].mxu0
      %v3021 = vadd.f32 0.0, %v3020
      %v3022 = vpop.f32.mrb[0].mxu0
      %3023 = vmatprep.mubr.bf16.mxu0 %v2039
      %3024 = vmatmul.mubr.bf16.gmra.mrb[0].mxu0 %v2038
      %v3025 = vpop.f32.mrb[0].mxu0
      %v3026 = vadd.f32 0.0, %v3025
      %v3027 = vpop.f32.mrb[0].mxu0
      %v3028 = vpop.f32.mrb[0].mxu0
      %v3029 = vadd.f32 0.0, %v3028
      %v3030 = vpop.f32.mrb[0].mxu0
      %3031 = vmatprep.mubr.bf16.mxu0 %v2040
      %3032 = vmatmul.mubr.bf16.gmra.mrb[0].mxu0 %v2039
      %v3033 = vpop.f32.mrb[0].mxu0
      %v3034 = vadd.f32 0.0, %v3033
      %v3035 = vpop.f32.mrb[0].mxu0
      %v3036 = vpop.f32.mrb[0].mxu0
      %v3037 = vadd.f32 0.0, %v3036
      %v3038 = vpop.f32.mrb[0].mxu0
      %3039 = vmatprep.mubr.bf16.mxu0 %v2041
      %3040 = vmatmul.mubr.bf16.gmra.mrb[0].mxu0 %v2040
      %v3041 = vpop.f32.mrb[0].mxu0
      %v3042 = vadd.f32 0.0, %v3041
      %v3043 = vpop.f32.mrb[0].mxu0
      %v3044 = vpop.f32.mrb[0].mxu0
      %v3045 = vadd.f32 0.0, %v3044
      %v3046 = vpop.f32.mrb[0].mxu0
      %3047 = vmatprep.mubr.bf16.mxu0 %v2042
      %3048 = vmatmul.mubr.bf16.gmra.mrb[0].mxu0 %v2041
      %v3049 = vpop.f32.mrb[0].mxu0
      %v3050 = vadd.f32 0.0, %v3049
      %v3051 = vpop.f32.mrb[0].mxu0
      %v3052 = vpop.f32.mrb[0].mxu0
      %v3053 = vadd.f32 0.0, %v3052
      %v3054 = vpop.f32.mrb[0].mxu0
      %3055 = vmatprep.mubr.bf16.mxu0 %v2043
      %3056 = vmatmul.mubr.bf16.gmra.mrb[0].mxu0 %v2042
      %v3057 = vpop.f32.mrb[0].mxu0
      %v3058 = vadd.f32 0.0, %v3057
      %v3059 = vpop.f32.mrb[0].mxu0
      %v3060 = vpop.f32.mrb[0].mxu0
      %v3061 = vadd.f32 0.0, %v3060
      %v3062 = vpop.f32.mrb[0].mxu0
      %3063 = vmatprep.mubr.bf16.mxu0 %v2044
      %3064 = vmatmul.mubr.bf16.gmra.mrb[0].mxu0 %v2043
      %v3065 = vpop.f32.mrb[0].mxu0
      %v3066 = vadd.f32 0.0, %v3065
      %v3067 = vpop.f32.mrb[0].mxu0
      %v3068 = vpop.f32.mrb[0].mxu0
      %v3069 = vadd.f32 0.0, %v3068
      %v3070 = vpop.f32.mrb[0].mxu0
      %3071 = vdwg.mxu0
      %3072 = vmatprep.subr.bf16.mxu0 0
      %3073 = vmatpush1.bf16.msra.mxu0 %v2431
      %3074 = vmatprep.subr.bf16.mxu0 0
      %3075 = vmatpush1.bf16.msra.mxu0 %v2434
      %3076 = vmatprep.subr.bf16.mxu0 0
      %3077 = vmatpush1.bf16.msra.mxu0 %v2437
      %3078 = vmatprep.subr.bf16.mxu0 0
      %3079 = vmatpush1.bf16.msra.mxu0 %v2440
      %3080 = vmatprep.subr.bf16.mxu0 0
      %3081 = vmatpush1.bf16.msra.mxu0 %v2443
      %3082 = vmatprep.subr.bf16.mxu0 0
      %3083 = vmatpush1.bf16.msra.mxu0 %v2446
      %3084 = vmatprep.subr.bf16.mxu0 0
      %3085 = vmatpush1.bf16.msra.mxu0 %v2449
      %3086 = vmatprep.subr.bf16.mxu0 0
      %3087 = vmatpush1.bf16.msra.mxu0 %v2452
      %3088 = vmatprep.subr.bf16.mxu0 0
      %3089 = vmatpush1.bf16.msra.mxu0 0
      %3090 = vmatprep.subr.bf16.mxu0 0
      %3091 = vmatpush1.bf16.msra.mxu0 0
      %3092 = vmatprep.subr.bf16.mxu0 0
      %3093 = vmatpush1.bf16.msra.mxu0 0
      %3094 = vmatprep.subr.bf16.mxu0 0
      %3095 = vmatpush1.bf16.msra.mxu0 0
      %3096 = vmatprep.subr.bf16.mxu0 0
      %3097 = vmatpush1.bf16.msra.mxu0 0
      %3098 = vmatprep.subr.bf16.mxu0 0
      %3099 = vmatpush1.bf16.msra.mxu0 0
      %3100 = vmatprep.subr.bf16.mxu0 0
      %3101 = vmatpush1.bf16.msra.mxu0 0
      %3102 = vmatprep.subr.bf16.mxu0 0
      %3103 = vmatpush1.bf16.msra.mxu0 0
      %3104 = vmatprep.mubr.bf16.mxu0 0
      %3105 = vmatmul.mubr.bf16.gmra.mrb[0].mxu0 %v2030
      %v3106 = vpop.f32.mrb[0].mxu0
      %v3107 = vadd.f32 %v2946, %v3106
      %v3108 = vpop.f32.mrb[0].mxu0
      %v3109 = vpop.f32.mrb[0].mxu0
      %v3110 = vadd.f32 %v2949, %v3109
      %v3111 = vpop.f32.mrb[0].mxu0
      %3112 = vmatprep.mubr.bf16.mxu0 0
      %3113 = vmatmul.mubr.bf16.gmra.mrb[0].mxu0 %v2031
      %v3114 = vpop.f32.mrb[0].mxu0
      %v3115 = vadd.f32 %v2954, %v3114
      %v3116 = vpop.f32.mrb[0].mxu0
      %v3117 = vpop.f32.mrb[0].mxu0
      %v3118 = vadd.f32 %v2957, %v3117
      %v3119 = vpop.f32.mrb[0].mxu0
      %3120 = vmatprep.mubr.bf16.mxu0 0
      %3121 = vmatmul.mubr.bf16.gmra.mrb[0].mxu0 %v2032
      %v3122 = vpop.f32.mrb[0].mxu0
      %v3123 = vadd.f32 %v2962, %v3122
      %v3124 = vpop.f32.mrb[0].mxu0
      %v3125 = vpop.f32.mrb[0].mxu0
      %v3126 = vadd.f32 %v2965, %v3125
      %v3127 = vpop.f32.mrb[0].mxu0
      %3128 = vmatprep.mubr.bf16.mxu0 0
      %3129 = vmatmul.mubr.bf16.gmra.mrb[0].mxu0 %v2033
      %v3130 = vpop.f32.mrb[0].mxu0
      %v3131 = vadd.f32 %v2970, %v3130
      %v3132 = vpop.f32.mrb[0].mxu0
      %v3133 = vpop.f32.mrb[0].mxu0
      %v3134 = vadd.f32 %v2973, %v3133
      %v3135 = vpop.f32.mrb[0].mxu0
      %3136 = vmatprep.mubr.bf16.mxu0 0
      %3137 = vmatmul.mubr.bf16.gmra.mrb[0].mxu0 %v2034
      %v3138 = vpop.f32.mrb[0].mxu0
      %v3139 = vadd.f32 %v2978, %v3138
      %v3140 = vpop.f32.mrb[0].mxu0
      %v3141 = vpop.f32.mrb[0].mxu0
      %v3142 = vadd.f32 %v2981, %v3141
      %v3143 = vpop.f32.mrb[0].mxu0
      %3144 = vmatprep.mubr.bf16.mxu0 0
      %3145 = vmatmul.mubr.bf16.gmra.mrb[0].mxu0 %v2035
      %v3146 = vpop.f32.mrb[0].mxu0
      %v3147 = vadd.f32 %v2986, %v3146
      %v3148 = vpop.f32.mrb[0].mxu0
      %v3149 = vpop.f32.mrb[0].mxu0
      %v3150 = vadd.f32 %v2989, %v3149
      %v3151 = vpop.f32.mrb[0].mxu0
      %3152 = vmatprep.mubr.bf16.mxu0 0
      %3153 = vmatmul.mubr.bf16.gmra.mrb[0].mxu0 %v2036
      %v3154 = vpop.f32.mrb[0].mxu0
      %v3155 = vadd.f32 %v2994, %v3154
      %v3156 = vpop.f32.mrb[0].mxu0
      %v3157 = vpop.f32.mrb[0].mxu0
      %v3158 = vadd.f32 %v2997, %v3157
      %v3159 = vpop.f32.mrb[0].mxu0
      %3160 = vmatprep.mubr.bf16.mxu0 0
      %3161 = vmatmul.mubr.bf16.gmra.mrb[0].mxu0 %v2037
      %v3162 = vpop.f32.mrb[0].mxu0
      %v3163 = vadd.f32 %v3002, %v3162
      %v3164 = vpop.f32.mrb[0].mxu0
      %v3165 = vpop.f32.mrb[0].mxu0
      %v3166 = vadd.f32 %v3005, %v3165
      %v3167 = vpop.f32.mrb[0].mxu0
      %3168 = vmatprep.mubr.bf16.mxu0 0
      %3169 = vmatmul.mubr.bf16.gmra.mrb[0].mxu0 %v2038
      %v3170 = vpop.f32.mrb[0].mxu0
      %v3171 = vadd.f32 %v3010, %v3170
      %v3172 = vpop.f32.mrb[0].mxu0
      %v3173 = vpop.f32.mrb[0].mxu0
      %v3174 = vadd.f32 %v3013, %v3173
      %v3175 = vpop.f32.mrb[0].mxu0
      %3176 = vmatprep.mubr.bf16.mxu0 0
      %3177 = vmatmul.mubr.bf16.gmra.mrb[0].mxu0 %v2039
      %v3178 = vpop.f32.mrb[0].mxu0
      %v3179 = vadd.f32 %v3018, %v3178
      %v3180 = vpop.f32.mrb[0].mxu0
      %v3181 = vpop.f32.mrb[0].mxu0
      %v3182 = vadd.f32 %v3021, %v3181
      %v3183 = vpop.f32.mrb[0].mxu0
      %3184 = vmatprep.mubr.bf16.mxu0 0
      %3185 = vmatmul.mubr.bf16.gmra.mrb[0].mxu0 %v2040
      %v3186 = vpop.f32.mrb[0].mxu0
      %v3187 = vadd.f32 %v3026, %v3186
      %v3188 = vpop.f32.mrb[0].mxu0
      %v3189 = vpop.f32.mrb[0].mxu0
      %v3190 = vadd.f32 %v3029, %v3189
      %v3191 = vpop.f32.mrb[0].mxu0
      %3192 = vmatprep.mubr.bf16.mxu0 0
      %3193 = vmatmul.mubr.bf16.gmra.mrb[0].mxu0 %v2041
      %v3194 = vpop.f32.mrb[0].mxu0
      %v3195 = vadd.f32 %v3034, %v3194
      %v3196 = vpop.f32.mrb[0].mxu0
      %v3197 = vpop.f32.mrb[0].mxu0
      %v3198 = vadd.f32 %v3037, %v3197
      %v3199 = vpop.f32.mrb[0].mxu0
      %3200 = vmatprep.mubr.bf16.mxu0 0
      %3201 = vmatmul.mubr.bf16.gmra.mrb[0].mxu0 %v2042
      %v3202 = vpop.f32.mrb[0].mxu0
      %v3203 = vadd.f32 %v3042, %v3202
      %v3204 = vpop.f32.mrb[0].mxu0
      %v3205 = vpop.f32.mrb[0].mxu0
      %v3206 = vadd.f32 %v3045, %v3205
      %v3207 = vpop.f32.mrb[0].mxu0
      %3208 = vmatprep.mubr.bf16.mxu0 0
      %3209 = vmatmul.mubr.bf16.gmra.mrb[0].mxu0 %v2043
      %v3210 = vpop.f32.mrb[0].mxu0
      %v3211 = vadd.f32 %v3050, %v3210
      %v3212 = vpop.f32.mrb[0].mxu0
      %v3213 = vpop.f32.mrb[0].mxu0
      %v3214 = vadd.f32 %v3053, %v3213
      %v3215 = vpop.f32.mrb[0].mxu0
      %3216 = vmatprep.mubr.bf16.mxu0 0
      %3217 = vmatmul.mubr.bf16.gmra.mrb[0].mxu0 %v2044
      %v3218 = vpop.f32.mrb[0].mxu0
      %v3219 = vadd.f32 %v3058, %v3218
      %v3220 = vpop.f32.mrb[0].mxu0
      %v3221 = vpop.f32.mrb[0].mxu0
      %v3222 = vadd.f32 %v3061, %v3221
      %v3223 = vpop.f32.mrb[0].mxu0
      %3224 = vmatprep.mubr.bf16.mxu0 0
      %3225 = vmatmul.mubr.bf16.gmra.mrb[0].mxu0 0
      %v3226 = vpop.f32.mrb[0].mxu0
      %v3227 = vadd.f32 %v3066, %v3226
      %v3228 = vpop.f32.mrb[0].mxu0
      %v3229 = vpop.f32.mrb[0].mxu0
      %v3230 = vadd.f32 %v3069, %v3229
      %v3231 = vpop.f32.mrb[0].mxu0
      %3232 = vdwg.mxu0
      %v3265 = vrot.slane %v2753, 7
      %v3266 = vrot.slane %v2757, 7
      %v3267 = vsel %vm1668, %v3265, %v3266
      %v3268 = vrot.slane %v2763, 7
      %v3269 = vrot.slane %v2767, 7
      %v3270 = vsel %vm1668, %v3268, %v3269
      %v3271 = vrot.slane %v2773, 7
      %v3272 = vrot.slane %v2777, 7
      %v3273 = vsel %vm1668, %v3271, %v3272
      %v3274 = vrot.slane %v2783, 7
      %v3275 = vrot.slane %v2787, 7
      %v3276 = vsel %vm1668, %v3274, %v3275
      %v3277 = vrot.slane %v2793, 7
      %v3278 = vrot.slane %v2797, 7
      %v3279 = vsel %vm1668, %v3277, %v3278
      %v3280 = vrot.slane %v2803, 7
      %v3281 = vrot.slane %v2807, 7
      %v3282 = vsel %vm1668, %v3280, %v3281
      %v3283 = vrot.slane %v2813, 7
      %v3284 = vrot.slane %v2817, 7
      %v3285 = vsel %vm1668, %v3283, %v3284
      %v3286 = vrot.slane %v2823, 7
      %v3287 = vrot.slane %v2827, 7
      %v3288 = vsel %vm1668, %v3286, %v3287
      %v3289 = vrot.slane %v2833, 7
      %v3290 = vrot.slane %v2837, 7
      %v3291 = vsel %vm1668, %v3289, %v3290
      %v3292 = vrot.slane %v2843, 7
      %v3293 = vrot.slane %v2847, 7
      %v3294 = vsel %vm1668, %v3292, %v3293
      %v3295 = vrot.slane %v2853, 7
      %v3296 = vrot.slane %v2857, 7
      %v3297 = vsel %vm1668, %v3295, %v3296
      %v3298 = vrot.slane %v2863, 7
      %v3299 = vrot.slane %v2867, 7
      %v3300 = vsel %vm1668, %v3298, %v3299
      %v3301 = vrot.slane %v2873, 7
      %v3302 = vrot.slane %v2877, 7
      %v3303 = vsel %vm1668, %v3301, %v3302
      %v3304 = vrot.slane %v2883, 7
      %v3305 = vrot.slane %v2887, 7
      %v3306 = vsel %vm1668, %v3304, %v3305
      %v3307 = vrot.slane %v2893, 7
      %v3308 = vrot.slane %v2897, 7
      %v3309 = vsel %vm1668, %v3307, %v3308
      %v3310 = vrot.slane %v2903, 7
      %v3311 = vrot.slane %v2907, 7
      %v3312 = vsel %vm1668, %v3310, %v3311
      %v3345 = vsel %vm1668, 0.0, %v3265
      %v3346 = vsel %vm1668, 0.0, %v3268
      %v3347 = vsel %vm1668, 0.0, %v3271
      %v3348 = vsel %vm1668, 0.0, %v3274
      %v3349 = vsel %vm1668, 0.0, %v3277
      %v3350 = vsel %vm1668, 0.0, %v3280
      %v3351 = vsel %vm1668, 0.0, %v3283
      %v3352 = vsel %vm1668, 0.0, %v3286
      %v3353 = vsel %vm1668, 0.0, %v3289
      %v3354 = vsel %vm1668, 0.0, %v3292
      %v3355 = vsel %vm1668, 0.0, %v3295
      %v3356 = vsel %vm1668, 0.0, %v3298
      %v3357 = vsel %vm1668, 0.0, %v3301
      %v3358 = vsel %vm1668, 0.0, %v3304
      %v3359 = vsel %vm1668, 0.0, %v3307
      %v3360 = vsel %vm1668, 0.0, %v3310
      %v3393 = vrot.slane %v3107, 1
      %v3394 = vrot.slane %v3110, 1
      %v3395 = vsel %vm1797, %v3393, %v3394
      %v3396 = vrot.slane %v3115, 1
      %v3397 = vrot.slane %v3118, 1
      %v3398 = vsel %vm1797, %v3396, %v3397
      %v3399 = vrot.slane %v3123, 1
      %v3400 = vrot.slane %v3126, 1
      %v3401 = vsel %vm1797, %v3399, %v3400
      %v3402 = vrot.slane %v3131, 1
      %v3403 = vrot.slane %v3134, 1
      %v3404 = vsel %vm1797, %v3402, %v3403
      %v3405 = vrot.slane %v3139, 1
      %v3406 = vrot.slane %v3142, 1
      %v3407 = vsel %vm1797, %v3405, %v3406
      %v3408 = vrot.slane %v3147, 1
      %v3409 = vrot.slane %v3150, 1
      %v3410 = vsel %vm1797, %v3408, %v3409
      %v3411 = vrot.slane %v3155, 1
      %v3412 = vrot.slane %v3158, 1
      %v3413 = vsel %vm1797, %v3411, %v3412
      %v3414 = vrot.slane %v3163, 1
      %v3415 = vrot.slane %v3166, 1
      %v3416 = vsel %vm1797, %v3414, %v3415
      %v3417 = vrot.slane %v3171, 1
      %v3418 = vrot.slane %v3174, 1
      %v3419 = vsel %vm1797, %v3417, %v3418
      %v3420 = vrot.slane %v3179, 1
      %v3421 = vrot.slane %v3182, 1
      %v3422 = vsel %vm1797, %v3420, %v3421
      %v3423 = vrot.slane %v3187, 1
      %v3424 = vrot.slane %v3190, 1
      %v3425 = vsel %vm1797, %v3423, %v3424
      %v3426 = vrot.slane %v3195, 1
      %v3427 = vrot.slane %v3198, 1
      %v3428 = vsel %vm1797, %v3426, %v3427
      %v3429 = vrot.slane %v3203, 1
      %v3430 = vrot.slane %v3206, 1
      %v3431 = vsel %vm1797, %v3429, %v3430
      %v3432 = vrot.slane %v3211, 1
      %v3433 = vrot.slane %v3214, 1
      %v3434 = vsel %vm1797, %v3432, %v3433
      %v3435 = vrot.slane %v3219, 1
      %v3436 = vrot.slane %v3222, 1
      %v3437 = vsel %vm1797, %v3435, %v3436
      %v3438 = vrot.slane %v3227, 1
      %v3439 = vrot.slane %v3230, 1
      %v3440 = vsel %vm1797, %v3438, %v3439
      %v3473 = vsel %vm1797, %v3394, 0.0
      %v3474 = vsel %vm1797, %v3397, 0.0
      %v3475 = vsel %vm1797, %v3400, 0.0
      %v3476 = vsel %vm1797, %v3403, 0.0
      %v3477 = vsel %vm1797, %v3406, 0.0
      %v3478 = vsel %vm1797, %v3409, 0.0
      %v3479 = vsel %vm1797, %v3412, 0.0
      %v3480 = vsel %vm1797, %v3415, 0.0
      %v3481 = vsel %vm1797, %v3418, 0.0
      %v3482 = vsel %vm1797, %v3421, 0.0
      %v3483 = vsel %vm1797, %v3424, 0.0
      %v3484 = vsel %vm1797, %v3427, 0.0
      %v3485 = vsel %vm1797, %v3430, 0.0
      %v3486 = vsel %vm1797, %v3433, 0.0
      %v3487 = vsel %vm1797, %v3436, 0.0
      %v3488 = vsel %vm1797, %v3439, 0.0
      %v3489 = vadd.f32 %v2755, %v3345
      %v3490 = vadd.f32 %v2759, %v3267
      %v3491 = vadd.f32 %v2765, %v3346
      %v3492 = vadd.f32 %v2769, %v3270
      %v3493 = vadd.f32 %v2775, %v3347
      %v3494 = vadd.f32 %v2779, %v3273
      %v3495 = vadd.f32 %v2785, %v3348
      %v3496 = vadd.f32 %v2789, %v3276
      %v3497 = vadd.f32 %v2795, %v3349
      %v3498 = vadd.f32 %v2799, %v3279
      %v3499 = vadd.f32 %v2805, %v3350
      %v3500 = vadd.f32 %v2809, %v3282
      %v3501 = vadd.f32 %v2815, %v3351
      %v3502 = vadd.f32 %v2819, %v3285
      %v3503 = vadd.f32 %v2825, %v3352
      %v3504 = vadd.f32 %v2829, %v3288
      %v3505 = vadd.f32 %v2835, %v3353
      %v3506 = vadd.f32 %v2839, %v3291
      %v3507 = vadd.f32 %v2845, %v3354
      %v3508 = vadd.f32 %v2849, %v3294
      %v3509 = vadd.f32 %v2855, %v3355
      %v3510 = vadd.f32 %v2859, %v3297
      %v3511 = vadd.f32 %v2865, %v3356
      %v3512 = vadd.f32 %v2869, %v3300
      %v3513 = vadd.f32 %v2875, %v3357
      %v3514 = vadd.f32 %v2879, %v3303
      %v3515 = vadd.f32 %v2885, %v3358
      %v3516 = vadd.f32 %v2889, %v3306
      %v3517 = vadd.f32 %v2895, %v3359
      %v3518 = vadd.f32 %v2899, %v3309
      %v3519 = vadd.f32 %v2905, %v3360
      %v3520 = vadd.f32 %v2909, %v3312
      %v3521 = vadd.f32 %v3489, %v3395
      %v3522 = vadd.f32 %v3490, %v3473
      %v3523 = vadd.f32 %v3491, %v3398
      %v3524 = vadd.f32 %v3492, %v3474
      %v3525 = vadd.f32 %v3493, %v3401
      %v3526 = vadd.f32 %v3494, %v3475
      %v3527 = vadd.f32 %v3495, %v3404
      %v3528 = vadd.f32 %v3496, %v3476
      %v3529 = vadd.f32 %v3497, %v3407
      %v3530 = vadd.f32 %v3498, %v3477
      %v3531 = vadd.f32 %v3499, %v3410
      %v3532 = vadd.f32 %v3500, %v3478
      %v3533 = vadd.f32 %v3501, %v3413
      %v3534 = vadd.f32 %v3502, %v3479
      %v3535 = vadd.f32 %v3503, %v3416
      %v3536 = vadd.f32 %v3504, %v3480
      %v3537 = vadd.f32 %v3505, %v3419
      %v3538 = vadd.f32 %v3506, %v3481
      %v3539 = vadd.f32 %v3507, %v3422
      %v3540 = vadd.f32 %v3508, %v3482
      %v3541 = vadd.f32 %v3509, %v3425
      %v3542 = vadd.f32 %v3510, %v3483
      %v3543 = vadd.f32 %v3511, %v3428
      %v3544 = vadd.f32 %v3512, %v3484
      %v3545 = vadd.f32 %v3513, %v3431
      %v3546 = vadd.f32 %v3514, %v3485
      %v3547 = vadd.f32 %v3515, %v3434
      %v3548 = vadd.f32 %v3516, %v3486
      %v3549 = vadd.f32 %v3517, %v3437
      %v3550 = vadd.f32 %v3518, %v3487
      %v3551 = vadd.f32 %v3519, %v3440
      %v3552 = vadd.f32 %v3520, %v3488
      %v3553 = vld [vmem:[%s4] sm:$0x1]
      %v3555 = vlaneseq
      %v3556 = vshrl.u32 %v3555, 7
      %v3557 = vsub.s32 0, %v3556
      %v3558 = vrot.slane %v3553, %v3557
      %v3560 = vadd.f32 %v3521, %v3558
      %v3561 = vadd.f32 %v3522, %v3558
      %v3562 = vadd.f32 %v3523, %v3558
      %v3563 = vadd.f32 %v3524, %v3558
      %v3564 = vadd.f32 %v3525, %v3558
      %v3565 = vadd.f32 %v3526, %v3558
      %v3566 = vadd.f32 %v3527, %v3558
      %v3567 = vadd.f32 %v3528, %v3558
      %v3568 = vadd.f32 %v3529, %v3558
      %v3569 = vadd.f32 %v3530, %v3558
      %v3570 = vadd.f32 %v3531, %v3558
      %v3571 = vadd.f32 %v3532, %v3558
      %v3572 = vadd.f32 %v3533, %v3558
      %v3573 = vadd.f32 %v3534, %v3558
      %v3574 = vadd.f32 %v3535, %v3558
      %v3575 = vadd.f32 %v3536, %v3558
      %v3576 = vadd.f32 %v3537, %v3558
      %v3577 = vadd.f32 %v3538, %v3558
      %v3578 = vadd.f32 %v3539, %v3558
      %v3579 = vadd.f32 %v3540, %v3558
      %v3580 = vadd.f32 %v3541, %v3558
      %v3581 = vadd.f32 %v3542, %v3558
      %v3582 = vadd.f32 %v3543, %v3558
      %v3583 = vadd.f32 %v3544, %v3558
      %v3584 = vadd.f32 %v3545, %v3558
      %v3585 = vadd.f32 %v3546, %v3558
      %v3586 = vadd.f32 %v3547, %v3558
      %v3587 = vadd.f32 %v3548, %v3558
      %v3588 = vadd.f32 %v3549, %v3558
      %v3589 = vadd.f32 %v3550, %v3558
      %v3590 = vadd.f32 %v3551, %v3558
      %v3591 = vadd.f32 %v3552, %v3558
      %3592 = vst [vmem:[%s313] sm:$0xff] %v3560
      %3593 = vst [vmem:[%s313 + $0x8] sm:$0xff] %v3561
      %3594 = vst [vmem:[%s313 + $0x10] sm:$0xff] %v3562
      %3595 = vst [vmem:[%s313 + $0x18] sm:$0xff] %v3563
      %3596 = vst [vmem:[%s313 + $0x20] sm:$0xff] %v3564
      %3597 = vst [vmem:[%s313 + $0x28] sm:$0xff] %v3565
      %3598 = vst [vmem:[%s313 + $0x30] sm:$0xff] %v3566
      %3599 = vst [vmem:[%s313 + $0x38] sm:$0xff] %v3567
      %3600 = vst [vmem:[%s313 + $0x40] sm:$0xff] %v3568
      %3601 = vst [vmem:[%s313 + $0x48] sm:$0xff] %v3569
      %3602 = vst [vmem:[%s313 + $0x50] sm:$0xff] %v3570
      %3603 = vst [vmem:[%s313 + $0x58] sm:$0xff] %v3571
      %3604 = vst [vmem:[%s313 + $0x60] sm:$0xff] %v3572
      %3605 = vst [vmem:[%s313 + $0x68] sm:$0xff] %v3573
      %3606 = vst [vmem:[%s313 + $0x70] sm:$0xff] %v3574
      %3607 = vst [vmem:[%s313 + $0x78] sm:$0xff] %v3575
      %3608 = vst [vmem:[%s313 + $0x80] sm:$0xff] %v3576
      %3609 = vst [vmem:[%s313 + $0x88] sm:$0xff] %v3577
      %3610 = vst [vmem:[%s313 + $0x90] sm:$0xff] %v3578
      %3611 = vst [vmem:[%s313 + $0x98] sm:$0xff] %v3579
      %3612 = vst [vmem:[%s313 + $0xa0] sm:$0xff] %v3580
      %3613 = vst [vmem:[%s313 + $0xa8] sm:$0xff] %v3581
      %3614 = vst [vmem:[%s313 + $0xb0] sm:$0xff] %v3582
      %3615 = vst [vmem:[%s313 + $0xb8] sm:$0xff] %v3583
      %3616 = vst [vmem:[%s313 + $0xc0] sm:$0xff] %v3584
      %3617 = vst [vmem:[%s313 + $0xc8] sm:$0xff] %v3585
      %3618 = vst [vmem:[%s313 + $0xd0] sm:$0xff] %v3586
      %3619 = vst [vmem:[%s313 + $0xd8] sm:$0xff] %v3587
      %3620 = vst [vmem:[%s313 + $0xe0] sm:$0xff] %v3588
      %3621 = vst [vmem:[%s313 + $0xe8] sm:$0xff] %v3589
      %3622 = vst [vmem:[%s313 + $0xf0] sm:$0xff] %v3590
      %3623 = vst [vmem:[%s313 + $0xf8] sm:$0xff] %v3591
      %v3624 = vpack.c.bf16 %v3561, %v3560
      %v3625 = vpack.c.bf16 %v3563, %v3562
      %v3626 = vpack.c.bf16 %v3565, %v3564
      %v3627 = vpack.c.bf16 %v3567, %v3566
      %v3628 = vpack.c.bf16 %v3569, %v3568
      %v3629 = vpack.c.bf16 %v3571, %v3570
      %v3630 = vpack.c.bf16 %v3573, %v3572
      %v3631 = vpack.c.bf16 %v3575, %v3574
      %v3632 = vpack.c.bf16 %v3577, %v3576
      %v3633 = vpack.c.bf16 %v3579, %v3578
      %v3634 = vpack.c.bf16 %v3581, %v3580
      %v3635 = vpack.c.bf16 %v3583, %v3582
      %v3636 = vpack.c.bf16 %v3585, %v3584
      %v3637 = vpack.c.bf16 %v3587, %v3586
      %v3638 = vpack.c.bf16 %v3589, %v3588
      %v3639 = vpack.c.bf16 %v3591, %v3590
      %v3640 = vld [vmem:[%s5] sm:$0xff]
      %v3641 = vld [vmem:[%s5 + $0x8] sm:$0xf]
      %v3642 = vld [vmem:[%s5 + $0xc] sm:$0xff]
      %v3643 = vld [vmem:[%s5 + $0x14] sm:$0xf]
      %v3644 = vld [vmem:[%s5 + $0x18] sm:$0xff]
      %v3645 = vld [vmem:[%s5 + $0x20] sm:$0xf]
      %v3646 = vld [vmem:[%s5 + $0x24] sm:$0xff]
      %v3647 = vld [vmem:[%s5 + $0x2c] sm:$0xf]
      %v3648 = vld [vmem:[%s5 + $0x30] sm:$0xff]
      %v3649 = vld [vmem:[%s5 + $0x38] sm:$0xf]
      %v3650 = vld [vmem:[%s5 + $0x3c] sm:$0xff]
      %v3651 = vld [vmem:[%s5 + $0x44] sm:$0xf]
      %v3652 = vld [vmem:[%s5 + $0x48] sm:$0xff]
      %v3653 = vld [vmem:[%s5 + $0x50] sm:$0xf]
      %v3654 = vld [vmem:[%s5 + $0x54] sm:$0xff]
      %v3655 = vld [vmem:[%s5 + $0x5c] sm:$0xf]
      %v3656 = vld [vmem:[%s5 + $0x60] sm:$0xff]
      %v3657 = vld [vmem:[%s5 + $0x68] sm:$0xf]
      %v3658 = vld [vmem:[%s5 + $0x6c] sm:$0xff]
      %v3659 = vld [vmem:[%s5 + $0x74] sm:$0xf]
      %v3660 = vld [vmem:[%s5 + $0x78] sm:$0xff]
      %v3661 = vld [vmem:[%s5 + $0x80] sm:$0xf]
      %v3662 = vld [vmem:[%s5 + $0x84] sm:$0xff]
      %v3663 = vld [vmem:[%s5 + $0x8c] sm:$0xf]
      %v3664 = vld [vmem:[%s5 + $0x90] sm:$0xff]
      %v3665 = vld [vmem:[%s5 + $0x98] sm:$0xf]
      %v3666 = vld [vmem:[%s5 + $0x9c] sm:$0xff]
      %v3667 = vld [vmem:[%s5 + $0xa4] sm:$0xf]
      %v3668 = vld [vmem:[%s5 + $0xa8] sm:$0xff]
      %v3669 = vld [vmem:[%s5 + $0xb0] sm:$0xf]
      %v3670 = vld [vmem:[%s5 + $0xb4] sm:$0xff]
      %v3671 = vld [vmem:[%s5 + $0xbc] sm:$0xf]
      %v3672 = vld [vmem:[%s5 + $0xc0] sm:$0xff]
      %v3673 = vld [vmem:[%s5 + $0xc8] sm:$0xf]
      %v3674 = vld [vmem:[%s5 + $0xcc] sm:$0xff]
      %v3675 = vld [vmem:[%s5 + $0xd4] sm:$0xf]
      %v3676 = vld [vmem:[%s5 + $0xd8] sm:$0xff]
      %v3677 = vld [vmem:[%s5 + $0xe0] sm:$0xf]
      %v3678 = vld [vmem:[%s5 + $0xe4] sm:$0xff]
      %v3679 = vld [vmem:[%s5 + $0xec] sm:$0xf]
      %v3680 = vld [vmem:[%s5 + $0xf0] sm:$0xff]
      %v3681 = vld [vmem:[%s5 + $0xf8] sm:$0xf]
      %v3682 = vld [vmem:[%s5 + $0xfc] sm:$0xff]
      %v3683 = vld [vmem:[%s5 + $0x104] sm:$0xf]
      %v3684 = vld [vmem:[%s5 + $0x108] sm:$0xff]
      %v3685 = vld [vmem:[%s5 + $0x110] sm:$0xf]
      %v3686 = vld [vmem:[%s5 + $0x114] sm:$0xff]
      %v3687 = vld [vmem:[%s5 + $0x11c] sm:$0xf]
      %v3688 = vld [vmem:[%s5 + $0x120] sm:$0xff]
      %v3689 = vld [vmem:[%s5 + $0x128] sm:$0xf]
      %v3690 = vld [vmem:[%s5 + $0x12c] sm:$0xff]
      %v3691 = vld [vmem:[%s5 + $0x134] sm:$0xf]
      %v3692 = vld [vmem:[%s5 + $0x138] sm:$0xff]
      %v3693 = vld [vmem:[%s5 + $0x140] sm:$0xf]
      %v3694 = vld [vmem:[%s5 + $0x144] sm:$0xff]
      %v3695 = vld [vmem:[%s5 + $0x14c] sm:$0xf]
      %v3696 = vld [vmem:[%s5 + $0x150] sm:$0xff]
      %v3697 = vld [vmem:[%s5 + $0x158] sm:$0xf]
      %v3698 = vld [vmem:[%s5 + $0x15c] sm:$0xff]
      %v3699 = vld [vmem:[%s5 + $0x164] sm:$0xf]
      %v3700 = vld [vmem:[%s5 + $0x168] sm:$0xff]
      %v3701 = vld [vmem:[%s5 + $0x170] sm:$0xf]
      %v3702 = vld [vmem:[%s5 + $0x174] sm:$0xff]
      %v3703 = vld [vmem:[%s5 + $0x17c] sm:$0xf]
      %v3704 = vld [vmem:[%s5 + $0x180] sm:$0xff]
      %v3705 = vld [vmem:[%s5 + $0x188] sm:$0xf]
      %v3706 = vld [vmem:[%s5 + $0x18c] sm:$0xff]
      %v3707 = vld [vmem:[%s5 + $0x194] sm:$0xf]
      %v3708 = vld [vmem:[%s5 + $0x198] sm:$0xff]
      %v3709 = vld [vmem:[%s5 + $0x1a0] sm:$0xf]
      %v3710 = vld [vmem:[%s5 + $0x1a4] sm:$0xff]
      %v3711 = vld [vmem:[%s5 + $0x1ac] sm:$0xf]
      %v3712 = vld [vmem:[%s5 + $0x1b0] sm:$0xff]
      %v3713 = vld [vmem:[%s5 + $0x1b8] sm:$0xf]
      %v3714 = vld [vmem:[%s5 + $0x1bc] sm:$0xff]
      %v3715 = vld [vmem:[%s5 + $0x1c4] sm:$0xf]
      %v3716 = vld [vmem:[%s5 + $0x1c8] sm:$0xff]
      %v3717 = vld [vmem:[%s5 + $0x1d0] sm:$0xf]
      %v3718 = vld [vmem:[%s5 + $0x1d4] sm:$0xff]
      %v3719 = vld [vmem:[%s5 + $0x1dc] sm:$0xf]
      %v3720 = vld [vmem:[%s5 + $0x1e0] sm:$0xff]
      %v3721 = vld [vmem:[%s5 + $0x1e8] sm:$0xf]
      %v3722 = vld [vmem:[%s5 + $0x1ec] sm:$0xff]
      %v3723 = vld [vmem:[%s5 + $0x1f4] sm:$0xf]
      %v3724 = vld [vmem:[%s5 + $0x1f8] sm:$0xff]
      %v3725 = vld [vmem:[%s5 + $0x200] sm:$0xf]
      %v3726 = vld [vmem:[%s5 + $0x204] sm:$0xff]
      %v3727 = vld [vmem:[%s5 + $0x20c] sm:$0xf]
      %v3728 = vld [vmem:[%s5 + $0x210] sm:$0xff]
      %v3729 = vld [vmem:[%s5 + $0x218] sm:$0xf]
      %v3730 = vld [vmem:[%s5 + $0x21c] sm:$0xff]
      %v3731 = vld [vmem:[%s5 + $0x224] sm:$0xf]
      %v3732 = vld [vmem:[%s5 + $0x228] sm:$0xff]
      %v3733 = vld [vmem:[%s5 + $0x230] sm:$0xf]
      %v3734 = vld [vmem:[%s5 + $0x234] sm:$0xff]
      %v3735 = vld [vmem:[%s5 + $0x23c] sm:$0xf]
      %v3832 = vunpack.c.l.b16 %v3640
      %v3833 = vunpack.c.h.b16 %v3640
      %v3834 = vunpack.c.l.b16 %v3641
      %v3835 = vunpack.c.l.b16 %v3642
      %v3836 = vunpack.c.h.b16 %v3642
      %v3837 = vunpack.c.l.b16 %v3643
      %v3838 = vunpack.c.l.b16 %v3644
      %v3839 = vunpack.c.h.b16 %v3644
      %v3840 = vunpack.c.l.b16 %v3645
      %v3841 = vunpack.c.l.b16 %v3646
      %v3842 = vunpack.c.h.b16 %v3646
      %v3843 = vunpack.c.l.b16 %v3647
      %v3844 = vunpack.c.l.b16 %v3648
      %v3845 = vunpack.c.h.b16 %v3648
      %v3846 = vunpack.c.l.b16 %v3649
      %v3847 = vunpack.c.l.b16 %v3650
      %v3848 = vunpack.c.h.b16 %v3650
      %v3849 = vunpack.c.l.b16 %v3651
      %v3850 = vunpack.c.l.b16 %v3652
      %v3851 = vunpack.c.h.b16 %v3652
      %v3852 = vunpack.c.l.b16 %v3653
      %v3853 = vunpack.c.l.b16 %v3654
      %v3854 = vunpack.c.h.b16 %v3654
      %v3855 = vunpack.c.l.b16 %v3655
      %v3856 = vunpack.c.l.b16 %v3656
      %v3857 = vunpack.c.h.b16 %v3656
      %v3858 = vunpack.c.l.b16 %v3657
      %v3859 = vunpack.c.l.b16 %v3658
      %v3860 = vunpack.c.h.b16 %v3658
      %v3861 = vunpack.c.l.b16 %v3659
      %v3862 = vunpack.c.l.b16 %v3660
      %v3863 = vunpack.c.h.b16 %v3660
      %v3864 = vunpack.c.l.b16 %v3661
      %v3865 = vunpack.c.l.b16 %v3662
      %v3866 = vunpack.c.h.b16 %v3662
      %v3867 = vunpack.c.l.b16 %v3663
      %v3868 = vunpack.c.l.b16 %v3664
      %v3869 = vunpack.c.h.b16 %v3664
      %v3870 = vunpack.c.l.b16 %v3665
      %v3871 = vunpack.c.l.b16 %v3666
      %v3872 = vunpack.c.h.b16 %v3666
      %v3873 = vunpack.c.l.b16 %v3667
      %v3874 = vunpack.c.l.b16 %v3668
      %v3875 = vunpack.c.h.b16 %v3668
      %v3876 = vunpack.c.l.b16 %v3669
      %v3877 = vunpack.c.l.b16 %v3670
      %v3878 = vunpack.c.h.b16 %v3670
      %v3879 = vunpack.c.l.b16 %v3671
      %v3880 = vunpack.c.l.b16 %v3672
      %v3881 = vunpack.c.h.b16 %v3672
      %v3882 = vunpack.c.l.b16 %v3673
      %v3883 = vunpack.c.l.b16 %v3674
      %v3884 = vunpack.c.h.b16 %v3674
      %v3885 = vunpack.c.l.b16 %v3675
      %v3886 = vunpack.c.l.b16 %v3676
      %v3887 = vunpack.c.h.b16 %v3676
      %v3888 = vunpack.c.l.b16 %v3677
      %v3889 = vunpack.c.l.b16 %v3678
      %v3890 = vunpack.c.h.b16 %v3678
      %v3891 = vunpack.c.l.b16 %v3679
      %v3892 = vunpack.c.l.b16 %v3680
      %v3893 = vunpack.c.h.b16 %v3680
      %v3894 = vunpack.c.l.b16 %v3681
      %v3895 = vunpack.c.l.b16 %v3682
      %v3896 = vunpack.c.h.b16 %v3682
      %v3897 = vunpack.c.l.b16 %v3683
      %v3898 = vunpack.c.l.b16 %v3684
      %v3899 = vunpack.c.h.b16 %v3684
      %v3900 = vunpack.c.l.b16 %v3685
      %v3901 = vunpack.c.l.b16 %v3686
      %v3902 = vunpack.c.h.b16 %v3686
      %v3903 = vunpack.c.l.b16 %v3687
      %v3904 = vunpack.c.l.b16 %v3688
      %v3905 = vunpack.c.h.b16 %v3688
      %v3906 = vunpack.c.l.b16 %v3689
      %v3907 = vunpack.c.l.b16 %v3690
      %v3908 = vunpack.c.h.b16 %v3690
      %v3909 = vunpack.c.l.b16 %v3691
      %v3910 = vunpack.c.l.b16 %v3692
      %v3911 = vunpack.c.h.b16 %v3692
      %v3912 = vunpack.c.l.b16 %v3693
      %v3913 = vunpack.c.l.b16 %v3694
      %v3914 = vunpack.c.h.b16 %v3694
      %v3915 = vunpack.c.l.b16 %v3695
      %v3916 = vunpack.c.l.b16 %v3696
      %v3917 = vunpack.c.h.b16 %v3696
      %v3918 = vunpack.c.l.b16 %v3697
      %v3919 = vunpack.c.l.b16 %v3698
      %v3920 = vunpack.c.h.b16 %v3698
      %v3921 = vunpack.c.l.b16 %v3699
      %v3922 = vunpack.c.l.b16 %v3700
      %v3923 = vunpack.c.h.b16 %v3700
      %v3924 = vunpack.c.l.b16 %v3701
      %v3925 = vunpack.c.l.b16 %v3702
      %v3926 = vunpack.c.h.b16 %v3702
      %v3927 = vunpack.c.l.b16 %v3703
      %v3928 = vunpack.c.l.b16 %v3704
      %v3929 = vunpack.c.h.b16 %v3704
      %v3930 = vunpack.c.l.b16 %v3705
      %v3931 = vunpack.c.l.b16 %v3706
      %v3932 = vunpack.c.h.b16 %v3706
      %v3933 = vunpack.c.l.b16 %v3707
      %v3934 = vunpack.c.l.b16 %v3708
      %v3935 = vunpack.c.h.b16 %v3708
      %v3936 = vunpack.c.l.b16 %v3709
      %v3937 = vunpack.c.l.b16 %v3710
      %v3938 = vunpack.c.h.b16 %v3710
      %v3939 = vunpack.c.l.b16 %v3711
      %v3940 = vunpack.c.l.b16 %v3712
      %v3941 = vunpack.c.h.b16 %v3712
      %v3942 = vunpack.c.l.b16 %v3713
      %v3943 = vunpack.c.l.b16 %v3714
      %v3944 = vunpack.c.h.b16 %v3714
      %v3945 = vunpack.c.l.b16 %v3715
      %v3946 = vunpack.c.l.b16 %v3716
      %v3947 = vunpack.c.h.b16 %v3716
      %v3948 = vunpack.c.l.b16 %v3717
      %v3949 = vunpack.c.l.b16 %v3718
      %v3950 = vunpack.c.h.b16 %v3718
      %v3951 = vunpack.c.l.b16 %v3719
      %v3952 = vunpack.c.l.b16 %v3720
      %v3953 = vunpack.c.h.b16 %v3720
      %v3954 = vunpack.c.l.b16 %v3721
      %v3955 = vunpack.c.l.b16 %v3722
      %v3956 = vunpack.c.h.b16 %v3722
      %v3957 = vunpack.c.l.b16 %v3723
      %v3958 = vunpack.c.l.b16 %v3724
      %v3959 = vunpack.c.h.b16 %v3724
      %v3960 = vunpack.c.l.b16 %v3725
      %v3961 = vunpack.c.l.b16 %v3726
      %v3962 = vunpack.c.h.b16 %v3726
      %v3963 = vunpack.c.l.b16 %v3727
      %v3964 = vunpack.c.l.b16 %v3728
      %v3965 = vunpack.c.h.b16 %v3728
      %v3966 = vunpack.c.l.b16 %v3729
      %v3967 = vunpack.c.l.b16 %v3730
      %v3968 = vunpack.c.h.b16 %v3730
      %v3969 = vunpack.c.l.b16 %v3731
      %v3970 = vunpack.c.l.b16 %v3732
      %v3971 = vunpack.c.h.b16 %v3732
      %v3972 = vunpack.c.l.b16 %v3733
      %v3973 = vunpack.c.l.b16 %v3734
      %v3974 = vunpack.c.h.b16 %v3734
      %v3975 = vunpack.c.l.b16 %v3735
      %v3976 = vpack.c.b16 %v3835, %v3832
      %v3977 = vpack.c.b16 %v3836, %v3833
      %v3978 = vpack.c.b16 %v3837, %v3834
      %v3979 = vpack.c.b16 %v3841, %v3838
      %v3980 = vpack.c.b16 %v3842, %v3839
      %v3981 = vpack.c.b16 %v3843, %v3840
      %v3982 = vpack.c.b16 %v3847, %v3844
      %v3983 = vpack.c.b16 %v3848, %v3845
      %v3984 = vpack.c.b16 %v3849, %v3846
      %v3985 = vpack.c.b16 %v3853, %v3850
      %v3986 = vpack.c.b16 %v3854, %v3851
      %v3987 = vpack.c.b16 %v3855, %v3852
      %v3988 = vpack.c.b16 %v3859, %v3856
      %v3989 = vpack.c.b16 %v3860, %v3857
      %v3990 = vpack.c.b16 %v3861, %v3858
      %v3991 = vpack.c.b16 %v3865, %v3862
      %v3992 = vpack.c.b16 %v3866, %v3863
      %v3993 = vpack.c.b16 %v3867, %v3864
      %v3994 = vpack.c.b16 %v3871, %v3868
      %v3995 = vpack.c.b16 %v3872, %v3869
      %v3996 = vpack.c.b16 %v3873, %v3870
      %v3997 = vpack.c.b16 %v3877, %v3874
      %v3998 = vpack.c.b16 %v3878, %v3875
      %v3999 = vpack.c.b16 %v3879, %v3876
      %v4000 = vpack.c.b16 %v3883, %v3880
      %v4001 = vpack.c.b16 %v3884, %v3881
      %v4002 = vpack.c.b16 %v3885, %v3882
      %v4003 = vpack.c.b16 %v3889, %v3886
      %v4004 = vpack.c.b16 %v3890, %v3887
      %v4005 = vpack.c.b16 %v3891, %v3888
      %v4006 = vpack.c.b16 %v3895, %v3892
      %v4007 = vpack.c.b16 %v3896, %v3893
      %v4008 = vpack.c.b16 %v3897, %v3894
      %v4009 = vpack.c.b16 %v3901, %v3898
      %v4010 = vpack.c.b16 %v3902, %v3899
      %v4011 = vpack.c.b16 %v3903, %v3900
      %v4012 = vpack.c.b16 %v3907, %v3904
      %v4013 = vpack.c.b16 %v3908, %v3905
      %v4014 = vpack.c.b16 %v3909, %v3906
      %v4015 = vpack.c.b16 %v3913, %v3910
      %v4016 = vpack.c.b16 %v3914, %v3911
      %v4017 = vpack.c.b16 %v3915, %v3912
      %v4018 = vpack.c.b16 %v3919, %v3916
      %v4019 = vpack.c.b16 %v3920, %v3917
      %v4020 = vpack.c.b16 %v3921, %v3918
      %v4021 = vpack.c.b16 %v3925, %v3922
      %v4022 = vpack.c.b16 %v3926, %v3923
      %v4023 = vpack.c.b16 %v3927, %v3924
      %v4024 = vpack.c.b16 %v3931, %v3928
      %v4025 = vpack.c.b16 %v3932, %v3929
      %v4026 = vpack.c.b16 %v3933, %v3930
      %v4027 = vpack.c.b16 %v3937, %v3934
      %v4028 = vpack.c.b16 %v3938, %v3935
      %v4029 = vpack.c.b16 %v3939, %v3936
      %v4030 = vpack.c.b16 %v3943, %v3940
      %v4031 = vpack.c.b16 %v3944, %v3941
      %v4032 = vpack.c.b16 %v3945, %v3942
      %v4033 = vpack.c.b16 %v3949, %v3946
      %v4034 = vpack.c.b16 %v3950, %v3947
      %v4035 = vpack.c.b16 %v3951, %v3948
      %v4036 = vpack.c.b16 %v3955, %v3952
      %v4037 = vpack.c.b16 %v3956, %v3953
      %v4038 = vpack.c.b16 %v3957, %v3954
      %v4039 = vpack.c.b16 %v3961, %v3958
      %v4040 = vpack.c.b16 %v3962, %v3959
      %v4041 = vpack.c.b16 %v3963, %v3960
      %v4042 = vpack.c.b16 %v3967, %v3964
      %v4043 = vpack.c.b16 %v3968, %v3965
      %v4044 = vpack.c.b16 %v3969, %v3966
      %v4045 = vpack.c.b16 %v3973, %v3970
      %v4046 = vpack.c.b16 %v3974, %v3971
      %v4047 = vpack.c.b16 %v3975, %v3972
      %4120 = vmatprep.subr.bf16.mxu0 %v3977
      %4121 = vmatpush1.bf16.msra.mxu0 %v3976
      %4122 = vmatprep.subr.bf16.mxu0 %v3980
      %4123 = vmatpush1.bf16.msra.mxu0 %v3979
      %4124 = vmatprep.subr.bf16.mxu0 %v3983
      %4125 = vmatpush1.bf16.msra.mxu0 %v3982
      %4126 = vmatprep.subr.bf16.mxu0 %v3986
      %4127 = vmatpush1.bf16.msra.mxu0 %v3985
      %4128 = vmatprep.subr.bf16.mxu0 %v3989
      %4129 = vmatpush1.bf16.msra.mxu0 %v3988
      %4130 = vmatprep.subr.bf16.mxu0 %v3992
      %4131 = vmatpush1.bf16.msra.mxu0 %v3991
      %4132 = vmatprep.subr.bf16.mxu0 %v3995
      %4133 = vmatpush1.bf16.msra.mxu0 %v3994
      %4134 = vmatprep.subr.bf16.mxu0 %v3998
      %4135 = vmatpush1.bf16.msra.mxu0 %v3997
      %4136 = vmatprep.subr.bf16.mxu0 %v4001
      %4137 = vmatpush1.bf16.msra.mxu0 %v4000
      %4138 = vmatprep.subr.bf16.mxu0 %v4004
      %4139 = vmatpush1.bf16.msra.mxu0 %v4003
      %4140 = vmatprep.subr.bf16.mxu0 %v4007
      %4141 = vmatpush1.bf16.msra.mxu0 %v4006
      %4142 = vmatprep.subr.bf16.mxu0 %v4010
      %4143 = vmatpush1.bf16.msra.mxu0 %v4009
      %4144 = vmatprep.subr.bf16.mxu0 %v4013
      %4145 = vmatpush1.bf16.msra.mxu0 %v4012
      %4146 = vmatprep.subr.bf16.mxu0 %v4016
      %4147 = vmatpush1.bf16.msra.mxu0 %v4015
      %4148 = vmatprep.subr.bf16.mxu0 %v4019
      %4149 = vmatpush1.bf16.msra.mxu0 %v4018
      %4150 = vmatprep.subr.bf16.mxu0 %v4022
      %4151 = vmatpush1.bf16.msra.mxu0 %v4021
      %4152 = vmatprep.mubr.bf16.mxu0 %v3624
      %4153 = vmatmul.mubr.bf16.gmra.mrb[0].mxu0 0
      %v4154 = vpop.f32.mrb[0].mxu0
      %v4155 = vadd.f32 0.0, %v4154
      %v4156 = vpop.f32.mrb[0].mxu0
      %v4157 = vadd.f32 0.0, %v4156
      %v4158 = vpop.f32.mrb[0].mxu0
      %v4159 = vadd.f32 0.0, %v4158
      %v4160 = vpop.f32.mrb[0].mxu0
      %v4161 = vadd.f32 0.0, %v4160
      %4162 = vmatprep.mubr.bf16.mxu0 %v3625
      %4163 = vmatmul.mubr.bf16.gmra.mrb[0].mxu0 %v3624
      %v4164 = vpop.f32.mrb[0].mxu0
      %v4165 = vadd.f32 0.0, %v4164
      %v4166 = vpop.f32.mrb[0].mxu0
      %v4167 = vadd.f32 0.0, %v4166
      %v4168 = vpop.f32.mrb[0].mxu0
      %v4169 = vadd.f32 0.0, %v4168
      %v4170 = vpop.f32.mrb[0].mxu0
      %v4171 = vadd.f32 0.0, %v4170
      %4172 = vmatprep.mubr.bf16.mxu0 %v3626
      %4173 = vmatmul.mubr.bf16.gmra.mrb[0].mxu0 %v3625
      %v4174 = vpop.f32.mrb[0].mxu0
      %v4175 = vadd.f32 0.0, %v4174
      %v4176 = vpop.f32.mrb[0].mxu0
      %v4177 = vadd.f32 0.0, %v4176
      %v4178 = vpop.f32.mrb[0].mxu0
      %v4179 = vadd.f32 0.0, %v4178
      %v4180 = vpop.f32.mrb[0].mxu0
      %v4181 = vadd.f32 0.0, %v4180
      %4182 = vmatprep.mubr.bf16.mxu0 %v3627
      %4183 = vmatmul.mubr.bf16.gmra.mrb[0].mxu0 %v3626
      %v4184 = vpop.f32.mrb[0].mxu0
      %v4185 = vadd.f32 0.0, %v4184
      %v4186 = vpop.f32.mrb[0].mxu0
      %v4187 = vadd.f32 0.0, %v4186
      %v4188 = vpop.f32.mrb[0].mxu0
      %v4189 = vadd.f32 0.0, %v4188
      %v4190 = vpop.f32.mrb[0].mxu0
      %v4191 = vadd.f32 0.0, %v4190
      %4192 = vmatprep.mubr.bf16.mxu0 %v3628
      %4193 = vmatmul.mubr.bf16.gmra.mrb[0].mxu0 %v3627
      %v4194 = vpop.f32.mrb[0].mxu0
      %v4195 = vadd.f32 0.0, %v4194
      %v4196 = vpop.f32.mrb[0].mxu0
      %v4197 = vadd.f32 0.0, %v4196
      %v4198 = vpop.f32.mrb[0].mxu0
      %v4199 = vadd.f32 0.0, %v4198
      %v4200 = vpop.f32.mrb[0].mxu0
      %v4201 = vadd.f32 0.0, %v4200
      %4202 = vmatprep.mubr.bf16.mxu0 %v3629
      %4203 = vmatmul.mubr.bf16.gmra.mrb[0].mxu0 %v3628
      %v4204 = vpop.f32.mrb[0].mxu0
      %v4205 = vadd.f32 0.0, %v4204
      %v4206 = vpop.f32.mrb[0].mxu0
      %v4207 = vadd.f32 0.0, %v4206
      %v4208 = vpop.f32.mrb[0].mxu0
      %v4209 = vadd.f32 0.0, %v4208
      %v4210 = vpop.f32.mrb[0].mxu0
      %v4211 = vadd.f32 0.0, %v4210
      %4212 = vmatprep.mubr.bf16.mxu0 %v3630
      %4213 = vmatmul.mubr.bf16.gmra.mrb[0].mxu0 %v3629
      %v4214 = vpop.f32.mrb[0].mxu0
      %v4215 = vadd.f32 0.0, %v4214
      %v4216 = vpop.f32.mrb[0].mxu0
      %v4217 = vadd.f32 0.0, %v4216
      %v4218 = vpop.f32.mrb[0].mxu0
      %v4219 = vadd.f32 0.0, %v4218
      %v4220 = vpop.f32.mrb[0].mxu0
      %v4221 = vadd.f32 0.0, %v4220
      %4222 = vmatprep.mubr.bf16.mxu0 %v3631
      %4223 = vmatmul.mubr.bf16.gmra.mrb[0].mxu0 %v3630
      %v4224 = vpop.f32.mrb[0].mxu0
      %v4225 = vadd.f32 0.0, %v4224
      %v4226 = vpop.f32.mrb[0].mxu0
      %v4227 = vadd.f32 0.0, %v4226
      %v4228 = vpop.f32.mrb[0].mxu0
      %v4229 = vadd.f32 0.0, %v4228
      %v4230 = vpop.f32.mrb[0].mxu0
      %v4231 = vadd.f32 0.0, %v4230
      %4232 = vmatprep.mubr.bf16.mxu0 %v3632
      %4233 = vmatmul.mubr.bf16.gmra.mrb[0].mxu0 %v3631
      %v4234 = vpop.f32.mrb[0].mxu0
      %v4235 = vadd.f32 0.0, %v4234
      %v4236 = vpop.f32.mrb[0].mxu0
      %v4237 = vadd.f32 0.0, %v4236
      %v4238 = vpop.f32.mrb[0].mxu0
      %v4239 = vadd.f32 0.0, %v4238
      %v4240 = vpop.f32.mrb[0].mxu0
      %v4241 = vadd.f32 0.0, %v4240
      %4242 = vmatprep.mubr.bf16.mxu0 %v3633
      %4243 = vmatmul.mubr.bf16.gmra.mrb[0].mxu0 %v3632
      %v4244 = vpop.f32.mrb[0].mxu0
      %v4245 = vadd.f32 0.0, %v4244
      %v4246 = vpop.f32.mrb[0].mxu0
      %v4247 = vadd.f32 0.0, %v4246
      %v4248 = vpop.f32.mrb[0].mxu0
      %v4249 = vadd.f32 0.0, %v4248
      %v4250 = vpop.f32.mrb[0].mxu0
      %v4251 = vadd.f32 0.0, %v4250
      %4252 = vmatprep.mubr.bf16.mxu0 %v3634
      %4253 = vmatmul.mubr.bf16.gmra.mrb[0].mxu0 %v3633
      %v4254 = vpop.f32.mrb[0].mxu0
      %v4255 = vadd.f32 0.0, %v4254
      %v4256 = vpop.f32.mrb[0].mxu0
      %v4257 = vadd.f32 0.0, %v4256
      %v4258 = vpop.f32.mrb[0].mxu0
      %v4259 = vadd.f32 0.0, %v4258
      %v4260 = vpop.f32.mrb[0].mxu0
      %v4261 = vadd.f32 0.0, %v4260
      %4262 = vmatprep.mubr.bf16.mxu0 %v3635
      %4263 = vmatmul.mubr.bf16.gmra.mrb[0].mxu0 %v3634
      %v4264 = vpop.f32.mrb[0].mxu0
      %v4265 = vadd.f32 0.0, %v4264
      %v4266 = vpop.f32.mrb[0].mxu0
      %v4267 = vadd.f32 0.0, %v4266
      %v4268 = vpop.f32.mrb[0].mxu0
      %v4269 = vadd.f32 0.0, %v4268
      %v4270 = vpop.f32.mrb[0].mxu0
      %v4271 = vadd.f32 0.0, %v4270
      %4272 = vmatprep.mubr.bf16.mxu0 %v3636
      %4273 = vmatmul.mubr.bf16.gmra.mrb[0].mxu0 %v3635
      %v4274 = vpop.f32.mrb[0].mxu0
      %v4275 = vadd.f32 0.0, %v4274
      %v4276 = vpop.f32.mrb[0].mxu0
      %v4277 = vadd.f32 0.0, %v4276
      %v4278 = vpop.f32.mrb[0].mxu0
      %v4279 = vadd.f32 0.0, %v4278
      %v4280 = vpop.f32.mrb[0].mxu0
      %v4281 = vadd.f32 0.0, %v4280
      %4282 = vmatprep.mubr.bf16.mxu0 %v3637
      %4283 = vmatmul.mubr.bf16.gmra.mrb[0].mxu0 %v3636
      %v4284 = vpop.f32.mrb[0].mxu0
      %v4285 = vadd.f32 0.0, %v4284
      %v4286 = vpop.f32.mrb[0].mxu0
      %v4287 = vadd.f32 0.0, %v4286
      %v4288 = vpop.f32.mrb[0].mxu0
      %v4289 = vadd.f32 0.0, %v4288
      %v4290 = vpop.f32.mrb[0].mxu0
      %v4291 = vadd.f32 0.0, %v4290
      %4292 = vmatprep.mubr.bf16.mxu0 %v3638
      %4293 = vmatmul.mubr.bf16.gmra.mrb[0].mxu0 %v3637
      %v4294 = vpop.f32.mrb[0].mxu0
      %v4295 = vadd.f32 0.0, %v4294
      %v4296 = vpop.f32.mrb[0].mxu0
      %v4297 = vadd.f32 0.0, %v4296
      %v4298 = vpop.f32.mrb[0].mxu0
      %v4299 = vadd.f32 0.0, %v4298
      %v4300 = vpop.f32.mrb[0].mxu0
      %v4301 = vadd.f32 0.0, %v4300
      %4302 = vmatprep.mubr.bf16.mxu0 %v3639
      %4303 = vmatmul.mubr.bf16.gmra.mrb[0].mxu0 %v3638
      %v4304 = vpop.f32.mrb[0].mxu0
      %v4305 = vadd.f32 0.0, %v4304
      %v4306 = vpop.f32.mrb[0].mxu0
      %v4307 = vadd.f32 0.0, %v4306
      %v4308 = vpop.f32.mrb[0].mxu0
      %v4309 = vadd.f32 0.0, %v4308
      %v4310 = vpop.f32.mrb[0].mxu0
      %v4311 = vadd.f32 0.0, %v4310
      %4312 = vdwg.mxu0
      %4313 = vmatprep.subr.bf16.mxu0 %v4025
      %4314 = vmatpush1.bf16.msra.mxu0 %v4024
      %4315 = vmatprep.subr.bf16.mxu0 %v4028
      %4316 = vmatpush1.bf16.msra.mxu0 %v4027
      %4317 = vmatprep.subr.bf16.mxu0 %v4031
      %4318 = vmatpush1.bf16.msra.mxu0 %v4030
      %4319 = vmatprep.subr.bf16.mxu0 %v4034
      %4320 = vmatpush1.bf16.msra.mxu0 %v4033
      %4321 = vmatprep.subr.bf16.mxu0 %v4037
      %4322 = vmatpush1.bf16.msra.mxu0 %v4036
      %4323 = vmatprep.subr.bf16.mxu0 %v4040
      %4324 = vmatpush1.bf16.msra.mxu0 %v4039
      %4325 = vmatprep.subr.bf16.mxu0 %v4043
      %4326 = vmatpush1.bf16.msra.mxu0 %v4042
      %4327 = vmatprep.subr.bf16.mxu0 %v4046
      %4328 = vmatpush1.bf16.msra.mxu0 %v4045
      %4329 = vmatprep.subr.bf16.mxu0 0
      %4330 = vmatpush1.bf16.msra.mxu0 0
      %4331 = vmatprep.subr.bf16.mxu0 0
      %4332 = vmatpush1.bf16.msra.mxu0 0
      %4333 = vmatprep.subr.bf16.mxu0 0
      %4334 = vmatpush1.bf16.msra.mxu0 0
      %4335 = vmatprep.subr.bf16.mxu0 0
      %4336 = vmatpush1.bf16.msra.mxu0 0
      %4337 = vmatprep.subr.bf16.mxu0 0
      %4338 = vmatpush1.bf16.msra.mxu0 0
      %4339 = vmatprep.subr.bf16.mxu0 0
      %4340 = vmatpush1.bf16.msra.mxu0 0
      %4341 = vmatprep.subr.bf16.mxu0 0
      %4342 = vmatpush1.bf16.msra.mxu0 0
      %4343 = vmatprep.subr.bf16.mxu0 0
      %4344 = vmatpush1.bf16.msra.mxu0 0
      %4345 = vmatprep.mubr.bf16.mxu0 0
      %4346 = vmatmul.mubr.bf16.gmra.mrb[0].mxu0 %v3625
      %v4347 = vpop.f32.mrb[0].mxu0
      %v4348 = vadd.f32 %v4155, %v4347
      %v4349 = vpop.f32.mrb[0].mxu0
      %v4350 = vadd.f32 %v4157, %v4349
      %v4351 = vpop.f32.mrb[0].mxu0
      %v4352 = vadd.f32 %v4159, %v4351
      %v4353 = vpop.f32.mrb[0].mxu0
      %v4354 = vadd.f32 %v4161, %v4353
      %4355 = vmatprep.mubr.bf16.mxu0 0
      %4356 = vmatmul.mubr.bf16.gmra.mrb[0].mxu0 %v3626
      %v4357 = vpop.f32.mrb[0].mxu0
      %v4358 = vadd.f32 %v4165, %v4357
      %v4359 = vpop.f32.mrb[0].mxu0
      %v4360 = vadd.f32 %v4167, %v4359
      %v4361 = vpop.f32.mrb[0].mxu0
      %v4362 = vadd.f32 %v4169, %v4361
      %v4363 = vpop.f32.mrb[0].mxu0
      %v4364 = vadd.f32 %v4171, %v4363
      %4365 = vmatprep.mubr.bf16.mxu0 0
      %4366 = vmatmul.mubr.bf16.gmra.mrb[0].mxu0 %v3627
      %v4367 = vpop.f32.mrb[0].mxu0
      %v4368 = vadd.f32 %v4175, %v4367
      %v4369 = vpop.f32.mrb[0].mxu0
      %v4370 = vadd.f32 %v4177, %v4369
      %v4371 = vpop.f32.mrb[0].mxu0
      %v4372 = vadd.f32 %v4179, %v4371
      %v4373 = vpop.f32.mrb[0].mxu0
      %v4374 = vadd.f32 %v4181, %v4373
      %4375 = vmatprep.mubr.bf16.mxu0 0
      %4376 = vmatmul.mubr.bf16.gmra.mrb[0].mxu0 %v3628
      %v4377 = vpop.f32.mrb[0].mxu0
      %v4378 = vadd.f32 %v4185, %v4377
      %v4379 = vpop.f32.mrb[0].mxu0
      %v4380 = vadd.f32 %v4187, %v4379
      %v4381 = vpop.f32.mrb[0].mxu0
      %v4382 = vadd.f32 %v4189, %v4381
      %v4383 = vpop.f32.mrb[0].mxu0
      %v4384 = vadd.f32 %v4191, %v4383
      %4385 = vmatprep.mubr.bf16.mxu0 0
      %4386 = vmatmul.mubr.bf16.gmra.mrb[0].mxu0 %v3629
      %v4387 = vpop.f32.mrb[0].mxu0
      %v4388 = vadd.f32 %v4195, %v4387
      %v4389 = vpop.f32.mrb[0].mxu0
      %v4390 = vadd.f32 %v4197, %v4389
      %v4391 = vpop.f32.mrb[0].mxu0
      %v4392 = vadd.f32 %v4199, %v4391
      %v4393 = vpop.f32.mrb[0].mxu0
      %v4394 = vadd.f32 %v4201, %v4393
      %4395 = vmatprep.mubr.bf16.mxu0 0
      %4396 = vmatmul.mubr.bf16.gmra.mrb[0].mxu0 %v3630
      %v4397 = vpop.f32.mrb[0].mxu0
      %v4398 = vadd.f32 %v4205, %v4397
      %v4399 = vpop.f32.mrb[0].mxu0
      %v4400 = vadd.f32 %v4207, %v4399
      %v4401 = vpop.f32.mrb[0].mxu0
      %v4402 = vadd.f32 %v4209, %v4401
      %v4403 = vpop.f32.mrb[0].mxu0
      %v4404 = vadd.f32 %v4211, %v4403
      %4405 = vmatprep.mubr.bf16.mxu0 0
      %4406 = vmatmul.mubr.bf16.gmra.mrb[0].mxu0 %v3631
      %v4407 = vpop.f32.mrb[0].mxu0
      %v4408 = vadd.f32 %v4215, %v4407
      %v4409 = vpop.f32.mrb[0].mxu0
      %v4410 = vadd.f32 %v4217, %v4409
      %v4411 = vpop.f32.mrb[0].mxu0
      %v4412 = vadd.f32 %v4219, %v4411
      %v4413 = vpop.f32.mrb[0].mxu0
      %v4414 = vadd.f32 %v4221, %v4413
      %4415 = vmatprep.mubr.bf16.mxu0 0
      %4416 = vmatmul.mubr.bf16.gmra.mrb[0].mxu0 %v3632
      %v4417 = vpop.f32.mrb[0].mxu0
      %v4418 = vadd.f32 %v4225, %v4417
      %v4419 = vpop.f32.mrb[0].mxu0
      %v4420 = vadd.f32 %v4227, %v4419
      %v4421 = vpop.f32.mrb[0].mxu0
      %v4422 = vadd.f32 %v4229, %v4421
      %v4423 = vpop.f32.mrb[0].mxu0
      %v4424 = vadd.f32 %v4231, %v4423
      %4425 = vmatprep.mubr.bf16.mxu0 0
      %4426 = vmatmul.mubr.bf16.gmra.mrb[0].mxu0 %v3633
      %v4427 = vpop.f32.mrb[0].mxu0
      %v4428 = vadd.f32 %v4235, %v4427
      %v4429 = vpop.f32.mrb[0].mxu0
      %v4430 = vadd.f32 %v4237, %v4429
      %v4431 = vpop.f32.mrb[0].mxu0
      %v4432 = vadd.f32 %v4239, %v4431
      %v4433 = vpop.f32.mrb[0].mxu0
      %v4434 = vadd.f32 %v4241, %v4433
      %4435 = vmatprep.mubr.bf16.mxu0 0
      %4436 = vmatmul.mubr.bf16.gmra.mrb[0].mxu0 %v3634
      %v4437 = vpop.f32.mrb[0].mxu0
      %v4438 = vadd.f32 %v4245, %v4437
      %v4439 = vpop.f32.mrb[0].mxu0
      %v4440 = vadd.f32 %v4247, %v4439
      %v4441 = vpop.f32.mrb[0].mxu0
      %v4442 = vadd.f32 %v4249, %v4441
      %v4443 = vpop.f32.mrb[0].mxu0
      %v4444 = vadd.f32 %v4251, %v4443
      %4445 = vmatprep.mubr.bf16.mxu0 0
      %4446 = vmatmul.mubr.bf16.gmra.mrb[0].mxu0 %v3635
      %v4447 = vpop.f32.mrb[0].mxu0
      %v4448 = vadd.f32 %v4255, %v4447
      %v4449 = vpop.f32.mrb[0].mxu0
      %v4450 = vadd.f32 %v4257, %v4449
      %v4451 = vpop.f32.mrb[0].mxu0
      %v4452 = vadd.f32 %v4259, %v4451
      %v4453 = vpop.f32.mrb[0].mxu0
      %v4454 = vadd.f32 %v4261, %v4453
      %4455 = vmatprep.mubr.bf16.mxu0 0
      %4456 = vmatmul.mubr.bf16.gmra.mrb[0].mxu0 %v3636
      %v4457 = vpop.f32.mrb[0].mxu0
      %v4458 = vadd.f32 %v4265, %v4457
      %v4459 = vpop.f32.mrb[0].mxu0
      %v4460 = vadd.f32 %v4267, %v4459
      %v4461 = vpop.f32.mrb[0].mxu0
      %v4462 = vadd.f32 %v4269, %v4461
      %v4463 = vpop.f32.mrb[0].mxu0
      %v4464 = vadd.f32 %v4271, %v4463
      %4465 = vmatprep.mubr.bf16.mxu0 0
      %4466 = vmatmul.mubr.bf16.gmra.mrb[0].mxu0 %v3637
      %v4467 = vpop.f32.mrb[0].mxu0
      %v4468 = vadd.f32 %v4275, %v4467
      %v4469 = vpop.f32.mrb[0].mxu0
      %v4470 = vadd.f32 %v4277, %v4469
      %v4471 = vpop.f32.mrb[0].mxu0
      %v4472 = vadd.f32 %v4279, %v4471
      %v4473 = vpop.f32.mrb[0].mxu0
      %v4474 = vadd.f32 %v4281, %v4473
      %4475 = vmatprep.mubr.bf16.mxu0 0
      %4476 = vmatmul.mubr.bf16.gmra.mrb[0].mxu0 %v3638
      %v4477 = vpop.f32.mrb[0].mxu0
      %v4478 = vadd.f32 %v4285, %v4477
      %v4479 = vpop.f32.mrb[0].mxu0
      %v4480 = vadd.f32 %v4287, %v4479
      %v4481 = vpop.f32.mrb[0].mxu0
      %v4482 = vadd.f32 %v4289, %v4481
      %v4483 = vpop.f32.mrb[0].mxu0
      %v4484 = vadd.f32 %v4291, %v4483
      %4485 = vmatprep.mubr.bf16.mxu0 0
      %4486 = vmatmul.mubr.bf16.gmra.mrb[0].mxu0 %v3639
      %v4487 = vpop.f32.mrb[0].mxu0
      %v4488 = vadd.f32 %v4295, %v4487
      %v4489 = vpop.f32.mrb[0].mxu0
      %v4490 = vadd.f32 %v4297, %v4489
      %v4491 = vpop.f32.mrb[0].mxu0
      %v4492 = vadd.f32 %v4299, %v4491
      %v4493 = vpop.f32.mrb[0].mxu0
      %v4494 = vadd.f32 %v4301, %v4493
      %4495 = vmatprep.mubr.bf16.mxu0 0
      %4496 = vmatmul.mubr.bf16.gmra.mrb[0].mxu0 0
      %v4497 = vpop.f32.mrb[0].mxu0
      %v4498 = vadd.f32 %v4305, %v4497
      %v4499 = vpop.f32.mrb[0].mxu0
      %v4500 = vadd.f32 %v4307, %v4499
      %v4501 = vpop.f32.mrb[0].mxu0
      %v4502 = vadd.f32 %v4309, %v4501
      %v4503 = vpop.f32.mrb[0].mxu0
      %v4504 = vadd.f32 %v4311, %v4503
      %4505 = vdwg.mxu0
      %4506 = vmatprep.subr.bf16.mxu0 0
      %4507 = vmatpush1.bf16.msra.mxu0 %v3978
      %4508 = vmatprep.subr.bf16.mxu0 0
      %4509 = vmatpush1.bf16.msra.mxu0 %v3981
      %4510 = vmatprep.subr.bf16.mxu0 0
      %4511 = vmatpush1.bf16.msra.mxu0 %v3984
      %4512 = vmatprep.subr.bf16.mxu0 0
      %4513 = vmatpush1.bf16.msra.mxu0 %v3987
      %4514 = vmatprep.subr.bf16.mxu0 0
      %4515 = vmatpush1.bf16.msra.mxu0 %v3990
      %4516 = vmatprep.subr.bf16.mxu0 0
      %4517 = vmatpush1.bf16.msra.mxu0 %v3993
      %4518 = vmatprep.subr.bf16.mxu0 0
      %4519 = vmatpush1.bf16.msra.mxu0 %v3996
      %4520 = vmatprep.subr.bf16.mxu0 0
      %4521 = vmatpush1.bf16.msra.mxu0 %v3999
      %4522 = vmatprep.subr.bf16.mxu0 0
      %4523 = vmatpush1.bf16.msra.mxu0 %v4002
      %4524 = vmatprep.subr.bf16.mxu0 0
      %4525 = vmatpush1.bf16.msra.mxu0 %v4005
      %4526 = vmatprep.subr.bf16.mxu0 0
      %4527 = vmatpush1.bf16.msra.mxu0 %v4008
      %4528 = vmatprep.subr.bf16.mxu0 0
      %4529 = vmatpush1.bf16.msra.mxu0 %v4011
      %4530 = vmatprep.subr.bf16.mxu0 0
      %4531 = vmatpush1.bf16.msra.mxu0 %v4014
      %4532 = vmatprep.subr.bf16.mxu0 0
      %4533 = vmatpush1.bf16.msra.mxu0 %v4017
      %4534 = vmatprep.subr.bf16.mxu0 0
      %4535 = vmatpush1.bf16.msra.mxu0 %v4020
      %4536 = vmatprep.subr.bf16.mxu0 0
      %4537 = vmatpush1.bf16.msra.mxu0 %v4023
      %4538 = vmatprep.mubr.bf16.mxu0 %v3624
      %4539 = vmatmul.mubr.bf16.gmra.mrb[0].mxu0 0
      %v4540 = vpop.f32.mrb[0].mxu0
      %v4541 = vadd.f32 0.0, %v4540
      %v4542 = vpop.f32.mrb[0].mxu0
      %v4543 = vpop.f32.mrb[0].mxu0
      %v4544 = vadd.f32 0.0, %v4543
      %v4545 = vpop.f32.mrb[0].mxu0
      %4546 = vmatprep.mubr.bf16.mxu0 %v3625
      %4547 = vmatmul.mubr.bf16.gmra.mrb[0].mxu0 %v3624
      %v4548 = vpop.f32.mrb[0].mxu0
      %v4549 = vadd.f32 0.0, %v4548
      %v4550 = vpop.f32.mrb[0].mxu0
      %v4551 = vpop.f32.mrb[0].mxu0
      %v4552 = vadd.f32 0.0, %v4551
      %v4553 = vpop.f32.mrb[0].mxu0
      %4554 = vmatprep.mubr.bf16.mxu0 %v3626
      %4555 = vmatmul.mubr.bf16.gmra.mrb[0].mxu0 %v3625
      %v4556 = vpop.f32.mrb[0].mxu0
      %v4557 = vadd.f32 0.0, %v4556
      %v4558 = vpop.f32.mrb[0].mxu0
      %v4559 = vpop.f32.mrb[0].mxu0
      %v4560 = vadd.f32 0.0, %v4559
      %v4561 = vpop.f32.mrb[0].mxu0
      %4562 = vmatprep.mubr.bf16.mxu0 %v3627
      %4563 = vmatmul.mubr.bf16.gmra.mrb[0].mxu0 %v3626
      %v4564 = vpop.f32.mrb[0].mxu0
      %v4565 = vadd.f32 0.0, %v4564
      %v4566 = vpop.f32.mrb[0].mxu0
      %v4567 = vpop.f32.mrb[0].mxu0
      %v4568 = vadd.f32 0.0, %v4567
      %v4569 = vpop.f32.mrb[0].mxu0
      %4570 = vmatprep.mubr.bf16.mxu0 %v3628
      %4571 = vmatmul.mubr.bf16.gmra.mrb[0].mxu0 %v3627
      %v4572 = vpop.f32.mrb[0].mxu0
      %v4573 = vadd.f32 0.0, %v4572
      %v4574 = vpop.f32.mrb[0].mxu0
      %v4575 = vpop.f32.mrb[0].mxu0
      %v4576 = vadd.f32 0.0, %v4575
      %v4577 = vpop.f32.mrb[0].mxu0
      %4578 = vmatprep.mubr.bf16.mxu0 %v3629
      %4579 = vmatmul.mubr.bf16.gmra.mrb[0].mxu0 %v3628
      %v4580 = vpop.f32.mrb[0].mxu0
      %v4581 = vadd.f32 0.0, %v4580
      %v4582 = vpop.f32.mrb[0].mxu0
      %v4583 = vpop.f32.mrb[0].mxu0
      %v4584 = vadd.f32 0.0, %v4583
      %v4585 = vpop.f32.mrb[0].mxu0
      %4586 = vmatprep.mubr.bf16.mxu0 %v3630
      %4587 = vmatmul.mubr.bf16.gmra.mrb[0].mxu0 %v3629
      %v4588 = vpop.f32.mrb[0].mxu0
      %v4589 = vadd.f32 0.0, %v4588
      %v4590 = vpop.f32.mrb[0].mxu0
      %v4591 = vpop.f32.mrb[0].mxu0
      %v4592 = vadd.f32 0.0, %v4591
      %v4593 = vpop.f32.mrb[0].mxu0
      %4594 = vmatprep.mubr.bf16.mxu0 %v3631
      %4595 = vmatmul.mubr.bf16.gmra.mrb[0].mxu0 %v3630
      %v4596 = vpop.f32.mrb[0].mxu0
      %v4597 = vadd.f32 0.0, %v4596
      %v4598 = vpop.f32.mrb[0].mxu0
      %v4599 = vpop.f32.mrb[0].mxu0
      %v4600 = vadd.f32 0.0, %v4599
      %v4601 = vpop.f32.mrb[0].mxu0
      %4602 = vmatprep.mubr.bf16.mxu0 %v3632
      %4603 = vmatmul.mubr.bf16.gmra.mrb[0].mxu0 %v3631
      %v4604 = vpop.f32.mrb[0].mxu0
      %v4605 = vadd.f32 0.0, %v4604
      %v4606 = vpop.f32.mrb[0].mxu0
      %v4607 = vpop.f32.mrb[0].mxu0
      %v4608 = vadd.f32 0.0, %v4607
      %v4609 = vpop.f32.mrb[0].mxu0
      %4610 = vmatprep.mubr.bf16.mxu0 %v3633
      %4611 = vmatmul.mubr.bf16.gmra.mrb[0].mxu0 %v3632
      %v4612 = vpop.f32.mrb[0].mxu0
      %v4613 = vadd.f32 0.0, %v4612
      %v4614 = vpop.f32.mrb[0].mxu0
      %v4615 = vpop.f32.mrb[0].mxu0
      %v4616 = vadd.f32 0.0, %v4615
      %v4617 = vpop.f32.mrb[0].mxu0
      %4618 = vmatprep.mubr.bf16.mxu0 %v3634
      %4619 = vmatmul.mubr.bf16.gmra.mrb[0].mxu0 %v3633
      %v4620 = vpop.f32.mrb[0].mxu0
      %v4621 = vadd.f32 0.0, %v4620
      %v4622 = vpop.f32.mrb[0].mxu0
      %v4623 = vpop.f32.mrb[0].mxu0
      %v4624 = vadd.f32 0.0, %v4623
      %v4625 = vpop.f32.mrb[0].mxu0
      %4626 = vmatprep.mubr.bf16.mxu0 %v3635
      %4627 = vmatmul.mubr.bf16.gmra.mrb[0].mxu0 %v3634
      %v4628 = vpop.f32.mrb[0].mxu0
      %v4629 = vadd.f32 0.0, %v4628
      %v4630 = vpop.f32.mrb[0].mxu0
      %v4631 = vpop.f32.mrb[0].mxu0
      %v4632 = vadd.f32 0.0, %v4631
      %v4633 = vpop.f32.mrb[0].mxu0
      %4634 = vmatprep.mubr.bf16.mxu0 %v3636
      %4635 = vmatmul.mubr.bf16.gmra.mrb[0].mxu0 %v3635
      %v4636 = vpop.f32.mrb[0].mxu0
      %v4637 = vadd.f32 0.0, %v4636
      %v4638 = vpop.f32.mrb[0].mxu0
      %v4639 = vpop.f32.mrb[0].mxu0
      %v4640 = vadd.f32 0.0, %v4639
      %v4641 = vpop.f32.mrb[0].mxu0
      %4642 = vmatprep.mubr.bf16.mxu0 %v3637
      %4643 = vmatmul.mubr.bf16.gmra.mrb[0].mxu0 %v3636
      %v4644 = vpop.f32.mrb[0].mxu0
      %v4645 = vadd.f32 0.0, %v4644
      %v4646 = vpop.f32.mrb[0].mxu0
      %v4647 = vpop.f32.mrb[0].mxu0
      %v4648 = vadd.f32 0.0, %v4647
      %v4649 = vpop.f32.mrb[0].mxu0
      %4650 = vmatprep.mubr.bf16.mxu0 %v3638
      %4651 = vmatmul.mubr.bf16.gmra.mrb[0].mxu0 %v3637
      %v4652 = vpop.f32.mrb[0].mxu0
      %v4653 = vadd.f32 0.0, %v4652
      %v4654 = vpop.f32.mrb[0].mxu0
      %v4655 = vpop.f32.mrb[0].mxu0
      %v4656 = vadd.f32 0.0, %v4655
      %v4657 = vpop.f32.mrb[0].mxu0
      %4658 = vmatprep.mubr.bf16.mxu0 %v3639
      %4659 = vmatmul.mubr.bf16.gmra.mrb[0].mxu0 %v3638
      %v4660 = vpop.f32.mrb[0].mxu0
      %v4661 = vadd.f32 0.0, %v4660
      %v4662 = vpop.f32.mrb[0].mxu0
      %v4663 = vpop.f32.mrb[0].mxu0
      %v4664 = vadd.f32 0.0, %v4663
      %v4665 = vpop.f32.mrb[0].mxu0
      %4666 = vdwg.mxu0
      %4667 = vmatprep.subr.bf16.mxu0 0
      %4668 = vmatpush1.bf16.msra.mxu0 %v4026
      %4669 = vmatprep.subr.bf16.mxu0 0
      %4670 = vmatpush1.bf16.msra.mxu0 %v4029
      %4671 = vmatprep.subr.bf16.mxu0 0
      %4672 = vmatpush1.bf16.msra.mxu0 %v4032
      %4673 = vmatprep.subr.bf16.mxu0 0
      %4674 = vmatpush1.bf16.msra.mxu0 %v4035
      %4675 = vmatprep.subr.bf16.mxu0 0
      %4676 = vmatpush1.bf16.msra.mxu0 %v4038
      %4677 = vmatprep.subr.bf16.mxu0 0
      %4678 = vmatpush1.bf16.msra.mxu0 %v4041
      %4679 = vmatprep.subr.bf16.mxu0 0
      %4680 = vmatpush1.bf16.msra.mxu0 %v4044
      %4681 = vmatprep.subr.bf16.mxu0 0
      %4682 = vmatpush1.bf16.msra.mxu0 %v4047
      %4683 = vmatprep.subr.bf16.mxu0 0
      %4684 = vmatpush1.bf16.msra.mxu0 0
      %4685 = vmatprep.subr.bf16.mxu0 0
      %4686 = vmatpush1.bf16.msra.mxu0 0
      %4687 = vmatprep.subr.bf16.mxu0 0
      %4688 = vmatpush1.bf16.msra.mxu0 0
      %4689 = vmatprep.subr.bf16.mxu0 0
      %4690 = vmatpush1.bf16.msra.mxu0 0
      %4691 = vmatprep.subr.bf16.mxu0 0
      %4692 = vmatpush1.bf16.msra.mxu0 0
      %4693 = vmatprep.subr.bf16.mxu0 0
      %4694 = vmatpush1.bf16.msra.mxu0 0
      %4695 = vmatprep.subr.bf16.mxu0 0
      %4696 = vmatpush1.bf16.msra.mxu0 0
      %4697 = vmatprep.subr.bf16.mxu0 0
      %4698 = vmatpush1.bf16.msra.mxu0 0
      %4699 = vmatprep.mubr.bf16.mxu0 0
      %4700 = vmatmul.mubr.bf16.gmra.mrb[0].mxu0 %v3625
      %v4701 = vpop.f32.mrb[0].mxu0
      %v4702 = vadd.f32 %v4541, %v4701
      %v4703 = vpop.f32.mrb[0].mxu0
      %v4704 = vpop.f32.mrb[0].mxu0
      %v4705 = vadd.f32 %v4544, %v4704
      %v4706 = vpop.f32.mrb[0].mxu0
      %4707 = vmatprep.mubr.bf16.mxu0 0
      %4708 = vmatmul.mubr.bf16.gmra.mrb[0].mxu0 %v3626
      %v4709 = vpop.f32.mrb[0].mxu0
      %v4710 = vadd.f32 %v4549, %v4709
      %v4711 = vpop.f32.mrb[0].mxu0
      %v4712 = vpop.f32.mrb[0].mxu0
      %v4713 = vadd.f32 %v4552, %v4712
      %v4714 = vpop.f32.mrb[0].mxu0
      %4715 = vmatprep.mubr.bf16.mxu0 0
      %4716 = vmatmul.mubr.bf16.gmra.mrb[0].mxu0 %v3627
      %v4717 = vpop.f32.mrb[0].mxu0
      %v4718 = vadd.f32 %v4557, %v4717
      %v4719 = vpop.f32.mrb[0].mxu0
      %v4720 = vpop.f32.mrb[0].mxu0
      %v4721 = vadd.f32 %v4560, %v4720
      %v4722 = vpop.f32.mrb[0].mxu0
      %4723 = vmatprep.mubr.bf16.mxu0 0
      %4724 = vmatmul.mubr.bf16.gmra.mrb[0].mxu0 %v3628
      %v4725 = vpop.f32.mrb[0].mxu0
      %v4726 = vadd.f32 %v4565, %v4725
      %v4727 = vpop.f32.mrb[0].mxu0
      %v4728 = vpop.f32.mrb[0].mxu0
      %v4729 = vadd.f32 %v4568, %v4728
      %v4730 = vpop.f32.mrb[0].mxu0
      %4731 = vmatprep.mubr.bf16.mxu0 0
      %4732 = vmatmul.mubr.bf16.gmra.mrb[0].mxu0 %v3629
      %v4733 = vpop.f32.mrb[0].mxu0
      %v4734 = vadd.f32 %v4573, %v4733
      %v4735 = vpop.f32.mrb[0].mxu0
      %v4736 = vpop.f32.mrb[0].mxu0
      %v4737 = vadd.f32 %v4576, %v4736
      %v4738 = vpop.f32.mrb[0].mxu0
      %4739 = vmatprep.mubr.bf16.mxu0 0
      %4740 = vmatmul.mubr.bf16.gmra.mrb[0].mxu0 %v3630
      %v4741 = vpop.f32.mrb[0].mxu0
      %v4742 = vadd.f32 %v4581, %v4741
      %v4743 = vpop.f32.mrb[0].mxu0
      %v4744 = vpop.f32.mrb[0].mxu0
      %v4745 = vadd.f32 %v4584, %v4744
      %v4746 = vpop.f32.mrb[0].mxu0
      %4747 = vmatprep.mubr.bf16.mxu0 0
      %4748 = vmatmul.mubr.bf16.gmra.mrb[0].mxu0 %v3631
      %v4749 = vpop.f32.mrb[0].mxu0
      %v4750 = vadd.f32 %v4589, %v4749
      %v4751 = vpop.f32.mrb[0].mxu0
      %v4752 = vpop.f32.mrb[0].mxu0
      %v4753 = vadd.f32 %v4592, %v4752
      %v4754 = vpop.f32.mrb[0].mxu0
      %4755 = vmatprep.mubr.bf16.mxu0 0
      %4756 = vmatmul.mubr.bf16.gmra.mrb[0].mxu0 %v3632
      %v4757 = vpop.f32.mrb[0].mxu0
      %v4758 = vadd.f32 %v4597, %v4757
      %v4759 = vpop.f32.mrb[0].mxu0
      %v4760 = vpop.f32.mrb[0].mxu0
      %v4761 = vadd.f32 %v4600, %v4760
      %v4762 = vpop.f32.mrb[0].mxu0
      %4763 = vmatprep.mubr.bf16.mxu0 0
      %4764 = vmatmul.mubr.bf16.gmra.mrb[0].mxu0 %v3633
      %v4765 = vpop.f32.mrb[0].mxu0
      %v4766 = vadd.f32 %v4605, %v4765
      %v4767 = vpop.f32.mrb[0].mxu0
      %v4768 = vpop.f32.mrb[0].mxu0
      %v4769 = vadd.f32 %v4608, %v4768
      %v4770 = vpop.f32.mrb[0].mxu0
      %4771 = vmatprep.mubr.bf16.mxu0 0
      %4772 = vmatmul.mubr.bf16.gmra.mrb[0].mxu0 %v3634
      %v4773 = vpop.f32.mrb[0].mxu0
      %v4774 = vadd.f32 %v4613, %v4773
      %v4775 = vpop.f32.mrb[0].mxu0
      %v4776 = vpop.f32.mrb[0].mxu0
      %v4777 = vadd.f32 %v4616, %v4776
      %v4778 = vpop.f32.mrb[0].mxu0
      %4779 = vmatprep.mubr.bf16.mxu0 0
      %4780 = vmatmul.mubr.bf16.gmra.mrb[0].mxu0 %v3635
      %v4781 = vpop.f32.mrb[0].mxu0
      %v4782 = vadd.f32 %v4621, %v4781
      %v4783 = vpop.f32.mrb[0].mxu0
      %v4784 = vpop.f32.mrb[0].mxu0
      %v4785 = vadd.f32 %v4624, %v4784
      %v4786 = vpop.f32.mrb[0].mxu0
      %4787 = vmatprep.mubr.bf16.mxu0 0
      %4788 = vmatmul.mubr.bf16.gmra.mrb[0].mxu0 %v3636
      %v4789 = vpop.f32.mrb[0].mxu0
      %v4790 = vadd.f32 %v4629, %v4789
      %v4791 = vpop.f32.mrb[0].mxu0
      %v4792 = vpop.f32.mrb[0].mxu0
      %v4793 = vadd.f32 %v4632, %v4792
      %v4794 = vpop.f32.mrb[0].mxu0
      %4795 = vmatprep.mubr.bf16.mxu0 0
      %4796 = vmatmul.mubr.bf16.gmra.mrb[0].mxu0 %v3637
      %v4797 = vpop.f32.mrb[0].mxu0
      %v4798 = vadd.f32 %v4637, %v4797
      %v4799 = vpop.f32.mrb[0].mxu0
      %v4800 = vpop.f32.mrb[0].mxu0
      %v4801 = vadd.f32 %v4640, %v4800
      %v4802 = vpop.f32.mrb[0].mxu0
      %4803 = vmatprep.mubr.bf16.mxu0 0
      %4804 = vmatmul.mubr.bf16.gmra.mrb[0].mxu0 %v3638
      %v4805 = vpop.f32.mrb[0].mxu0
      %v4806 = vadd.f32 %v4645, %v4805
      %v4807 = vpop.f32.mrb[0].mxu0
      %v4808 = vpop.f32.mrb[0].mxu0
      %v4809 = vadd.f32 %v4648, %v4808
      %v4810 = vpop.f32.mrb[0].mxu0
      %4811 = vmatprep.mubr.bf16.mxu0 0
      %4812 = vmatmul.mubr.bf16.gmra.mrb[0].mxu0 %v3639
      %v4813 = vpop.f32.mrb[0].mxu0
      %v4814 = vadd.f32 %v4653, %v4813
      %v4815 = vpop.f32.mrb[0].mxu0
      %v4816 = vpop.f32.mrb[0].mxu0
      %v4817 = vadd.f32 %v4656, %v4816
      %v4818 = vpop.f32.mrb[0].mxu0
      %4819 = vmatprep.mubr.bf16.mxu0 0
      %4820 = vmatmul.mubr.bf16.gmra.mrb[0].mxu0 0
      %v4821 = vpop.f32.mrb[0].mxu0
      %v4822 = vadd.f32 %v4661, %v4821
      %v4823 = vpop.f32.mrb[0].mxu0
      %v4824 = vpop.f32.mrb[0].mxu0
      %v4825 = vadd.f32 %v4664, %v4824
      %v4826 = vpop.f32.mrb[0].mxu0
      %4827 = vdwg.mxu0
      %v4860 = vrot.slane %v4348, 7
      %v4861 = vrot.slane %v4352, 7
      %v4862 = vsel %vm1668, %v4860, %v4861
      %v4863 = vrot.slane %v4358, 7
      %v4864 = vrot.slane %v4362, 7
      %v4865 = vsel %vm1668, %v4863, %v4864
      %v4866 = vrot.slane %v4368, 7
      %v4867 = vrot.slane %v4372, 7
      %v4868 = vsel %vm1668, %v4866, %v4867
      %v4869 = vrot.slane %v4378, 7
      %v4870 = vrot.slane %v4382, 7
      %v4871 = vsel %vm1668, %v4869, %v4870
      %v4872 = vrot.slane %v4388, 7
      %v4873 = vrot.slane %v4392, 7
      %v4874 = vsel %vm1668, %v4872, %v4873
      %v4875 = vrot.slane %v4398, 7
      %v4876 = vrot.slane %v4402, 7
      %v4877 = vsel %vm1668, %v4875, %v4876
      %v4878 = vrot.slane %v4408, 7
      %v4879 = vrot.slane %v4412, 7
      %v4880 = vsel %vm1668, %v4878, %v4879
      %v4881 = vrot.slane %v4418, 7
      %v4882 = vrot.slane %v4422, 7
      %v4883 = vsel %vm1668, %v4881, %v4882
      %v4884 = vrot.slane %v4428, 7
      %v4885 = vrot.slane %v4432, 7
      %v4886 = vsel %vm1668, %v4884, %v4885
      %v4887 = vrot.slane %v4438, 7
      %v4888 = vrot.slane %v4442, 7
      %v4889 = vsel %vm1668, %v4887, %v4888
      %v4890 = vrot.slane %v4448, 7
      %v4891 = vrot.slane %v4452, 7
      %v4892 = vsel %vm1668, %v4890, %v4891
      %v4893 = vrot.slane %v4458, 7
      %v4894 = vrot.slane %v4462, 7
      %v4895 = vsel %vm1668, %v4893, %v4894
      %v4896 = vrot.slane %v4468, 7
      %v4897 = vrot.slane %v4472, 7
      %v4898 = vsel %vm1668, %v4896, %v4897
      %v4899 = vrot.slane %v4478, 7
      %v4900 = vrot.slane %v4482, 7
      %v4901 = vsel %vm1668, %v4899, %v4900
      %v4902 = vrot.slane %v4488, 7
      %v4903 = vrot.slane %v4492, 7
      %v4904 = vsel %vm1668, %v4902, %v4903
      %v4905 = vrot.slane %v4498, 7
      %v4906 = vrot.slane %v4502, 7
      %v4907 = vsel %vm1668, %v4905, %v4906
      %v4940 = vsel %vm1668, 0.0, %v4860
      %v4941 = vsel %vm1668, 0.0, %v4863
      %v4942 = vsel %vm1668, 0.0, %v4866
      %v4943 = vsel %vm1668, 0.0, %v4869
      %v4944 = vsel %vm1668, 0.0, %v4872
      %v4945 = vsel %vm1668, 0.0, %v4875
      %v4946 = vsel %vm1668, 0.0, %v4878
      %v4947 = vsel %vm1668, 0.0, %v4881
      %v4948 = vsel %vm1668, 0.0, %v4884
      %v4949 = vsel %vm1668, 0.0, %v4887
      %v4950 = vsel %vm1668, 0.0, %v4890
      %v4951 = vsel %vm1668, 0.0, %v4893
      %v4952 = vsel %vm1668, 0.0, %v4896
      %v4953 = vsel %vm1668, 0.0, %v4899
      %v4954 = vsel %vm1668, 0.0, %v4902
      %v4955 = vsel %vm1668, 0.0, %v4905
      %v4988 = vrot.slane %v4702, 1
      %v4989 = vrot.slane %v4705, 1
      %v4990 = vsel %vm1797, %v4988, %v4989
      %v4991 = vrot.slane %v4710, 1
      %v4992 = vrot.slane %v4713, 1
      %v4993 = vsel %vm1797, %v4991, %v4992
      %v4994 = vrot.slane %v4718, 1
      %v4995 = vrot.slane %v4721, 1
      %v4996 = vsel %vm1797, %v4994, %v4995
      %v4997 = vrot.slane %v4726, 1
      %v4998 = vrot.slane %v4729, 1
      %v4999 = vsel %vm1797, %v4997, %v4998
      %v5000 = vrot.slane %v4734, 1
      %v5001 = vrot.slane %v4737, 1
      %v5002 = vsel %vm1797, %v5000, %v5001
      %v5003 = vrot.slane %v4742, 1
      %v5004 = vrot.slane %v4745, 1
      %v5005 = vsel %vm1797, %v5003, %v5004
      %v5006 = vrot.slane %v4750, 1
      %v5007 = vrot.slane %v4753, 1
      %v5008 = vsel %vm1797, %v5006, %v5007
      %v5009 = vrot.slane %v4758, 1
      %v5010 = vrot.slane %v4761, 1
      %v5011 = vsel %vm1797, %v5009, %v5010
      %v5012 = vrot.slane %v4766, 1
      %v5013 = vrot.slane %v4769, 1
      %v5014 = vsel %vm1797, %v5012, %v5013
      %v5015 = vrot.slane %v4774, 1
      %v5016 = vrot.slane %v4777, 1
      %v5017 = vsel %vm1797, %v5015, %v5016
      %v5018 = vrot.slane %v4782, 1
      %v5019 = vrot.slane %v4785, 1
      %v5020 = vsel %vm1797, %v5018, %v5019
      %v5021 = vrot.slane %v4790, 1
      %v5022 = vrot.slane %v4793, 1
      %v5023 = vsel %vm1797, %v5021, %v5022
      %v5024 = vrot.slane %v4798, 1
      %v5025 = vrot.slane %v4801, 1
      %v5026 = vsel %vm1797, %v5024, %v5025
      %v5027 = vrot.slane %v4806, 1
      %v5028 = vrot.slane %v4809, 1
      %v5029 = vsel %vm1797, %v5027, %v5028
      %v5030 = vrot.slane %v4814, 1
      %v5031 = vrot.slane %v4817, 1
      %v5032 = vsel %vm1797, %v5030, %v5031
      %v5033 = vrot.slane %v4822, 1
      %v5034 = vrot.slane %v4825, 1
      %v5035 = vsel %vm1797, %v5033, %v5034
      %v5068 = vsel %vm1797, %v4989, 0.0
      %v5069 = vsel %vm1797, %v4992, 0.0
      %v5070 = vsel %vm1797, %v4995, 0.0
      %v5071 = vsel %vm1797, %v4998, 0.0
      %v5072 = vsel %vm1797, %v5001, 0.0
      %v5073 = vsel %vm1797, %v5004, 0.0
      %v5074 = vsel %vm1797, %v5007, 0.0
      %v5075 = vsel %vm1797, %v5010, 0.0
      %v5076 = vsel %vm1797, %v5013, 0.0
      %v5077 = vsel %vm1797, %v5016, 0.0
      %v5078 = vsel %vm1797, %v5019, 0.0
      %v5079 = vsel %vm1797, %v5022, 0.0
      %v5080 = vsel %vm1797, %v5025, 0.0
      %v5081 = vsel %vm1797, %v5028, 0.0
      %v5082 = vsel %vm1797, %v5031, 0.0
      %v5083 = vsel %vm1797, %v5034, 0.0
      %v5084 = vadd.f32 %v4350, %v4940
      %v5085 = vadd.f32 %v4354, %v4862
      %v5086 = vadd.f32 %v4360, %v4941
      %v5087 = vadd.f32 %v4364, %v4865
      %v5088 = vadd.f32 %v4370, %v4942
      %v5089 = vadd.f32 %v4374, %v4868
      %v5090 = vadd.f32 %v4380, %v4943
      %v5091 = vadd.f32 %v4384, %v4871
      %v5092 = vadd.f32 %v4390, %v4944
      %v5093 = vadd.f32 %v4394, %v4874
      %v5094 = vadd.f32 %v4400, %v4945
      %v5095 = vadd.f32 %v4404, %v4877
      %v5096 = vadd.f32 %v4410, %v4946
      %v5097 = vadd.f32 %v4414, %v4880
      %v5098 = vadd.f32 %v4420, %v4947
      %v5099 = vadd.f32 %v4424, %v4883
      %v5100 = vadd.f32 %v4430, %v4948
      %v5101 = vadd.f32 %v4434, %v4886
      %v5102 = vadd.f32 %v4440, %v4949
      %v5103 = vadd.f32 %v4444, %v4889
      %v5104 = vadd.f32 %v4450, %v4950
      %v5105 = vadd.f32 %v4454, %v4892
      %v5106 = vadd.f32 %v4460, %v4951
      %v5107 = vadd.f32 %v4464, %v4895
      %v5108 = vadd.f32 %v4470, %v4952
      %v5109 = vadd.f32 %v4474, %v4898
      %v5110 = vadd.f32 %v4480, %v4953
      %v5111 = vadd.f32 %v4484, %v4901
      %v5112 = vadd.f32 %v4490, %v4954
      %v5113 = vadd.f32 %v4494, %v4904
      %v5114 = vadd.f32 %v4500, %v4955
      %v5115 = vadd.f32 %v4504, %v4907
      %v5116 = vadd.f32 %v5084, %v4990
      %v5117 = vadd.f32 %v5085, %v5068
      %v5118 = vadd.f32 %v5086, %v4993
      %v5119 = vadd.f32 %v5087, %v5069
      %v5120 = vadd.f32 %v5088, %v4996
      %v5121 = vadd.f32 %v5089, %v5070
      %v5122 = vadd.f32 %v5090, %v4999
      %v5123 = vadd.f32 %v5091, %v5071
      %v5124 = vadd.f32 %v5092, %v5002
      %v5125 = vadd.f32 %v5093, %v5072
      %v5126 = vadd.f32 %v5094, %v5005
      %v5127 = vadd.f32 %v5095, %v5073
      %v5128 = vadd.f32 %v5096, %v5008
      %v5129 = vadd.f32 %v5097, %v5074
      %v5130 = vadd.f32 %v5098, %v5011
      %v5131 = vadd.f32 %v5099, %v5075
      %v5132 = vadd.f32 %v5100, %v5014
      %v5133 = vadd.f32 %v5101, %v5076
      %v5134 = vadd.f32 %v5102, %v5017
      %v5135 = vadd.f32 %v5103, %v5077
      %v5136 = vadd.f32 %v5104, %v5020
      %v5137 = vadd.f32 %v5105, %v5078
      %v5138 = vadd.f32 %v5106, %v5023
      %v5139 = vadd.f32 %v5107, %v5079
      %v5140 = vadd.f32 %v5108, %v5026
      %v5141 = vadd.f32 %v5109, %v5080
      %v5142 = vadd.f32 %v5110, %v5029
      %v5143 = vadd.f32 %v5111, %v5081
      %v5144 = vadd.f32 %v5112, %v5032
      %v5145 = vadd.f32 %v5113, %v5082
      %v5146 = vadd.f32 %v5114, %v5035
      %v5147 = vadd.f32 %v5115, %v5083
      %v5148 = vld [vmem:[%s6] sm:$0x1]
      %v5150 = vlaneseq
      %v5151 = vshrl.u32 %v5150, 7
      %v5152 = vsub.s32 0, %v5151
      %v5153 = vrot.slane %v5148, %v5152
      %v5155 = vadd.f32 %v5116, %v5153
      %v5156 = vadd.f32 %v5117, %v5153
      %v5157 = vadd.f32 %v5118, %v5153
      %v5158 = vadd.f32 %v5119, %v5153
      %v5159 = vadd.f32 %v5120, %v5153
      %v5160 = vadd.f32 %v5121, %v5153
      %v5161 = vadd.f32 %v5122, %v5153
      %v5162 = vadd.f32 %v5123, %v5153
      %v5163 = vadd.f32 %v5124, %v5153
      %v5164 = vadd.f32 %v5125, %v5153
      %v5165 = vadd.f32 %v5126, %v5153
      %v5166 = vadd.f32 %v5127, %v5153
      %v5167 = vadd.f32 %v5128, %v5153
      %v5168 = vadd.f32 %v5129, %v5153
      %v5169 = vadd.f32 %v5130, %v5153
      %v5170 = vadd.f32 %v5131, %v5153
      %v5171 = vadd.f32 %v5132, %v5153
      %v5172 = vadd.f32 %v5133, %v5153
      %v5173 = vadd.f32 %v5134, %v5153
      %v5174 = vadd.f32 %v5135, %v5153
      %v5175 = vadd.f32 %v5136, %v5153
      %v5176 = vadd.f32 %v5137, %v5153
      %v5177 = vadd.f32 %v5138, %v5153
      %v5178 = vadd.f32 %v5139, %v5153
      %v5179 = vadd.f32 %v5140, %v5153
      %v5180 = vadd.f32 %v5141, %v5153
      %v5181 = vadd.f32 %v5142, %v5153
      %v5182 = vadd.f32 %v5143, %v5153
      %v5183 = vadd.f32 %v5144, %v5153
      %v5184 = vadd.f32 %v5145, %v5153
      %v5185 = vadd.f32 %v5146, %v5153
      %v5186 = vadd.f32 %v5147, %v5153
      %5187 = vst [vmem:[%s318] sm:$0xff] %v5155
      %5188 = vst [vmem:[%s318 + $0x8] sm:$0xff] %v5156
      %5189 = vst [vmem:[%s318 + $0x10] sm:$0xff] %v5157
      %5190 = vst [vmem:[%s318 + $0x18] sm:$0xff] %v5158
      %5191 = vst [vmem:[%s318 + $0x20] sm:$0xff] %v5159
      %5192 = vst [vmem:[%s318 + $0x28] sm:$0xff] %v5160
      %5193 = vst [vmem:[%s318 + $0x30] sm:$0xff] %v5161
      %5194 = vst [vmem:[%s318 + $0x38] sm:$0xff] %v5162
      %5195 = vst [vmem:[%s318 + $0x40] sm:$0xff] %v5163
      %5196 = vst [vmem:[%s318 + $0x48] sm:$0xff] %v5164
      %5197 = vst [vmem:[%s318 + $0x50] sm:$0xff] %v5165
      %5198 = vst [vmem:[%s318 + $0x58] sm:$0xff] %v5166
      %5199 = vst [vmem:[%s318 + $0x60] sm:$0xff] %v5167
      %5200 = vst [vmem:[%s318 + $0x68] sm:$0xff] %v5168
      %5201 = vst [vmem:[%s318 + $0x70] sm:$0xff] %v5169
      %5202 = vst [vmem:[%s318 + $0x78] sm:$0xff] %v5170
      %5203 = vst [vmem:[%s318 + $0x80] sm:$0xff] %v5171
      %5204 = vst [vmem:[%s318 + $0x88] sm:$0xff] %v5172
      %5205 = vst [vmem:[%s318 + $0x90] sm:$0xff] %v5173
      %5206 = vst [vmem:[%s318 + $0x98] sm:$0xff] %v5174
      %5207 = vst [vmem:[%s318 + $0xa0] sm:$0xff] %v5175
      %5208 = vst [vmem:[%s318 + $0xa8] sm:$0xff] %v5176
      %5209 = vst [vmem:[%s318 + $0xb0] sm:$0xff] %v5177
      %5210 = vst [vmem:[%s318 + $0xb8] sm:$0xff] %v5178
      %5211 = vst [vmem:[%s318 + $0xc0] sm:$0xff] %v5179
      %5212 = vst [vmem:[%s318 + $0xc8] sm:$0xff] %v5180
      %5213 = vst [vmem:[%s318 + $0xd0] sm:$0xff] %v5181
      %5214 = vst [vmem:[%s318 + $0xd8] sm:$0xff] %v5182
      %5215 = vst [vmem:[%s318 + $0xe0] sm:$0xff] %v5183
      %5216 = vst [vmem:[%s318 + $0xe8] sm:$0xff] %v5184
      %5217 = vst [vmem:[%s318 + $0xf0] sm:$0xff] %v5185
      %5218 = vst [vmem:[%s318 + $0xf8] sm:$0xff] %v5186
      %p5219 = scmp.lt.s32.totalorder %s20, 1
      %s5220 = scalar_select %p5219, %s20, 1
      %s5221 = smul.addr %s5220, 32
      %s5222 = smul.addr %s5221, 8
      %s5223 = scalar_lea.vmem %s7, %s5222
      %p5224 = scmp.lt.s32.totalorder %s20, 1
      %s5225 = scalar_select %p5224, %s20, 1
      %s5226 = smul.addr %s5225, 32
      %s5227 = smul.addr %s5226, 8
      %s5228 = scalar_lea.vmem %s8, %s5227
      // Predicated region
      $region49: #{forward.1} parent=47 // pred_check
        %p5229 = pneg %p190
      $region50: #{forward.1} parent=47 // pred_check_branch
        %5231 = sbr.rel (%p5229) target = $region52
      $region51: #{forward.1} parent=47 // pred_region
        _
      $region52: #{forward.1} parent=47 // pred_fallthru
        _
      // Predicated region
      $region53: #{forward.1} parent=47 // pred_check
        %p5232 = pneg %p216
      $region54: #{forward.1} parent=47 // pred_check_branch
        %5234 = sbr.rel (%p5232) target = $region56
      $region55: #{forward.1} parent=47 // pred_region
        _
      $region56: #{forward.1} parent=47 // pred_fallthru
        _
    $region48: #{forward.1} parent=5 // pred_fallthru
      _
    %p5235 = scmp.le.s32.totalorder 2, %s15
    // Predicated region
    $region57: #{forward.1} parent=5 // pred_check
      %p5236 = pneg %p5235
    $region58: #{forward.1} parent=5 // pred_check_branch
      %5238 = sbr.rel (%p5236) target = $region60
    $region59: #{forward.1} parent=5 // pred_region
      %s5239 = ssub.s32 %s15, 2
      // Predicated region
      $region61: #{forward.1} parent=59 // pred_check
        %p5240 = pneg %p196
      $region62: #{forward.1} parent=59 // pred_check_branch
        %5242 = sbr.rel (%p5240) target = $region64
      $region63: #{forward.1} parent=59 // pred_region
        %p5243 = scmp.lt.s32.totalorder %s21, 1
        %s5244 = scalar_select %p5243, %s21, 1
        %s5245 = smul.addr %s5244, 32
        %s5246 = smul.addr %s5245, 8
        %s5247 = scalar_lea.vmem %s7, %s5246
      $region64: #{forward.1} parent=59 // pred_fallthru
        _
      // Predicated region
      $region65: #{forward.1} parent=59 // pred_check
        %p5248 = pneg %p222
      $region66: #{forward.1} parent=59 // pred_check_branch
        %5250 = sbr.rel (%p5248) target = $region68
      $region67: #{forward.1} parent=59 // pred_region
        %p5251 = scmp.lt.s32.totalorder %s21, 1
        %s5252 = scalar_select %p5251, %s21, 1
        %s5253 = smul.addr %s5252, 32
        %s5254 = smul.addr %s5253, 8
        %s5255 = scalar_lea.vmem %s8, %s5254
      $region68: #{forward.1} parent=59 // pred_fallthru
        _
    $region60: #{forward.1} parent=5 // pred_fallthru
      _
  $region6: #{forward.1} parent=0 // loop_footer
    %s19 = sadd.s32 1, %s15
  $region7: #{forward.1} parent=0 // loop_footer_branch
    %14 = sbr.rel target = $region3
  $region8: #{forward.1} parent=0 // loop_exit
    _

</llo_original>
